<compile_context>
chip_gen: v7x
topology: tpu7x:2x2x1
jax: 0.10.0
libtpu: 0.0.40
codegen_flags: <defaults>
</compile_context>

<pallas_src>
import math

import jax
import jax.numpy as jnp
from jax.experimental import pallas as pl
from jax.experimental.pallas import tpu as pltpu


# ----------------------------------------------------------------------------
# Fused glu_group kernel: one batch element per grid step, everything in VMEM.
# ----------------------------------------------------------------------------
def make_glu_group_kernel(H, W, Cin, Cout, K, pad):
    HW = H * W
    Hp, Wp = H + 2 * pad, W + 2 * pad

    def kernel(x_ref, wa_ref, ba_ref, wb_ref, bb_ref, o_ref, tp_ref):
        # ---- stage A: 1x1 conv (Cin -> 2*Cin) + GLU, a single (HW,Cin)@(Cin,2*Cin) dot.
        x = x_ref[0]                                            # (HW, Cin) f32, also residual
        ha = jnp.dot(x.astype(jnp.bfloat16), wa_ref[...],
                     preferred_element_type=jnp.float32) + ba_ref[...]
        t = ha[:, :Cin] * jax.nn.sigmoid(ha[:, Cin:])           # GLU(dim=channels), f32

        # ---- in-VMEM zero-padded copy of t (replaces host-side jnp.pad between layers).
        tp_ref[...] = jnp.zeros((Hp, Wp, Cin), jnp.float32)
        tp_ref[pad:pad + H, pad:pad + W, :] = t.reshape(H, W, Cin)

        # ---- stage B: KxK conv (Cin -> 2*Cout) + GLU + residual.
        # Fused value|gate matmul per tap over the full M = H*W; bias pre-loaded into acc.
        acc = jnp.broadcast_to(bb_ref[...], (HW, 2 * Cout))
        for kh in range(K):
            for kw in range(K):
                patch = tp_ref[kh:kh + H, kw:kw + W, :].reshape(HW, Cin)
                acc = acc + jnp.dot(patch.astype(jnp.bfloat16),
                                    wb_ref[kh * K + kw],
                                    preferred_element_type=jnp.float32)
        y = acc[:, :Cout] * jax.nn.sigmoid(acc[:, Cout:]) + x   # GLU + residual (f32)
        o_ref[0] = y

    return kernel


def glu_group_forward(params, x):
    """x: (B, Cin, H, W) float32 (NCHW, like the PyTorch module). Returns (B, Cout, H, W)."""
    B, Cin, H, W = x.shape
    K = int(round(params["wb"].shape[0] ** 0.5))
    pad = (K - 1) // 2
    Cout = params["wb"].shape[-1] // 2
    assert Cout == Cin, "residual add requires out_channels == in_channels"
    Hp, Wp = H + 2 * pad, W + 2 * pad

    # NCHW -> (B, H*W, Cin) slab (plain-JAX glue; layout-preserving for the kernel).
    x_flat = jnp.transpose(x, (0, 2, 3, 1)).reshape(B, H * W, Cin)

    y = pl.pallas_call(
        make_glu_group_kernel(H, W, Cin, Cout, K, pad),
        grid=(B,),
        in_specs=[
            pl.BlockSpec((1, H * W, Cin), lambda b: (b, 0, 0)),
            pl.BlockSpec((Cin, 2 * Cin), lambda b: (0, 0)),
            pl.BlockSpec((1, 2 * Cin), lambda b: (0, 0)),
            pl.BlockSpec((K * K, Cin, 2 * Cout), lambda b: (0, 0, 0)),
            pl.BlockSpec((1, 2 * Cout), lambda b: (0, 0)),
        ],
        out_specs=pl.BlockSpec((1, H * W, Cout), lambda b: (b, 0, 0)),
        out_shape=jax.ShapeDtypeStruct((B, H * W, Cout), jnp.float32),
        scratch_shapes=[pltpu.VMEM((Hp, Wp, Cin), jnp.float32)],
        compiler_params=pltpu.CompilerParams(dimension_semantics=("parallel",)),
    )(x_flat, params["wa"], params["ba"], params["wb"], params["bb"])

    return jnp.transpose(y.reshape(B, H, W, Cout), (0, 3, 1, 2))


# ----------------------------------------------------------------------------
# Parameter init: torch xavier_normal_ on Conv2d-layout weights, zero biases, then
# permuted to the kernel's (Cin, 2*Cout)/(K*K, Cin, 2*Cout) layout and cast to bf16.
# Columns [0:Cout] are the GLU value half, [Cout:2*Cout] the gate half (torch GLU(dim=1)).
# ----------------------------------------------------------------------------
def init_glu_group(key, in_channels, out_channels, kernel_size=3, stride=1, padding=1):
    assert stride == 1 and padding == (kernel_size - 1) // 2
    ka, kb = jax.random.split(key)

    def xavier_conv(k, cin, cout2, ksz):
        fan_in, fan_out = cin * ksz * ksz, cout2 * ksz * ksz
        std = math.sqrt(2.0 / (fan_in + fan_out))
        return std * jax.random.normal(k, (cout2, cin, ksz, ksz), jnp.float32)

    wa_t = xavier_conv(ka, in_channels, 2 * in_channels, 1)          # (2Cin, Cin, 1, 1)
    wb_t = xavier_conv(kb, in_channels, 2 * out_channels, kernel_size)
    wa = jnp.transpose(wa_t[:, :, 0, 0], (1, 0))                     # (Cin, 2Cin)
    wb = jnp.transpose(wb_t, (2, 3, 1, 0)).reshape(                  # (K*K, Cin, 2Cout)
        kernel_size * kernel_size, in_channels, 2 * out_channels)
    return {
        "wa": wa.astype(jnp.bfloat16),
        "ba": jnp.zeros((1, 2 * in_channels), jnp.float32),
        "wb": wb.astype(jnp.bfloat16),
        "bb": jnp.zeros((1, 2 * out_channels), jnp.float32),
    }


# ----------------------------------------------------------------------------
# Plain-JAX reference with matching precision (bf16 matmul inputs, f32 accumulation).
# ----------------------------------------------------------------------------
def glu_group_reference(params, x):
    B, Cin, H, W = x.shape
    K = int(round(params["wb"].shape[0] ** 0.5))
    pad = (K - 1) // 2
    Cout = params["wb"].shape[-1] // 2
    xf = jnp.transpose(x, (0, 2, 3, 1)).reshape(B, H * W, Cin)
    ha = jnp.einsum("bmc,cd->bmd", xf.astype(jnp.bfloat16), params["wa"],
                    preferred_element_type=jnp.float32) + params["ba"]
    t = ha[..., :Cin] * jax.nn.sigmoid(ha[..., Cin:])
    tp = jnp.pad(t.reshape(B, H, W, Cin), ((0, 0), (pad, pad), (pad, pad), (0, 0)))
    acc = jnp.zeros((B, H * W, 2 * Cout), jnp.float32) + params["bb"]
    for kh in range(K):
        for kw in range(K):
            patch = tp[:, kh:kh + H, kw:kw + W, :].reshape(B, H * W, Cin)
            acc = acc + jnp.einsum("bmc,cd->bmd", patch.astype(jnp.bfloat16),
                                   params["wb"][kh * K + kw],
                                   preferred_element_type=jnp.float32)
    y = acc[..., :Cout] * jax.nn.sigmoid(acc[..., Cout:]) + xf
    return jnp.transpose(y.reshape(B, H, W, Cout), (0, 3, 1, 2))


if __name__ == "__main__":
    key = jax.random.PRNGKey(0)
    pkey, xkey = jax.random.split(key)

    # glu_group(16, 16, 3, 1, 1) — the configuration used inside the parent CGCNN model.
    B, C, H, W = 2, 16, 16, 16
    params = init_glu_group(pkey, in_channels=C, out_channels=C,
                            kernel_size=3, stride=1, padding=1)
    x = jax.random.normal(xkey, (B, C, H, W), jnp.float32)

    fwd = jax.jit(glu_group_forward)
    y = fwd(params, x)
    jax.block_until_ready(y)

    y_ref = glu_group_reference(params, x)
    assert y.shape == (B, C, H, W)
    assert bool(jnp.all(jnp.isfinite(y)))
    max_err = float(jnp.max(jnp.abs(y - y_ref)))
    assert max_err < 5e-2, f"mismatch vs reference: max abs err = {max_err}"
    print("KERNEL_OK")
</pallas_src>

<mosaic_0001>
module attributes {stable_mosaic.version = 11 : i64} {
  func.func @kernel(%arg0: i32, %arg1: memref<1x256x16xf32, #tpu.memory_space<vmem>>, %arg2: memref<16x32xbf16, #tpu.memory_space<vmem>>, %arg3: memref<1x32xf32, #tpu.memory_space<vmem>>, %arg4: memref<9x16x32xbf16, #tpu.memory_space<vmem>>, %arg5: memref<1x32xf32, #tpu.memory_space<vmem>>, %arg6: memref<1x256x16xf32, #tpu.memory_space<vmem>>, %arg7: memref<18x18x16xf32, #tpu.memory_space<vmem>>) attributes {dimension_semantics = [#tpu.dimension_semantics<parallel>], iteration_bounds = array<i64: 2>, scalar_prefetch = 0 : i64, scratch_operands = 1 : i64, tpu.core_type = #tpu.core_type<tc>, window_params = [{transform_indices = @transform_0, window_bounds = array<i64: 1, 256, 16>}, {pipeline_mode = #tpu.pipeline_mode<synchronous>, transform_indices = @transform_1, window_bounds = array<i64: 16, 32>}, {pipeline_mode = #tpu.pipeline_mode<synchronous>, transform_indices = @transform_2, window_bounds = array<i64: 1, 32>}, {pipeline_mode = #tpu.pipeline_mode<synchronous>, transform_indices = @transform_3, window_bounds = array<i64: 9, 16, 32>}, {pipeline_mode = #tpu.pipeline_mode<synchronous>, transform_indices = @transform_4, window_bounds = array<i64: 1, 32>}, {transform_indices = @transform_5, window_bounds = array<i64: 1, 256, 16>}]} {
    %c0 = arith.constant 0 : index
    %c0_0 = arith.constant 0 : index
    %c0_1 = arith.constant 0 : index
    %0 = vector.load %arg1[%c0, %c0_0, %c0_1] : memref<1x256x16xf32, #tpu.memory_space<vmem>>, vector<1x256x16xf32>
    %1 = vector.shape_cast %0 : vector<1x256x16xf32> to vector<256x16xf32>
    %2 = arith.truncf %1 : vector<256x16xf32> to vector<256x16xbf16>
    %c0_2 = arith.constant 0 : index
    %c0_3 = arith.constant 0 : index
    %3 = vector.load %arg2[%c0_2, %c0_3] : memref<16x32xbf16, #tpu.memory_space<vmem>>, vector<16x32xbf16>
    %cst = arith.constant dense<0.000000e+00> : vector<256x32xf32>
    %4 = tpu.matmul %2, %3, %cst {dimension_numbers = #tpu.dot_dimension_numbers<[1], [0], [0], [1], [0, 0, 1, 1], [], []>} : vector<256x16xbf16>, vector<16x32xbf16>, vector<256x32xf32> -> vector<256x32xf32>
    %c0_4 = arith.constant 0 : index
    %c0_5 = arith.constant 0 : index
    %5 = vector.load %arg3[%c0_4, %c0_5] : memref<1x32xf32, #tpu.memory_space<vmem>>, vector<1x32xf32>
    %6 = vector.broadcast %5 : vector<1x32xf32> to vector<256x32xf32>
    %7 = arith.addf %4, %6 : vector<256x32xf32>
    %8 = vector.extract_strided_slice %7 {offsets = [0, 0], sizes = [256, 16], strides = [1, 1]} : vector<256x32xf32> to vector<256x16xf32>
    %9 = vector.extract_strided_slice %7 {offsets = [0, 16], sizes = [256, 16], strides = [1, 1]} : vector<256x32xf32> to vector<256x16xf32>
    %10 = arith.negf %9 : vector<256x16xf32>
    %11 = math.exp %10 : vector<256x16xf32>
    %cst_6 = arith.constant 1.000000e+00 : f32
    %12 = vector.broadcast %cst_6 : f32 to vector<256x16xf32>
    %13 = arith.addf %12, %11 : vector<256x16xf32>
    %14 = arith.divf %12, %13 : vector<256x16xf32>
    %15 = arith.mulf %8, %14 : vector<256x16xf32>
    %cst_7 = arith.constant 0.000000e+00 : f32
    %16 = vector.broadcast %cst_7 : f32 to vector<18x18x16xf32>
    %c0_8 = arith.constant 0 : index
    %c0_9 = arith.constant 0 : index
    %c0_10 = arith.constant 0 : index
    %17 = vector.load %arg7[%c0_8, %c0_9, %c0_10] : memref<18x18x16xf32, #tpu.memory_space<vmem>>, vector<18x18x16xf32>
    tpu.vector_store %arg7[%c0_8, %c0_9, %c0_10], %16 {strides = array<i32>} : memref<18x18x16xf32, #tpu.memory_space<vmem>>, vector<18x18x16xf32>,
    %18 = vector.shape_cast %15 : vector<256x16xf32> to vector<16x16x16xf32>
    %c1 = arith.constant 1 : index
    %c1_11 = arith.constant 1 : index
    %c0_12 = arith.constant 0 : index
    %19 = vector.load %arg7[%c1, %c1_11, %c0_12] : memref<18x18x16xf32, #tpu.memory_space<vmem>>, vector<16x16x16xf32>
    tpu.vector_store %arg7[%c1, %c1_11, %c0_12], %18 {strides = array<i32>} : memref<18x18x16xf32, #tpu.memory_space<vmem>>, vector<16x16x16xf32>,
    %c0_13 = arith.constant 0 : index
    %c0_14 = arith.constant 0 : index
    %20 = vector.load %arg5[%c0_13, %c0_14] : memref<1x32xf32, #tpu.memory_space<vmem>>, vector<1x32xf32>
    %21 = vector.shape_cast %20 : vector<1x32xf32> to vector<1x32xf32>
    %22 = vector.broadcast %21 : vector<1x32xf32> to vector<256x32xf32>
    %c0_15 = arith.constant 0 : index
    %c0_16 = arith.constant 0 : index
    %c0_17 = arith.constant 0 : index
    %23 = vector.load %arg7[%c0_15, %c0_16, %c0_17] : memref<18x18x16xf32, #tpu.memory_space<vmem>>, vector<16x16x16xf32>
    %24 = vector.shape_cast %23 : vector<16x16x16xf32> to vector<256x16xf32>
    %25 = arith.truncf %24 : vector<256x16xf32> to vector<256x16xbf16>
    %c0_18 = arith.constant 0 : index
    %c0_19 = arith.constant 0 : index
    %c0_20 = arith.constant 0 : index
    %26 = vector.load %arg4[%c0_18, %c0_19, %c0_20] : memref<9x16x32xbf16, #tpu.memory_space<vmem>>, vector<1x16x32xbf16>
    %27 = vector.shape_cast %26 : vector<1x16x32xbf16> to vector<16x32xbf16>
    %cst_21 = arith.constant dense<0.000000e+00> : vector<256x32xf32>
    %28 = tpu.matmul %25, %27, %cst_21 {dimension_numbers = #tpu.dot_dimension_numbers<[1], [0], [0], [1], [0, 0, 1, 1], [], []>} : vector<256x16xbf16>, vector<16x32xbf16>, vector<256x32xf32> -> vector<256x32xf32>
    %29 = arith.addf %22, %28 : vector<256x32xf32>
    %c0_22 = arith.constant 0 : index
    %c1_23 = arith.constant 1 : index
    %c0_24 = arith.constant 0 : index
    %30 = vector.load %arg7[%c0_22, %c1_23, %c0_24] : memref<18x18x16xf32, #tpu.memory_space<vmem>>, vector<16x16x16xf32>
    %31 = vector.shape_cast %30 : vector<16x16x16xf32> to vector<256x16xf32>
    %32 = arith.truncf %31 : vector<256x16xf32> to vector<256x16xbf16>
    %c1_25 = arith.constant 1 : index
    %c0_26 = arith.constant 0 : index
    %c0_27 = arith.constant 0 : index
    %33 = vector.load %arg4[%c1_25, %c0_26, %c0_27] : memref<9x16x32xbf16, #tpu.memory_space<vmem>>, vector<1x16x32xbf16>
    %34 = vector.shape_cast %33 : vector<1x16x32xbf16> to vector<16x32xbf16>
    %cst_28 = arith.constant dense<0.000000e+00> : vector<256x32xf32>
    %35 = tpu.matmul %32, %34, %cst_28 {dimension_numbers = #tpu.dot_dimension_numbers<[1], [0], [0], [1], [0, 0, 1, 1], [], []>} : vector<256x16xbf16>, vector<16x32xbf16>, vector<256x32xf32> -> vector<256x32xf32>
    %36 = arith.addf %29, %35 : vector<256x32xf32>
    %c0_29 = arith.constant 0 : index
    %c2 = arith.constant 2 : index
    %c0_30 = arith.constant 0 : index
    %37 = vector.load %arg7[%c0_29, %c2, %c0_30] : memref<18x18x16xf32, #tpu.memory_space<vmem>>, vector<16x16x16xf32>
    %38 = vector.shape_cast %37 : vector<16x16x16xf32> to vector<256x16xf32>
    %39 = arith.truncf %38 : vector<256x16xf32> to vector<256x16xbf16>
    %c2_31 = arith.constant 2 : index
    %c0_32 = arith.constant 0 : index
    %c0_33 = arith.constant 0 : index
    %40 = vector.load %arg4[%c2_31, %c0_32, %c0_33] : memref<9x16x32xbf16, #tpu.memory_space<vmem>>, vector<1x16x32xbf16>
    %41 = vector.shape_cast %40 : vector<1x16x32xbf16> to vector<16x32xbf16>
    %cst_34 = arith.constant dense<0.000000e+00> : vector<256x32xf32>
    %42 = tpu.matmul %39, %41, %cst_34 {dimension_numbers = #tpu.dot_dimension_numbers<[1], [0], [0], [1], [0, 0, 1, 1], [], []>} : vector<256x16xbf16>, vector<16x32xbf16>, vector<256x32xf32> -> vector<256x32xf32>
    %43 = arith.addf %36, %42 : vector<256x32xf32>
    %c1_35 = arith.constant 1 : index
    %c0_36 = arith.constant 0 : index
    %c0_37 = arith.constant 0 : index
    %44 = vector.load %arg7[%c1_35, %c0_36, %c0_37] : memref<18x18x16xf32, #tpu.memory_space<vmem>>, vector<16x16x16xf32>
    %45 = vector.shape_cast %44 : vector<16x16x16xf32> to vector<256x16xf32>
    %46 = arith.truncf %45 : vector<256x16xf32> to vector<256x16xbf16>
    %c3 = arith.constant 3 : index
    %c0_38 = arith.constant 0 : index
    %c0_39 = arith.constant 0 : index
    %47 = vector.load %arg4[%c3, %c0_38, %c0_39] : memref<9x16x32xbf16, #tpu.memory_space<vmem>>, vector<1x16x32xbf16>
    %48 = vector.shape_cast %47 : vector<1x16x32xbf16> to vector<16x32xbf16>
    %cst_40 = arith.constant dense<0.000000e+00> : vector<256x32xf32>
    %49 = tpu.matmul %46, %48, %cst_40 {dimension_numbers = #tpu.dot_dimension_numbers<[1], [0], [0], [1], [0, 0, 1, 1], [], []>} : vector<256x16xbf16>, vector<16x32xbf16>, vector<256x32xf32> -> vector<256x32xf32>
    %50 = arith.addf %43, %49 : vector<256x32xf32>
    %c1_41 = arith.constant 1 : index
    %c1_42 = arith.constant 1 : index
    %c0_43 = arith.constant 0 : index
    %51 = vector.load %arg7[%c1_41, %c1_42, %c0_43] : memref<18x18x16xf32, #tpu.memory_space<vmem>>, vector<16x16x16xf32>
    %52 = vector.shape_cast %51 : vector<16x16x16xf32> to vector<256x16xf32>
    %53 = arith.truncf %52 : vector<256x16xf32> to vector<256x16xbf16>
    %c4 = arith.constant 4 : index
    %c0_44 = arith.constant 0 : index
    %c0_45 = arith.constant 0 : index
    %54 = vector.load %arg4[%c4, %c0_44, %c0_45] : memref<9x16x32xbf16, #tpu.memory_space<vmem>>, vector<1x16x32xbf16>
    %55 = vector.shape_cast %54 : vector<1x16x32xbf16> to vector<16x32xbf16>
    %cst_46 = arith.constant dense<0.000000e+00> : vector<256x32xf32>
    %56 = tpu.matmul %53, %55, %cst_46 {dimension_numbers = #tpu.dot_dimension_numbers<[1], [0], [0], [1], [0, 0, 1, 1], [], []>} : vector<256x16xbf16>, vector<16x32xbf16>, vector<256x32xf32> -> vector<256x32xf32>
    %57 = arith.addf %50, %56 : vector<256x32xf32>
    %c1_47 = arith.constant 1 : index
    %c2_48 = arith.constant 2 : index
    %c0_49 = arith.constant 0 : index
    %58 = vector.load %arg7[%c1_47, %c2_48, %c0_49] : memref<18x18x16xf32, #tpu.memory_space<vmem>>, vector<16x16x16xf32>
    %59 = vector.shape_cast %58 : vector<16x16x16xf32> to vector<256x16xf32>
    %60 = arith.truncf %59 : vector<256x16xf32> to vector<256x16xbf16>
    %c5 = arith.constant 5 : index
    %c0_50 = arith.constant 0 : index
    %c0_51 = arith.constant 0 : index
    %61 = vector.load %arg4[%c5, %c0_50, %c0_51] : memref<9x16x32xbf16, #tpu.memory_space<vmem>>, vector<1x16x32xbf16>
    %62 = vector.shape_cast %61 : vector<1x16x32xbf16> to vector<16x32xbf16>
    %cst_52 = arith.constant dense<0.000000e+00> : vector<256x32xf32>
    %63 = tpu.matmul %60, %62, %cst_52 {dimension_numbers = #tpu.dot_dimension_numbers<[1], [0], [0], [1], [0, 0, 1, 1], [], []>} : vector<256x16xbf16>, vector<16x32xbf16>, vector<256x32xf32> -> vector<256x32xf32>
    %64 = arith.addf %57, %63 : vector<256x32xf32>
    %c2_53 = arith.constant 2 : index
    %c0_54 = arith.constant 0 : index
    %c0_55 = arith.constant 0 : index
    %65 = vector.load %arg7[%c2_53, %c0_54, %c0_55] : memref<18x18x16xf32, #tpu.memory_space<vmem>>, vector<16x16x16xf32>
    %66 = vector.shape_cast %65 : vector<16x16x16xf32> to vector<256x16xf32>
    %67 = arith.truncf %66 : vector<256x16xf32> to vector<256x16xbf16>
    %c6 = arith.constant 6 : index
    %c0_56 = arith.constant 0 : index
    %c0_57 = arith.constant 0 : index
    %68 = vector.load %arg4[%c6, %c0_56, %c0_57] : memref<9x16x32xbf16, #tpu.memory_space<vmem>>, vector<1x16x32xbf16>
    %69 = vector.shape_cast %68 : vector<1x16x32xbf16> to vector<16x32xbf16>
    %cst_58 = arith.constant dense<0.000000e+00> : vector<256x32xf32>
    %70 = tpu.matmul %67, %69, %cst_58 {dimension_numbers = #tpu.dot_dimension_numbers<[1], [0], [0], [1], [0, 0, 1, 1], [], []>} : vector<256x16xbf16>, vector<16x32xbf16>, vector<256x32xf32> -> vector<256x32xf32>
    %71 = arith.addf %64, %70 : vector<256x32xf32>
    %c2_59 = arith.constant 2 : index
    %c1_60 = arith.constant 1 : index
    %c0_61 = arith.constant 0 : index
    %72 = vector.load %arg7[%c2_59, %c1_60, %c0_61] : memref<18x18x16xf32, #tpu.memory_space<vmem>>, vector<16x16x16xf32>
    %73 = vector.shape_cast %72 : vector<16x16x16xf32> to vector<256x16xf32>
    %74 = arith.truncf %73 : vector<256x16xf32> to vector<256x16xbf16>
    %c7 = arith.constant 7 : index
    %c0_62 = arith.constant 0 : index
    %c0_63 = arith.constant 0 : index
    %75 = vector.load %arg4[%c7, %c0_62, %c0_63] : memref<9x16x32xbf16, #tpu.memory_space<vmem>>, vector<1x16x32xbf16>
    %76 = vector.shape_cast %75 : vector<1x16x32xbf16> to vector<16x32xbf16>
    %cst_64 = arith.constant dense<0.000000e+00> : vector<256x32xf32>
    %77 = tpu.matmul %74, %76, %cst_64 {dimension_numbers = #tpu.dot_dimension_numbers<[1], [0], [0], [1], [0, 0, 1, 1], [], []>} : vector<256x16xbf16>, vector<16x32xbf16>, vector<256x32xf32> -> vector<256x32xf32>
    %78 = arith.addf %71, %77 : vector<256x32xf32>
    %c2_65 = arith.constant 2 : index
    %c2_66 = arith.constant 2 : index
    %c0_67 = arith.constant 0 : index
    %79 = vector.load %arg7[%c2_65, %c2_66, %c0_67] : memref<18x18x16xf32, #tpu.memory_space<vmem>>, vector<16x16x16xf32>
    %80 = vector.shape_cast %79 : vector<16x16x16xf32> to vector<256x16xf32>
    %81 = arith.truncf %80 : vector<256x16xf32> to vector<256x16xbf16>
    %c8 = arith.constant 8 : index
    %c0_68 = arith.constant 0 : index
    %c0_69 = arith.constant 0 : index
    %82 = vector.load %arg4[%c8, %c0_68, %c0_69] : memref<9x16x32xbf16, #tpu.memory_space<vmem>>, vector<1x16x32xbf16>
    %83 = vector.shape_cast %82 : vector<1x16x32xbf16> to vector<16x32xbf16>
    %cst_70 = arith.constant dense<0.000000e+00> : vector<256x32xf32>
    %84 = tpu.matmul %81, %83, %cst_70 {dimension_numbers = #tpu.dot_dimension_numbers<[1], [0], [0], [1], [0, 0, 1, 1], [], []>} : vector<256x16xbf16>, vector<16x32xbf16>, vector<256x32xf32> -> vector<256x32xf32>
    %85 = arith.addf %78, %84 : vector<256x32xf32>
    %86 = vector.extract_strided_slice %85 {offsets = [0, 0], sizes = [256, 16], strides = [1, 1]} : vector<256x32xf32> to vector<256x16xf32>
    %87 = vector.extract_strided_slice %85 {offsets = [0, 16], sizes = [256, 16], strides = [1, 1]} : vector<256x32xf32> to vector<256x16xf32>
    %88 = arith.negf %87 : vector<256x16xf32>
    %89 = math.exp %88 : vector<256x16xf32>
    %cst_71 = arith.constant 1.000000e+00 : f32
    %90 = vector.broadcast %cst_71 : f32 to vector<256x16xf32>
    %91 = arith.addf %90, %89 : vector<256x16xf32>
    %92 = arith.divf %90, %91 : vector<256x16xf32>
    %93 = arith.mulf %86, %92 : vector<256x16xf32>
    %94 = arith.addf %93, %1 : vector<256x16xf32>
    %c0_72 = arith.constant 0 : index
    %c0_73 = arith.constant 0 : index
    %c0_74 = arith.constant 0 : index
    %95 = vector.load %arg6[%c0_72, %c0_73, %c0_74] : memref<1x256x16xf32, #tpu.memory_space<vmem>>, vector<1x256x16xf32>
    %96 = vector.shape_cast %95 : vector<1x256x16xf32> to vector<256x16xf32>
    %97 = vector.shape_cast %94 : vector<256x16xf32> to vector<1x256x16xf32>
    tpu.vector_store %arg6[%c0_72, %c0_73, %c0_74], %97 {strides = array<i32>} : memref<1x256x16xf32, #tpu.memory_space<vmem>>, vector<1x256x16xf32>,
    return
  }
  func.func @transform_0(%arg0: i32) -> (i32, i32, i32) {
    %c0_i32 = arith.constant 0 : i32
    %c0_i32_0 = arith.constant 0 : i32
    %c0_i32_1 = arith.constant 0 : i32
    return %arg0, %c0_i32, %c0_i32_0 : i32, i32, i32
  }
  func.func @transform_1(%arg0: i32) -> (i32, i32) {
    %c0_i32 = arith.constant 0 : i32
    %c0_i32_0 = arith.constant 0 : i32
    %c0_i32_1 = arith.constant 0 : i32
    return %c0_i32, %c0_i32_0 : i32, i32
  }
  func.func @transform_2(%arg0: i32) -> (i32, i32) {
    %c0_i32 = arith.constant 0 : i32
    %c0_i32_0 = arith.constant 0 : i32
    %c0_i32_1 = arith.constant 0 : i32
    return %c0_i32, %c0_i32_0 : i32, i32
  }
  func.func @transform_3(%arg0: i32) -> (i32, i32, i32) {
    %c0_i32 = arith.constant 0 : i32
    %c0_i32_0 = arith.constant 0 : i32
    %c0_i32_1 = arith.constant 0 : i32
    %c0_i32_2 = arith.constant 0 : i32
    return %c0_i32, %c0_i32_0, %c0_i32_1 : i32, i32, i32
  }
  func.func @transform_4(%arg0: i32) -> (i32, i32) {
    %c0_i32 = arith.constant 0 : i32
    %c0_i32_0 = arith.constant 0 : i32
    %c0_i32_1 = arith.constant 0 : i32
    return %c0_i32, %c0_i32_0 : i32, i32
  }
  func.func @transform_5(%arg0: i32) -> (i32, i32, i32) {
    %c0_i32 = arith.constant 0 : i32
    %c0_i32_0 = arith.constant 0 : i32
    %c0_i32_1 = arith.constant 0 : i32
    return %arg0, %c0_i32, %c0_i32_0 : i32, i32, i32
  }
}

</mosaic_0001>

<llo_original>
// kernel: glu_group_forward.1
$region0: #{glu_group_forward.1}
  #allocation0 [shape = 'u32[]', space=smem, size = 0x4, offset = 0x4, fixed_abs, tag = 'smem constant byte address 0x4 - core index']
  #allocation1 [shape = 'u32[144,128]{1,0:T(1,128)}', space=vmem, size = 0x12000, scoped, tag = 'internal scratch']
  #allocation2 [shape = 'f32[18,18,16]{2,1,0:T(8,128)}', space=vmem, size = 0x36000, scoped, tag = 'scratch operand']
  %s0 = inlined_call_operand.vmem [shape: f32[2,256,16], index: 0, kind: input, shape index: {}]
  %s1 = inlined_call_operand.vmem [shape: bf16[16,32], index: 1, kind: input, shape index: {}]
  %s2 = inlined_call_operand.vmem [shape: f32[1,32], index: 2, kind: input, shape index: {}]
  %s3 = inlined_call_operand.vmem [shape: bf16[9,16,32], index: 3, kind: input, shape index: {}]
  %s4 = inlined_call_operand.vmem [shape: f32[1,32], index: 4, kind: input, shape index: {}]
  %s5 = inlined_call_operand.vmem [shape: f32[2,256,16], index: 5, kind: output, shape index: {}]
  %s6 = sld [smem:[#allocation0]]
  $region53: #{glu_group_forward.1} parent=0
    _
  %s8 = ssub.s32 1, %s6
  %s9 = scalar_select 0, %s8, %s6
  loop: start=0, step=1, limit=4
  $region2: #{glu_group_forward.1} parent=0 // loop_pre_header
    _
  $region3: #{glu_group_forward.1} parent=0 // loop_header
    %s11 = sphi 0, %s15
    %p12 = scmp.ge.s32.totalorder %s11, 4
    %s21 = sphi 0, %s23
    %s24 = sphi 0, %s21
    %s25 = sphi 0, %s24
    %s41 = sphi 0, %s25
    %s45 = sphi 0, %s45
    %s47 = sphi 0, %s45
    %s48 = sphi 0, %s47
    %s62 = sphi 0, %s48
    %s66 = sphi 0, %s66
    %s68 = sphi 0, %s66
    %s69 = sphi 0, %s68
    %s83 = sphi 0, %s69
    %s87 = sphi 0, %s87
    %s89 = sphi 0, %s87
    %s90 = sphi 0, %s89
    %s104 = sphi 0, %s90
    %s108 = sphi 0, %s108
    %s110 = sphi 0, %s108
    %s111 = sphi 0, %s110
    %s125 = sphi 0, %s111
    %s131 = sphi 0, %s133
    %s134 = sphi 0, %s131
    %s135 = sphi 0, %s134
    %s151 = sphi 0, %s135
  $region4: #{glu_group_forward.1} parent=0 // loop_header_branch
    %14 = sbr.rel (%p12) target = $region8
  $region5: #{glu_group_forward.1} parent=0 // loop_body
    %s16 = ssub.s32 %s11, 1
    %s17 = ssub.s32 %s11, 2
    %s18 = sadd.s32 %s11, 1
    %s19 = ssub.s32 %s11, %s18
    %p20 = scmp.eq.s32.totalorder %s19, 0
    %s22 = sadd.s32 %s21, 1
    %s23 = scalar_select %p20, %s21, %s22
    %p26 = pneg %p20
    %p27 = scmp.eq.s32.totalorder %s11, 1
    %p28 = por %p26, %p27
    %p29 = scmp.ne.s32.totalorder %s21, %s24
    %p30 = scmp.eq.s32.totalorder %s11, 0
    %p31 = por %p29, %p30
    %p32 = scmp.ne.s32.totalorder %s21, %s24
    %p33 = scmp.eq.s32.totalorder %s16, 1
    %p34 = por %p32, %p33
    %p35 = scmp.ne.s32.totalorder %s24, %s25
    %p36 = scmp.eq.s32.totalorder %s16, 0
    %p37 = por %p35, %p36
    %p38 = scmp.ne.s32.totalorder %s24, %s25
    %p39 = scmp.eq.s32.totalorder %s17, 1
    %p40 = por %p38, %p39
    %p42 = scmp.ne.s32.totalorder %s25, %s41
    %p43 = scmp.eq.s32.totalorder %s17, 0
    %p44 = por %p42, %p43
    %s46 = sadd.s32 %s45, 1
    %p49 = scmp.eq.s32.totalorder %s11, 1
    %p50 = scmp.ne.s32.totalorder %s45, %s47
    %p51 = scmp.eq.s32.totalorder %s11, 0
    %p52 = por %p50, %p51
    %p53 = scmp.ne.s32.totalorder %s45, %s47
    %p54 = scmp.eq.s32.totalorder %s16, 1
    %p55 = por %p53, %p54
    %p56 = scmp.ne.s32.totalorder %s47, %s48
    %p57 = scmp.eq.s32.totalorder %s16, 0
    %p58 = por %p56, %p57
    %p59 = scmp.ne.s32.totalorder %s47, %s48
    %p60 = scmp.eq.s32.totalorder %s17, 1
    %p61 = por %p59, %p60
    %p63 = scmp.ne.s32.totalorder %s48, %s62
    %p64 = scmp.eq.s32.totalorder %s17, 0
    %p65 = por %p63, %p64
    %s67 = sadd.s32 %s66, 1
    %p70 = scmp.eq.s32.totalorder %s11, 1
    %p71 = scmp.ne.s32.totalorder %s66, %s68
    %p72 = scmp.eq.s32.totalorder %s11, 0
    %p73 = por %p71, %p72
    %p74 = scmp.ne.s32.totalorder %s66, %s68
    %p75 = scmp.eq.s32.totalorder %s16, 1
    %p76 = por %p74, %p75
    %p77 = scmp.ne.s32.totalorder %s68, %s69
    %p78 = scmp.eq.s32.totalorder %s16, 0
    %p79 = por %p77, %p78
    %p80 = scmp.ne.s32.totalorder %s68, %s69
    %p81 = scmp.eq.s32.totalorder %s17, 1
    %p82 = por %p80, %p81
    %p84 = scmp.ne.s32.totalorder %s69, %s83
    %p85 = scmp.eq.s32.totalorder %s17, 0
    %p86 = por %p84, %p85
    %s88 = sadd.s32 %s87, 1
    %p91 = scmp.eq.s32.totalorder %s11, 1
    %p92 = scmp.ne.s32.totalorder %s87, %s89
    %p93 = scmp.eq.s32.totalorder %s11, 0
    %p94 = por %p92, %p93
    %p95 = scmp.ne.s32.totalorder %s87, %s89
    %p96 = scmp.eq.s32.totalorder %s16, 1
    %p97 = por %p95, %p96
    %p98 = scmp.ne.s32.totalorder %s89, %s90
    %p99 = scmp.eq.s32.totalorder %s16, 0
    %p100 = por %p98, %p99
    %p101 = scmp.ne.s32.totalorder %s89, %s90
    %p102 = scmp.eq.s32.totalorder %s17, 1
    %p103 = por %p101, %p102
    %p105 = scmp.ne.s32.totalorder %s90, %s104
    %p106 = scmp.eq.s32.totalorder %s17, 0
    %p107 = por %p105, %p106
    %s109 = sadd.s32 %s108, 1
    %p112 = scmp.eq.s32.totalorder %s11, 1
    %p113 = scmp.ne.s32.totalorder %s108, %s110
    %p114 = scmp.eq.s32.totalorder %s11, 0
    %p115 = por %p113, %p114
    %p116 = scmp.ne.s32.totalorder %s108, %s110
    %p117 = scmp.eq.s32.totalorder %s16, 1
    %p118 = por %p116, %p117
    %p119 = scmp.ne.s32.totalorder %s110, %s111
    %p120 = scmp.eq.s32.totalorder %s16, 0
    %p121 = por %p119, %p120
    %p122 = scmp.ne.s32.totalorder %s110, %s111
    %p123 = scmp.eq.s32.totalorder %s17, 1
    %p124 = por %p122, %p123
    %p126 = scmp.ne.s32.totalorder %s111, %s125
    %p127 = scmp.eq.s32.totalorder %s17, 0
    %p128 = por %p126, %p127
    %s129 = ssub.s32 %s11, %s18
    %p130 = scmp.eq.s32.totalorder %s129, 0
    %s132 = sadd.s32 %s131, 1
    %s133 = scalar_select %p130, %s131, %s132
    %p136 = pneg %p130
    %p137 = scmp.eq.s32.totalorder %s11, 1
    %p138 = por %p136, %p137
    %p139 = scmp.ne.s32.totalorder %s131, %s134
    %p140 = scmp.eq.s32.totalorder %s11, 0
    %p141 = por %p139, %p140
    %p142 = scmp.ne.s32.totalorder %s131, %s134
    %p143 = scmp.eq.s32.totalorder %s16, 1
    %p144 = por %p142, %p143
    %p145 = scmp.ne.s32.totalorder %s134, %s135
    %p146 = scmp.eq.s32.totalorder %s16, 0
    %p147 = por %p145, %p146
    %p148 = scmp.ne.s32.totalorder %s134, %s135
    %p149 = scmp.eq.s32.totalorder %s17, 1
    %p150 = por %p148, %p149
    %p152 = scmp.ne.s32.totalorder %s135, %s151
    %p153 = scmp.eq.s32.totalorder %s17, 0
    %p154 = por %p152, %p153
    %p155 = scmp.le.s32.totalorder 1, %s11
    %p156 = scmp.lt.s32.totalorder %s11, 3
    %p157 = pnand %p155, %p156
    %p158 = pneg %p157
    // Predicated region
    $region9: #{glu_group_forward.1} parent=5 // pred_check
      _
    $region10: #{glu_group_forward.1} parent=5 // pred_check_branch
      %160 = sbr.rel (%p157) target = $region12
    $region11: #{glu_group_forward.1} parent=5 // pred_region
      %s161 = ssub.s32 %s11, 1
      // Predicated region
      $region13: #{glu_group_forward.1} parent=11 // pred_check
        %p162 = pneg %p58
      $region14: #{glu_group_forward.1} parent=11 // pred_check_branch
        %164 = sbr.rel (%p162) target = $region16
      $region15: #{glu_group_forward.1} parent=11 // pred_region
        _
      $region16: #{glu_group_forward.1} parent=11 // pred_fallthru
        _
      // Predicated region
      $region17: #{glu_group_forward.1} parent=11 // pred_check
        %p165 = pneg %p79
      $region18: #{glu_group_forward.1} parent=11 // pred_check_branch
        %167 = sbr.rel (%p165) target = $region20
      $region19: #{glu_group_forward.1} parent=11 // pred_region
        _
      $region20: #{glu_group_forward.1} parent=11 // pred_fallthru
        _
      // Predicated region
      $region21: #{glu_group_forward.1} parent=11 // pred_check
        %p168 = pneg %p100
      $region22: #{glu_group_forward.1} parent=11 // pred_check_branch
        %170 = sbr.rel (%p168) target = $region24
      $region23: #{glu_group_forward.1} parent=11 // pred_region
        _
      $region24: #{glu_group_forward.1} parent=11 // pred_fallthru
        _
      // Predicated region
      $region25: #{glu_group_forward.1} parent=11 // pred_check
        %p171 = pneg %p121
      $region26: #{glu_group_forward.1} parent=11 // pred_check_branch
        %173 = sbr.rel (%p171) target = $region28
      $region27: #{glu_group_forward.1} parent=11 // pred_region
        _
      $region28: #{glu_group_forward.1} parent=11 // pred_fallthru
        _
    $region12: #{glu_group_forward.1} parent=5 // pred_fallthru
      _
    %p174 = scmp.lt.s32.totalorder %s11, 2
    // Predicated region
    $region29: #{glu_group_forward.1} parent=5 // pred_check
      %p175 = pneg %p174
    $region30: #{glu_group_forward.1} parent=5 // pred_check_branch
      %177 = sbr.rel (%p175) target = $region32
    $region31: #{glu_group_forward.1} parent=5 // pred_region
      // Predicated region
      $region33: #{glu_group_forward.1} parent=31 // pred_check
        %p178 = pneg %p31
      $region34: #{glu_group_forward.1} parent=31 // pred_check_branch
        %180 = sbr.rel (%p178) target = $region36
      $region35: #{glu_group_forward.1} parent=31 // pred_region
        %p181 = scmp.lt.s32.totalorder %s11, 1
        %s182 = scalar_select %p181, %s11, 1
        %s183 = smul.addr %s182, 32
        %s184 = smul.addr %s183, 8
        %s185 = scalar_lea.vmem %s0, %s184
      $region36: #{glu_group_forward.1} parent=31 // pred_fallthru
        _
    $region32: #{glu_group_forward.1} parent=5 // pred_fallthru
      _
    %p186 = scmp.le.s32.totalorder 1, %s11
    %p187 = scmp.lt.s32.totalorder %s11, 3
    %p188 = pnand %p186, %p187
    %p189 = pneg %p188
    // Predicated region
    $region37: #{glu_group_forward.1} parent=5 // pred_check
      _
    $region38: #{glu_group_forward.1} parent=5 // pred_check_branch
      %191 = sbr.rel (%p188) target = $region40
    $region39: #{glu_group_forward.1} parent=5 // pred_region
      %s192 = ssub.s32 %s11, 1
      %p193 = scmp.lt.s32.totalorder %s16, 1
      %s194 = scalar_select %p193, %s16, 1
      %s195 = smul.addr %s194, 32
      %s196 = smul.addr %s195, 8
      %s197 = scalar_lea.vmem %s0, %s196
      %p198 = pneg %p37
      %p199 = pneg %p34
      %p200 = pneg %p58
      %p201 = pneg %p55
      %p202 = pneg %p79
      %p203 = pneg %p76
      %p204 = pneg %p100
      %p205 = pneg %p97
      %p206 = pneg %p121
      %p207 = pneg %p118
      %p208 = pneg %p147
      %p209 = pneg %p144
      %p210 = scmp.lt.s32.totalorder %s16, 1
      %s211 = scalar_select %p210, %s16, 1
      %s212 = smul.addr %s211, 32
      %s213 = smul.addr %s212, 8
      %s214 = scalar_lea.vmem %s5, %s213
      %p215 = scmp.lt.s32.totalorder %s16, 1
      %s216 = scalar_select %p215, %s16, 1
      %s217 = smul.addr %s216, 32
      %s218 = smul.addr %s217, 8
      %s219 = scalar_lea.vmem %s0, %s218
      %p220 = scmp.lt.s32.totalorder %s16, 1
      %s221 = scalar_select %p220, %s16, 1
      %s222 = smul.addr %s221, 32
      %s223 = smul.addr %s222, 8
      %s224 = scalar_lea.vmem %s5, %s223
      %v226 = vld [vmem:[%s219] sm:$0xff]
      %v227 = vld [vmem:[%s219 + $0x8] sm:$0xff]
      %v228 = vld [vmem:[%s219 + $0x10] sm:$0xff]
      %v229 = vld [vmem:[%s219 + $0x18] sm:$0xff]
      %v230 = vld [vmem:[%s219 + $0x20] sm:$0xff]
      %v231 = vld [vmem:[%s219 + $0x28] sm:$0xff]
      %v232 = vld [vmem:[%s219 + $0x30] sm:$0xff]
      %v233 = vld [vmem:[%s219 + $0x38] sm:$0xff]
      %v234 = vld [vmem:[%s219 + $0x40] sm:$0xff]
      %v235 = vld [vmem:[%s219 + $0x48] sm:$0xff]
      %v236 = vld [vmem:[%s219 + $0x50] sm:$0xff]
      %v237 = vld [vmem:[%s219 + $0x58] sm:$0xff]
      %v238 = vld [vmem:[%s219 + $0x60] sm:$0xff]
      %v239 = vld [vmem:[%s219 + $0x68] sm:$0xff]
      %v240 = vld [vmem:[%s219 + $0x70] sm:$0xff]
      %v241 = vld [vmem:[%s219 + $0x78] sm:$0xff]
      %v242 = vld [vmem:[%s219 + $0x80] sm:$0xff]
      %v243 = vld [vmem:[%s219 + $0x88] sm:$0xff]
      %v244 = vld [vmem:[%s219 + $0x90] sm:$0xff]
      %v245 = vld [vmem:[%s219 + $0x98] sm:$0xff]
      %v246 = vld [vmem:[%s219 + $0xa0] sm:$0xff]
      %v247 = vld [vmem:[%s219 + $0xa8] sm:$0xff]
      %v248 = vld [vmem:[%s219 + $0xb0] sm:$0xff]
      %v249 = vld [vmem:[%s219 + $0xb8] sm:$0xff]
      %v250 = vld [vmem:[%s219 + $0xc0] sm:$0xff]
      %v251 = vld [vmem:[%s219 + $0xc8] sm:$0xff]
      %v252 = vld [vmem:[%s219 + $0xd0] sm:$0xff]
      %v253 = vld [vmem:[%s219 + $0xd8] sm:$0xff]
      %v254 = vld [vmem:[%s219 + $0xe0] sm:$0xff]
      %v255 = vld [vmem:[%s219 + $0xe8] sm:$0xff]
      %v256 = vld [vmem:[%s219 + $0xf0] sm:$0xff]
      %v257 = vld [vmem:[%s219 + $0xf8] sm:$0xff]
      %v258 = vpack.c.bf16 %v227, %v226
      %v259 = vpack.c.bf16 %v229, %v228
      %v260 = vpack.c.bf16 %v231, %v230
      %v261 = vpack.c.bf16 %v233, %v232
      %v262 = vpack.c.bf16 %v235, %v234
      %v263 = vpack.c.bf16 %v237, %v236
      %v264 = vpack.c.bf16 %v239, %v238
      %v265 = vpack.c.bf16 %v241, %v240
      %v266 = vpack.c.bf16 %v243, %v242
      %v267 = vpack.c.bf16 %v245, %v244
      %v268 = vpack.c.bf16 %v247, %v246
      %v269 = vpack.c.bf16 %v249, %v248
      %v270 = vpack.c.bf16 %v251, %v250
      %v271 = vpack.c.bf16 %v253, %v252
      %v272 = vpack.c.bf16 %v255, %v254
      %v273 = vpack.c.bf16 %v257, %v256
      %v274 = vld [vmem:[%s1] sm:$0xf]
      %v275 = vld [vmem:[%s1 + $0x4] sm:$0xf]
      %v276 = vld [vmem:[%s2] sm:$0x1]
      %v278 = vlaneseq
      %v279 = vshrl.u32 %v278, 7
      %v280 = vsub.s32 0, %v279
      %v281 = vrot.slane %v276, %v280
      %v285 = vunpack.c.l.b16 %v274
      %v286 = vunpack.c.l.b16 %v275
      %v287 = vpack.c.b16 %v286, %v285
      %vm289 = vcmask 130048
      %v291 = vsel %vm289, %v258, 0
      %v294 = vsel %vm289, %v259, 0
      %v297 = vsel %vm289, %v260, 0
      %v300 = vsel %vm289, %v261, 0
      %v303 = vsel %vm289, %v262, 0
      %v306 = vsel %vm289, %v263, 0
      %v309 = vsel %vm289, %v264, 0
      %v312 = vsel %vm289, %v265, 0
      %v315 = vsel %vm289, %v266, 0
      %v318 = vsel %vm289, %v267, 0
      %v321 = vsel %vm289, %v268, 0
      %v324 = vsel %vm289, %v269, 0
      %v327 = vsel %vm289, %v270, 0
      %v330 = vsel %vm289, %v271, 0
      %v333 = vsel %vm289, %v272, 0
      %v336 = vsel %vm289, %v273, 0
      %338 = vmatprep.subr.bf16.mxu0 0
      %339 = vmatpush1.bf16.msra.mxu0 %v287
      %340 = vmatprep.subr.bf16.mxu0 0
      %341 = vmatpush1.bf16.msra.mxu0 0
      %342 = vmatprep.subr.bf16.mxu0 0
      %343 = vmatpush1.bf16.msra.mxu0 0
      %344 = vmatprep.subr.bf16.mxu0 0
      %345 = vmatpush1.bf16.msra.mxu0 0
      %346 = vmatprep.subr.bf16.mxu0 0
      %347 = vmatpush1.bf16.msra.mxu0 0
      %348 = vmatprep.subr.bf16.mxu0 0
      %349 = vmatpush1.bf16.msra.mxu0 0
      %350 = vmatprep.subr.bf16.mxu0 0
      %351 = vmatpush1.bf16.msra.mxu0 0
      %352 = vmatprep.subr.bf16.mxu0 0
      %353 = vmatpush1.bf16.msra.mxu0 0
      %354 = vmatprep.subr.bf16.mxu0 0
      %355 = vmatpush1.bf16.msra.mxu0 0
      %356 = vmatprep.subr.bf16.mxu0 0
      %357 = vmatpush1.bf16.msra.mxu0 0
      %358 = vmatprep.subr.bf16.mxu0 0
      %359 = vmatpush1.bf16.msra.mxu0 0
      %360 = vmatprep.subr.bf16.mxu0 0
      %361 = vmatpush1.bf16.msra.mxu0 0
      %362 = vmatprep.subr.bf16.mxu0 0
      %363 = vmatpush1.bf16.msra.mxu0 0
      %364 = vmatprep.subr.bf16.mxu0 0
      %365 = vmatpush1.bf16.msra.mxu0 0
      %366 = vmatprep.subr.bf16.mxu0 0
      %367 = vmatpush1.bf16.msra.mxu0 0
      %368 = vmatprep.subr.bf16.mxu0 0
      %369 = vmatpush1.bf16.msra.mxu0 0
      %370 = vmatprep.mubr.bf16.mxu0 0
      %371 = vmatmul.mubr.bf16.gmra.mrb[0].mxu0 %v291
      %v372 = vpop.f32.mrb[0].mxu0
      %v373 = vadd.f32 %v281, %v372
      %v374 = vpop.f32.mrb[0].mxu0
      %v375 = vpop.f32.mrb[0].mxu0
      %v376 = vadd.f32 %v281, %v375
      %v377 = vpop.f32.mrb[0].mxu0
      %378 = vmatprep.mubr.bf16.mxu0 0
      %379 = vmatmul.mubr.bf16.gmra.mrb[0].mxu0 %v294
      %v380 = vpop.f32.mrb[0].mxu0
      %v381 = vadd.f32 %v281, %v380
      %v382 = vpop.f32.mrb[0].mxu0
      %v383 = vpop.f32.mrb[0].mxu0
      %v384 = vadd.f32 %v281, %v383
      %v385 = vpop.f32.mrb[0].mxu0
      %386 = vmatprep.mubr.bf16.mxu0 0
      %387 = vmatmul.mubr.bf16.gmra.mrb[0].mxu0 %v297
      %v388 = vpop.f32.mrb[0].mxu0
      %v389 = vadd.f32 %v281, %v388
      %v390 = vpop.f32.mrb[0].mxu0
      %v391 = vpop.f32.mrb[0].mxu0
      %v392 = vadd.f32 %v281, %v391
      %v393 = vpop.f32.mrb[0].mxu0
      %394 = vmatprep.mubr.bf16.mxu0 0
      %395 = vmatmul.mubr.bf16.gmra.mrb[0].mxu0 %v300
      %v396 = vpop.f32.mrb[0].mxu0
      %v397 = vadd.f32 %v281, %v396
      %v398 = vpop.f32.mrb[0].mxu0
      %v399 = vpop.f32.mrb[0].mxu0
      %v400 = vadd.f32 %v281, %v399
      %v401 = vpop.f32.mrb[0].mxu0
      %402 = vmatprep.mubr.bf16.mxu0 0
      %403 = vmatmul.mubr.bf16.gmra.mrb[0].mxu0 %v303
      %v404 = vpop.f32.mrb[0].mxu0
      %v405 = vadd.f32 %v281, %v404
      %v406 = vpop.f32.mrb[0].mxu0
      %v407 = vpop.f32.mrb[0].mxu0
      %v408 = vadd.f32 %v281, %v407
      %v409 = vpop.f32.mrb[0].mxu0
      %410 = vmatprep.mubr.bf16.mxu0 0
      %411 = vmatmul.mubr.bf16.gmra.mrb[0].mxu0 %v306
      %v412 = vpop.f32.mrb[0].mxu0
      %v413 = vadd.f32 %v281, %v412
      %v414 = vpop.f32.mrb[0].mxu0
      %v415 = vpop.f32.mrb[0].mxu0
      %v416 = vadd.f32 %v281, %v415
      %v417 = vpop.f32.mrb[0].mxu0
      %418 = vmatprep.mubr.bf16.mxu0 0
      %419 = vmatmul.mubr.bf16.gmra.mrb[0].mxu0 %v309
      %v420 = vpop.f32.mrb[0].mxu0
      %v421 = vadd.f32 %v281, %v420
      %v422 = vpop.f32.mrb[0].mxu0
      %v423 = vpop.f32.mrb[0].mxu0
      %v424 = vadd.f32 %v281, %v423
      %v425 = vpop.f32.mrb[0].mxu0
      %426 = vmatprep.mubr.bf16.mxu0 0
      %427 = vmatmul.mubr.bf16.gmra.mrb[0].mxu0 %v312
      %v428 = vpop.f32.mrb[0].mxu0
      %v429 = vadd.f32 %v281, %v428
      %v430 = vpop.f32.mrb[0].mxu0
      %v431 = vpop.f32.mrb[0].mxu0
      %v432 = vadd.f32 %v281, %v431
      %v433 = vpop.f32.mrb[0].mxu0
      %434 = vmatprep.mubr.bf16.mxu0 0
      %435 = vmatmul.mubr.bf16.gmra.mrb[0].mxu0 %v315
      %v436 = vpop.f32.mrb[0].mxu0
      %v437 = vadd.f32 %v281, %v436
      %v438 = vpop.f32.mrb[0].mxu0
      %v439 = vpop.f32.mrb[0].mxu0
      %v440 = vadd.f32 %v281, %v439
      %v441 = vpop.f32.mrb[0].mxu0
      %442 = vmatprep.mubr.bf16.mxu0 0
      %443 = vmatmul.mubr.bf16.gmra.mrb[0].mxu0 %v318
      %v444 = vpop.f32.mrb[0].mxu0
      %v445 = vadd.f32 %v281, %v444
      %v446 = vpop.f32.mrb[0].mxu0
      %v447 = vpop.f32.mrb[0].mxu0
      %v448 = vadd.f32 %v281, %v447
      %v449 = vpop.f32.mrb[0].mxu0
      %450 = vmatprep.mubr.bf16.mxu0 0
      %451 = vmatmul.mubr.bf16.gmra.mrb[0].mxu0 %v321
      %v452 = vpop.f32.mrb[0].mxu0
      %v453 = vadd.f32 %v281, %v452
      %v454 = vpop.f32.mrb[0].mxu0
      %v455 = vpop.f32.mrb[0].mxu0
      %v456 = vadd.f32 %v281, %v455
      %v457 = vpop.f32.mrb[0].mxu0
      %458 = vmatprep.mubr.bf16.mxu0 0
      %459 = vmatmul.mubr.bf16.gmra.mrb[0].mxu0 %v324
      %v460 = vpop.f32.mrb[0].mxu0
      %v461 = vadd.f32 %v281, %v460
      %v462 = vpop.f32.mrb[0].mxu0
      %v463 = vpop.f32.mrb[0].mxu0
      %v464 = vadd.f32 %v281, %v463
      %v465 = vpop.f32.mrb[0].mxu0
      %466 = vmatprep.mubr.bf16.mxu0 0
      %467 = vmatmul.mubr.bf16.gmra.mrb[0].mxu0 %v327
      %v468 = vpop.f32.mrb[0].mxu0
      %v469 = vadd.f32 %v281, %v468
      %v470 = vpop.f32.mrb[0].mxu0
      %v471 = vpop.f32.mrb[0].mxu0
      %v472 = vadd.f32 %v281, %v471
      %v473 = vpop.f32.mrb[0].mxu0
      %474 = vmatprep.mubr.bf16.mxu0 0
      %475 = vmatmul.mubr.bf16.gmra.mrb[0].mxu0 %v330
      %v476 = vpop.f32.mrb[0].mxu0
      %v477 = vadd.f32 %v281, %v476
      %v478 = vpop.f32.mrb[0].mxu0
      %v479 = vpop.f32.mrb[0].mxu0
      %v480 = vadd.f32 %v281, %v479
      %v481 = vpop.f32.mrb[0].mxu0
      %482 = vmatprep.mubr.bf16.mxu0 0
      %483 = vmatmul.mubr.bf16.gmra.mrb[0].mxu0 %v333
      %v484 = vpop.f32.mrb[0].mxu0
      %v485 = vadd.f32 %v281, %v484
      %v486 = vpop.f32.mrb[0].mxu0
      %v487 = vpop.f32.mrb[0].mxu0
      %v488 = vadd.f32 %v281, %v487
      %v489 = vpop.f32.mrb[0].mxu0
      %490 = vmatprep.mubr.bf16.mxu0 0
      %491 = vmatmul.mubr.bf16.gmra.mrb[0].mxu0 %v336
      %v492 = vpop.f32.mrb[0].mxu0
      %v493 = vadd.f32 %v281, %v492
      %v494 = vpop.f32.mrb[0].mxu0
      %v495 = vpop.f32.mrb[0].mxu0
      %v496 = vadd.f32 %v281, %v495
      %v497 = vpop.f32.mrb[0].mxu0
      %498 = vdwg.mxu0
      %v499 = vxor.u32 %v373, 2147483648
      %v500 = vxor.u32 %v376, 2147483648
      %v501 = vxor.u32 %v381, 2147483648
      %v502 = vxor.u32 %v384, 2147483648
      %v503 = vxor.u32 %v389, 2147483648
      %v504 = vxor.u32 %v392, 2147483648
      %v505 = vxor.u32 %v397, 2147483648
      %v506 = vxor.u32 %v400, 2147483648
      %v507 = vxor.u32 %v405, 2147483648
      %v508 = vxor.u32 %v408, 2147483648
      %v509 = vxor.u32 %v413, 2147483648
      %v510 = vxor.u32 %v416, 2147483648
      %v511 = vxor.u32 %v421, 2147483648
      %v512 = vxor.u32 %v424, 2147483648
      %v513 = vxor.u32 %v429, 2147483648
      %v514 = vxor.u32 %v432, 2147483648
      %v515 = vxor.u32 %v437, 2147483648
      %v516 = vxor.u32 %v440, 2147483648
      %v517 = vxor.u32 %v445, 2147483648
      %v518 = vxor.u32 %v448, 2147483648
      %v519 = vxor.u32 %v453, 2147483648
      %v520 = vxor.u32 %v456, 2147483648
      %v521 = vxor.u32 %v461, 2147483648
      %v522 = vxor.u32 %v464, 2147483648
      %v523 = vxor.u32 %v469, 2147483648
      %v524 = vxor.u32 %v472, 2147483648
      %v525 = vxor.u32 %v477, 2147483648
      %v526 = vxor.u32 %v480, 2147483648
      %v527 = vxor.u32 %v485, 2147483648
      %v528 = vxor.u32 %v488, 2147483648
      %v529 = vxor.u32 %v493, 2147483648
      %v530 = vxor.u32 %v496, 2147483648
      %v531 = vmul.f32 %v499, 1.442695
      %v532 = vpow.pop %v531
      %v533 = vmul.f32 %v500, 1.442695
      %v534 = vpow.pop %v533
      %v535 = vmul.f32 %v501, 1.442695
      %v536 = vpow.pop %v535
      %v537 = vmul.f32 %v502, 1.442695
      %v538 = vpow.pop %v537
      %v539 = vmul.f32 %v503, 1.442695
      %v540 = vpow.pop %v539
      %v541 = vmul.f32 %v504, 1.442695
      %v542 = vpow.pop %v541
      %v543 = vmul.f32 %v505, 1.442695
      %v544 = vpow.pop %v543
      %v545 = vmul.f32 %v506, 1.442695
      %v546 = vpow.pop %v545
      %v547 = vmul.f32 %v507, 1.442695
      %v548 = vpow.pop %v547
      %v549 = vmul.f32 %v508, 1.442695
      %v550 = vpow.pop %v549
      %v551 = vmul.f32 %v509, 1.442695
      %v552 = vpow.pop %v551
      %v553 = vmul.f32 %v510, 1.442695
      %v554 = vpow.pop %v553
      %v555 = vmul.f32 %v511, 1.442695
      %v556 = vpow.pop %v555
      %v557 = vmul.f32 %v512, 1.442695
      %v558 = vpow.pop %v557
      %v559 = vmul.f32 %v513, 1.442695
      %v560 = vpow.pop %v559
      %v561 = vmul.f32 %v514, 1.442695
      %v562 = vpow.pop %v561
      %v563 = vmul.f32 %v515, 1.442695
      %v564 = vpow.pop %v563
      %v565 = vmul.f32 %v516, 1.442695
      %v566 = vpow.pop %v565
      %v567 = vmul.f32 %v517, 1.442695
      %v568 = vpow.pop %v567
      %v569 = vmul.f32 %v518, 1.442695
      %v570 = vpow.pop %v569
      %v571 = vmul.f32 %v519, 1.442695
      %v572 = vpow.pop %v571
      %v573 = vmul.f32 %v520, 1.442695
      %v574 = vpow.pop %v573
      %v575 = vmul.f32 %v521, 1.442695
      %v576 = vpow.pop %v575
      %v577 = vmul.f32 %v522, 1.442695
      %v578 = vpow.pop %v577
      %v579 = vmul.f32 %v523, 1.442695
      %v580 = vpow.pop %v579
      %v581 = vmul.f32 %v524, 1.442695
      %v582 = vpow.pop %v581
      %v583 = vmul.f32 %v525, 1.442695
      %v584 = vpow.pop %v583
      %v585 = vmul.f32 %v526, 1.442695
      %v586 = vpow.pop %v585
      %v587 = vmul.f32 %v527, 1.442695
      %v588 = vpow.pop %v587
      %v589 = vmul.f32 %v528, 1.442695
      %v590 = vpow.pop %v589
      %v591 = vmul.f32 %v529, 1.442695
      %v592 = vpow.pop %v591
      %v593 = vmul.f32 %v530, 1.442695
      %v594 = vpow.pop %v593
      %v595 = vadd.f32 %v532, 1.0
      %v596 = vadd.f32 %v534, 1.0
      %v597 = vadd.f32 %v536, 1.0
      %v598 = vadd.f32 %v538, 1.0
      %v599 = vadd.f32 %v540, 1.0
      %v600 = vadd.f32 %v542, 1.0
      %v601 = vadd.f32 %v544, 1.0
      %v602 = vadd.f32 %v546, 1.0
      %v603 = vadd.f32 %v548, 1.0
      %v604 = vadd.f32 %v550, 1.0
      %v605 = vadd.f32 %v552, 1.0
      %v606 = vadd.f32 %v554, 1.0
      %v607 = vadd.f32 %v556, 1.0
      %v608 = vadd.f32 %v558, 1.0
      %v609 = vadd.f32 %v560, 1.0
      %v610 = vadd.f32 %v562, 1.0
      %v611 = vadd.f32 %v564, 1.0
      %v612 = vadd.f32 %v566, 1.0
      %v613 = vadd.f32 %v568, 1.0
      %v614 = vadd.f32 %v570, 1.0
      %v615 = vadd.f32 %v572, 1.0
      %v616 = vadd.f32 %v574, 1.0
      %v617 = vadd.f32 %v576, 1.0
      %v618 = vadd.f32 %v578, 1.0
      %v619 = vadd.f32 %v580, 1.0
      %v620 = vadd.f32 %v582, 1.0
      %v621 = vadd.f32 %v584, 1.0
      %v622 = vadd.f32 %v586, 1.0
      %v623 = vadd.f32 %v588, 1.0
      %v624 = vadd.f32 %v590, 1.0
      %v625 = vadd.f32 %v592, 1.0
      %v626 = vadd.f32 %v594, 1.0
      %v627 = vrcp.pop %v595
      %v628 = vmul.f32 1.0, %v627
      %v629 = vrcp.pop %v596
      %v630 = vmul.f32 1.0, %v629
      %v631 = vrcp.pop %v597
      %v632 = vmul.f32 1.0, %v631
      %v633 = vrcp.pop %v598
      %v634 = vmul.f32 1.0, %v633
      %v635 = vrcp.pop %v599
      %v636 = vmul.f32 1.0, %v635
      %v637 = vrcp.pop %v600
      %v638 = vmul.f32 1.0, %v637
      %v639 = vrcp.pop %v601
      %v640 = vmul.f32 1.0, %v639
      %v641 = vrcp.pop %v602
      %v642 = vmul.f32 1.0, %v641
      %v643 = vrcp.pop %v603
      %v644 = vmul.f32 1.0, %v643
      %v645 = vrcp.pop %v604
      %v646 = vmul.f32 1.0, %v645
      %v647 = vrcp.pop %v605
      %v648 = vmul.f32 1.0, %v647
      %v649 = vrcp.pop %v606
      %v650 = vmul.f32 1.0, %v649
      %v651 = vrcp.pop %v607
      %v652 = vmul.f32 1.0, %v651
      %v653 = vrcp.pop %v608
      %v654 = vmul.f32 1.0, %v653
      %v655 = vrcp.pop %v609
      %v656 = vmul.f32 1.0, %v655
      %v657 = vrcp.pop %v610
      %v658 = vmul.f32 1.0, %v657
      %v659 = vrcp.pop %v611
      %v660 = vmul.f32 1.0, %v659
      %v661 = vrcp.pop %v612
      %v662 = vmul.f32 1.0, %v661
      %v663 = vrcp.pop %v613
      %v664 = vmul.f32 1.0, %v663
      %v665 = vrcp.pop %v614
      %v666 = vmul.f32 1.0, %v665
      %v667 = vrcp.pop %v615
      %v668 = vmul.f32 1.0, %v667
      %v669 = vrcp.pop %v616
      %v670 = vmul.f32 1.0, %v669
      %v671 = vrcp.pop %v617
      %v672 = vmul.f32 1.0, %v671
      %v673 = vrcp.pop %v618
      %v674 = vmul.f32 1.0, %v673
      %v675 = vrcp.pop %v619
      %v676 = vmul.f32 1.0, %v675
      %v677 = vrcp.pop %v620
      %v678 = vmul.f32 1.0, %v677
      %v679 = vrcp.pop %v621
      %v680 = vmul.f32 1.0, %v679
      %v681 = vrcp.pop %v622
      %v682 = vmul.f32 1.0, %v681
      %v683 = vrcp.pop %v623
      %v684 = vmul.f32 1.0, %v683
      %v685 = vrcp.pop %v624
      %v686 = vmul.f32 1.0, %v685
      %v687 = vrcp.pop %v625
      %v688 = vmul.f32 1.0, %v687
      %v689 = vrcp.pop %v626
      %v690 = vmul.f32 1.0, %v689
      %723 = vrot.lane.b32.xlu0 %v628, 112
      %v724 = vpop.permute.xlu0 %723
      %725 = vrot.lane.b32.xlu0 %v630, 112
      %v726 = vpop.permute.xlu0 %725
      %727 = vrot.lane.b32.xlu0 %v632, 112
      %v728 = vpop.permute.xlu0 %727
      %729 = vrot.lane.b32.xlu0 %v634, 112
      %v730 = vpop.permute.xlu0 %729
      %731 = vrot.lane.b32.xlu0 %v636, 112
      %v732 = vpop.permute.xlu0 %731
      %733 = vrot.lane.b32.xlu0 %v638, 112
      %v734 = vpop.permute.xlu0 %733
      %735 = vrot.lane.b32.xlu0 %v640, 112
      %v736 = vpop.permute.xlu0 %735
      %737 = vrot.lane.b32.xlu0 %v642, 112
      %v738 = vpop.permute.xlu0 %737
      %739 = vrot.lane.b32.xlu0 %v644, 112
      %v740 = vpop.permute.xlu0 %739
      %741 = vrot.lane.b32.xlu0 %v646, 112
      %v742 = vpop.permute.xlu0 %741
      %743 = vrot.lane.b32.xlu0 %v648, 112
      %v744 = vpop.permute.xlu0 %743
      %745 = vrot.lane.b32.xlu0 %v650, 112
      %v746 = vpop.permute.xlu0 %745
      %747 = vrot.lane.b32.xlu0 %v652, 112
      %v748 = vpop.permute.xlu0 %747
      %749 = vrot.lane.b32.xlu0 %v654, 112
      %v750 = vpop.permute.xlu0 %749
      %751 = vrot.lane.b32.xlu0 %v656, 112
      %v752 = vpop.permute.xlu0 %751
      %753 = vrot.lane.b32.xlu0 %v658, 112
      %v754 = vpop.permute.xlu0 %753
      %755 = vrot.lane.b32.xlu0 %v660, 112
      %v756 = vpop.permute.xlu0 %755
      %757 = vrot.lane.b32.xlu0 %v662, 112
      %v758 = vpop.permute.xlu0 %757
      %759 = vrot.lane.b32.xlu0 %v664, 112
      %v760 = vpop.permute.xlu0 %759
      %761 = vrot.lane.b32.xlu0 %v666, 112
      %v762 = vpop.permute.xlu0 %761
      %763 = vrot.lane.b32.xlu0 %v668, 112
      %v764 = vpop.permute.xlu0 %763
      %765 = vrot.lane.b32.xlu0 %v670, 112
      %v766 = vpop.permute.xlu0 %765
      %767 = vrot.lane.b32.xlu0 %v672, 112
      %v768 = vpop.permute.xlu0 %767
      %769 = vrot.lane.b32.xlu0 %v674, 112
      %v770 = vpop.permute.xlu0 %769
      %771 = vrot.lane.b32.xlu0 %v676, 112
      %v772 = vpop.permute.xlu0 %771
      %773 = vrot.lane.b32.xlu0 %v678, 112
      %v774 = vpop.permute.xlu0 %773
      %775 = vrot.lane.b32.xlu0 %v680, 112
      %v776 = vpop.permute.xlu0 %775
      %777 = vrot.lane.b32.xlu0 %v682, 112
      %v778 = vpop.permute.xlu0 %777
      %779 = vrot.lane.b32.xlu0 %v684, 112
      %v780 = vpop.permute.xlu0 %779
      %781 = vrot.lane.b32.xlu0 %v686, 112
      %v782 = vpop.permute.xlu0 %781
      %783 = vrot.lane.b32.xlu0 %v688, 112
      %v784 = vpop.permute.xlu0 %783
      %785 = vrot.lane.b32.xlu0 %v690, 112
      %v786 = vpop.permute.xlu0 %785
      %v819 = vmul.f32 %v373, %v724
      %v820 = vmul.f32 %v376, %v726
      %v821 = vmul.f32 %v381, %v728
      %v822 = vmul.f32 %v384, %v730
      %v823 = vmul.f32 %v389, %v732
      %v824 = vmul.f32 %v392, %v734
      %v825 = vmul.f32 %v397, %v736
      %v826 = vmul.f32 %v400, %v738
      %v827 = vmul.f32 %v405, %v740
      %v828 = vmul.f32 %v408, %v742
      %v829 = vmul.f32 %v413, %v744
      %v830 = vmul.f32 %v416, %v746
      %v831 = vmul.f32 %v421, %v748
      %v832 = vmul.f32 %v424, %v750
      %v833 = vmul.f32 %v429, %v752
      %v834 = vmul.f32 %v432, %v754
      %v835 = vmul.f32 %v437, %v756
      %v836 = vmul.f32 %v440, %v758
      %v837 = vmul.f32 %v445, %v760
      %v838 = vmul.f32 %v448, %v762
      %v839 = vmul.f32 %v453, %v764
      %v840 = vmul.f32 %v456, %v766
      %v841 = vmul.f32 %v461, %v768
      %v842 = vmul.f32 %v464, %v770
      %v843 = vmul.f32 %v469, %v772
      %v844 = vmul.f32 %v472, %v774
      %v845 = vmul.f32 %v477, %v776
      %v846 = vmul.f32 %v480, %v778
      %v847 = vmul.f32 %v485, %v780
      %v848 = vmul.f32 %v488, %v782
      %v849 = vmul.f32 %v493, %v784
      %v850 = vmul.f32 %v496, %v786
      %851 = vst.msk [vmem:[#allocation2] sm:$0xff] %vm289, 0.0
      %852 = vst.msk [vmem:[#allocation2 + $0x8] sm:$0xff] %vm289, 0.0
      %vm853 = vcmask 123904
      %854 = vst.msk [vmem:[#allocation2 + $0x10] sm:$0x3] %vm853, 0.0
      %855 = vst.msk [vmem:[#allocation2 + $0x18] sm:$0xff] %vm289, 0.0
      %856 = vst.msk [vmem:[#allocation2 + $0x20] sm:$0xff] %vm289, 0.0
      %857 = vst.msk [vmem:[#allocation2 + $0x28] sm:$0x3] %vm853, 0.0
      %858 = vst.msk [vmem:[#allocation2 + $0x30] sm:$0xff] %vm289, 0.0
      %859 = vst.msk [vmem:[#allocation2 + $0x38] sm:$0xff] %vm289, 0.0
      %860 = vst.msk [vmem:[#allocation2 + $0x40] sm:$0x3] %vm853, 0.0
      %861 = vst.msk [vmem:[#allocation2 + $0x48] sm:$0xff] %vm289, 0.0
      %862 = vst.msk [vmem:[#allocation2 + $0x50] sm:$0xff] %vm289, 0.0
      %863 = vst.msk [vmem:[#allocation2 + $0x58] sm:$0x3] %vm853, 0.0
      %864 = vst.msk [vmem:[#allocation2 + $0x60] sm:$0xff] %vm289, 0.0
      %865 = vst.msk [vmem:[#allocation2 + $0x68] sm:$0xff] %vm289, 0.0
      %866 = vst.msk [vmem:[#allocation2 + $0x70] sm:$0x3] %vm853, 0.0
      %867 = vst.msk [vmem:[#allocation2 + $0x78] sm:$0xff] %vm289, 0.0
      %868 = vst.msk [vmem:[#allocation2 + $0x80] sm:$0xff] %vm289, 0.0
      %869 = vst.msk [vmem:[#allocation2 + $0x88] sm:$0x3] %vm853, 0.0
      %870 = vst.msk [vmem:[#allocation2 + $0x90] sm:$0xff] %vm289, 0.0
      %871 = vst.msk [vmem:[#allocation2 + $0x98] sm:$0xff] %vm289, 0.0
      %872 = vst.msk [vmem:[#allocation2 + $0xa0] sm:$0x3] %vm853, 0.0
      %873 = vst.msk [vmem:[#allocation2 + $0xa8] sm:$0xff] %vm289, 0.0
      %874 = vst.msk [vmem:[#allocation2 + $0xb0] sm:$0xff] %vm289, 0.0
      %875 = vst.msk [vmem:[#allocation2 + $0xb8] sm:$0x3] %vm853, 0.0
      %876 = vst.msk [vmem:[#allocation2 + $0xc0] sm:$0xff] %vm289, 0.0
      %877 = vst.msk [vmem:[#allocation2 + $0xc8] sm:$0xff] %vm289, 0.0
      %878 = vst.msk [vmem:[#allocation2 + $0xd0] sm:$0x3] %vm853, 0.0
      %879 = vst.msk [vmem:[#allocation2 + $0xd8] sm:$0xff] %vm289, 0.0
      %880 = vst.msk [vmem:[#allocation2 + $0xe0] sm:$0xff] %vm289, 0.0
      %881 = vst.msk [vmem:[#allocation2 + $0xe8] sm:$0x3] %vm853, 0.0
      %882 = vst.msk [vmem:[#allocation2 + $0xf0] sm:$0xff] %vm289, 0.0
      %883 = vst.msk [vmem:[#allocation2 + $0xf8] sm:$0xff] %vm289, 0.0
      %884 = vst.msk [vmem:[#allocation2 + $0x100] sm:$0x3] %vm853, 0.0
      %885 = vst.msk [vmem:[#allocation2 + $0x108] sm:$0xff] %vm289, 0.0
      %886 = vst.msk [vmem:[#allocation2 + $0x110] sm:$0xff] %vm289, 0.0
      %887 = vst.msk [vmem:[#allocation2 + $0x118] sm:$0x3] %vm853, 0.0
      %888 = vst.msk [vmem:[#allocation2 + $0x120] sm:$0xff] %vm289, 0.0
      %889 = vst.msk [vmem:[#allocation2 + $0x128] sm:$0xff] %vm289, 0.0
      %890 = vst.msk [vmem:[#allocation2 + $0x130] sm:$0x3] %vm853, 0.0
      %891 = vst.msk [vmem:[#allocation2 + $0x138] sm:$0xff] %vm289, 0.0
      %892 = vst.msk [vmem:[#allocation2 + $0x140] sm:$0xff] %vm289, 0.0
      %893 = vst.msk [vmem:[#allocation2 + $0x148] sm:$0x3] %vm853, 0.0
      %894 = vst.msk [vmem:[#allocation2 + $0x150] sm:$0xff] %vm289, 0.0
      %895 = vst.msk [vmem:[#allocation2 + $0x158] sm:$0xff] %vm289, 0.0
      %896 = vst.msk [vmem:[#allocation2 + $0x160] sm:$0x3] %vm853, 0.0
      %897 = vst.msk [vmem:[#allocation2 + $0x168] sm:$0xff] %vm289, 0.0
      %898 = vst.msk [vmem:[#allocation2 + $0x170] sm:$0xff] %vm289, 0.0
      %899 = vst.msk [vmem:[#allocation2 + $0x178] sm:$0x3] %vm853, 0.0
      %900 = vst.msk [vmem:[#allocation2 + $0x180] sm:$0xff] %vm289, 0.0
      %901 = vst.msk [vmem:[#allocation2 + $0x188] sm:$0xff] %vm289, 0.0
      %902 = vst.msk [vmem:[#allocation2 + $0x190] sm:$0x3] %vm853, 0.0
      %903 = vst.msk [vmem:[#allocation2 + $0x198] sm:$0xff] %vm289, 0.0
      %904 = vst.msk [vmem:[#allocation2 + $0x1a0] sm:$0xff] %vm289, 0.0
      %905 = vst.msk [vmem:[#allocation2 + $0x1a8] sm:$0x3] %vm853, 0.0
      %s906 = scalar_lea.vmem [#allocation2], 24
      %907 = vst.msk [vmem:[%s906 + $0x1] sm:$0xff] %vm289, %v819
      %908 = vst.msk [vmem:[%s906 + $0x9] sm:$0xff] %vm289, %v820
      %909 = vst.msk [vmem:[%s906 + $0x19] sm:$0xff] %vm289, %v821
      %910 = vst.msk [vmem:[%s906 + $0x21] sm:$0xff] %vm289, %v822
      %911 = vst.msk [vmem:[%s906 + $0x31] sm:$0xff] %vm289, %v823
      %912 = vst.msk [vmem:[%s906 + $0x39] sm:$0xff] %vm289, %v824
      %913 = vst.msk [vmem:[%s906 + $0x49] sm:$0xff] %vm289, %v825
      %914 = vst.msk [vmem:[%s906 + $0x51] sm:$0xff] %vm289, %v826
      %915 = vst.msk [vmem:[%s906 + $0x61] sm:$0xff] %vm289, %v827
      %916 = vst.msk [vmem:[%s906 + $0x69] sm:$0xff] %vm289, %v828
      %917 = vst.msk [vmem:[%s906 + $0x79] sm:$0xff] %vm289, %v829
      %918 = vst.msk [vmem:[%s906 + $0x81] sm:$0xff] %vm289, %v830
      %919 = vst.msk [vmem:[%s906 + $0x91] sm:$0xff] %vm289, %v831
      %920 = vst.msk [vmem:[%s906 + $0x99] sm:$0xff] %vm289, %v832
      %921 = vst.msk [vmem:[%s906 + $0xa9] sm:$0xff] %vm289, %v833
      %922 = vst.msk [vmem:[%s906 + $0xb1] sm:$0xff] %vm289, %v834
      %923 = vst.msk [vmem:[%s906 + $0xc1] sm:$0xff] %vm289, %v835
      %924 = vst.msk [vmem:[%s906 + $0xc9] sm:$0xff] %vm289, %v836
      %925 = vst.msk [vmem:[%s906 + $0xd9] sm:$0xff] %vm289, %v837
      %926 = vst.msk [vmem:[%s906 + $0xe1] sm:$0xff] %vm289, %v838
      %927 = vst.msk [vmem:[%s906 + $0xf1] sm:$0xff] %vm289, %v839
      %928 = vst.msk [vmem:[%s906 + $0xf9] sm:$0xff] %vm289, %v840
      %929 = vst.msk [vmem:[%s906 + $0x109] sm:$0xff] %vm289, %v841
      %930 = vst.msk [vmem:[%s906 + $0x111] sm:$0xff] %vm289, %v842
      %931 = vst.msk [vmem:[%s906 + $0x121] sm:$0xff] %vm289, %v843
      %932 = vst.msk [vmem:[%s906 + $0x129] sm:$0xff] %vm289, %v844
      %933 = vst.msk [vmem:[%s906 + $0x139] sm:$0xff] %vm289, %v845
      %934 = vst.msk [vmem:[%s906 + $0x141] sm:$0xff] %vm289, %v846
      %935 = vst.msk [vmem:[%s906 + $0x151] sm:$0xff] %vm289, %v847
      %936 = vst.msk [vmem:[%s906 + $0x159] sm:$0xff] %vm289, %v848
      %937 = vst.msk [vmem:[%s906 + $0x169] sm:$0xff] %vm289, %v849
      %938 = vst.msk [vmem:[%s906 + $0x171] sm:$0xff] %vm289, %v850
      %v939 = vld [vmem:[%s4] sm:$0x1]
      %v941 = vlaneseq
      %v942 = vshrl.u32 %v941, 7
      %v943 = vsub.s32 0, %v942
      %v944 = vrot.slane %v939, %v943
      %v946 = vld [vmem:[#allocation2] sm:$0xff]
      %v947 = vld [vmem:[#allocation2 + $0x8] sm:$0xff]
      %v948 = vld [vmem:[#allocation2 + $0x18] sm:$0xff]
      %v949 = vld [vmem:[#allocation2 + $0x20] sm:$0xff]
      %v950 = vld [vmem:[#allocation2 + $0x30] sm:$0xff]
      %v951 = vld [vmem:[#allocation2 + $0x38] sm:$0xff]
      %v952 = vld [vmem:[#allocation2 + $0x48] sm:$0xff]
      %v953 = vld [vmem:[#allocation2 + $0x50] sm:$0xff]
      %v954 = vld [vmem:[#allocation2 + $0x60] sm:$0xff]
      %v955 = vld [vmem:[#allocation2 + $0x68] sm:$0xff]
      %v956 = vld [vmem:[#allocation2 + $0x78] sm:$0xff]
      %v957 = vld [vmem:[#allocation2 + $0x80] sm:$0xff]
      %v958 = vld [vmem:[#allocation2 + $0x90] sm:$0xff]
      %v959 = vld [vmem:[#allocation2 + $0x98] sm:$0xff]
      %v960 = vld [vmem:[#allocation2 + $0xa8] sm:$0xff]
      %v961 = vld [vmem:[#allocation2 + $0xb0] sm:$0xff]
      %v962 = vld [vmem:[#allocation2 + $0xc0] sm:$0xff]
      %v963 = vld [vmem:[#allocation2 + $0xc8] sm:$0xff]
      %v964 = vld [vmem:[#allocation2 + $0xd8] sm:$0xff]
      %v965 = vld [vmem:[#allocation2 + $0xe0] sm:$0xff]
      %v966 = vld [vmem:[#allocation2 + $0xf0] sm:$0xff]
      %v967 = vld [vmem:[#allocation2 + $0xf8] sm:$0xff]
      %v968 = vld [vmem:[#allocation2 + $0x108] sm:$0xff]
      %v969 = vld [vmem:[#allocation2 + $0x110] sm:$0xff]
      %v970 = vld [vmem:[#allocation2 + $0x120] sm:$0xff]
      %v971 = vld [vmem:[#allocation2 + $0x128] sm:$0xff]
      %v972 = vld [vmem:[#allocation2 + $0x138] sm:$0xff]
      %v973 = vld [vmem:[#allocation2 + $0x140] sm:$0xff]
      %v974 = vld [vmem:[#allocation2 + $0x150] sm:$0xff]
      %v975 = vld [vmem:[#allocation2 + $0x158] sm:$0xff]
      %v976 = vld [vmem:[#allocation2 + $0x168] sm:$0xff]
      %v977 = vld [vmem:[#allocation2 + $0x170] sm:$0xff]
      %v978 = vpack.c.bf16 %v947, %v946
      %v979 = vpack.c.bf16 %v949, %v948
      %v980 = vpack.c.bf16 %v951, %v950
      %v981 = vpack.c.bf16 %v953, %v952
      %v982 = vpack.c.bf16 %v955, %v954
      %v983 = vpack.c.bf16 %v957, %v956
      %v984 = vpack.c.bf16 %v959, %v958
      %v985 = vpack.c.bf16 %v961, %v960
      %v986 = vpack.c.bf16 %v963, %v962
      %v987 = vpack.c.bf16 %v965, %v964
      %v988 = vpack.c.bf16 %v967, %v966
      %v989 = vpack.c.bf16 %v969, %v968
      %v990 = vpack.c.bf16 %v971, %v970
      %v991 = vpack.c.bf16 %v973, %v972
      %v992 = vpack.c.bf16 %v975, %v974
      %v993 = vpack.c.bf16 %v977, %v976
      %v994 = vld [vmem:[%s3] sm:$0xf]
      %v995 = vld [vmem:[%s3 + $0x4] sm:$0xf]
      %v998 = vunpack.c.l.b16 %v994
      %v999 = vunpack.c.l.b16 %v995
      %v1000 = vpack.c.b16 %v999, %v998
      %v1003 = vsel %vm289, %v978, 0
      %v1006 = vsel %vm289, %v979, 0
      %v1009 = vsel %vm289, %v980, 0
      %v1012 = vsel %vm289, %v981, 0
      %v1015 = vsel %vm289, %v982, 0
      %v1018 = vsel %vm289, %v983, 0
      %v1021 = vsel %vm289, %v984, 0
      %v1024 = vsel %vm289, %v985, 0
      %v1027 = vsel %vm289, %v986, 0
      %v1030 = vsel %vm289, %v987, 0
      %v1033 = vsel %vm289, %v988, 0
      %v1036 = vsel %vm289, %v989, 0
      %v1039 = vsel %vm289, %v990, 0
      %v1042 = vsel %vm289, %v991, 0
      %v1045 = vsel %vm289, %v992, 0
      %v1048 = vsel %vm289, %v993, 0
      %1050 = vmatprep.subr.bf16.mxu0 0
      %1051 = vmatpush1.bf16.msra.mxu0 %v1000
      %1052 = vmatprep.subr.bf16.mxu0 0
      %1053 = vmatpush1.bf16.msra.mxu0 0
      %1054 = vmatprep.subr.bf16.mxu0 0
      %1055 = vmatpush1.bf16.msra.mxu0 0
      %1056 = vmatprep.subr.bf16.mxu0 0
      %1057 = vmatpush1.bf16.msra.mxu0 0
      %1058 = vmatprep.subr.bf16.mxu0 0
      %1059 = vmatpush1.bf16.msra.mxu0 0
      %1060 = vmatprep.subr.bf16.mxu0 0
      %1061 = vmatpush1.bf16.msra.mxu0 0
      %1062 = vmatprep.subr.bf16.mxu0 0
      %1063 = vmatpush1.bf16.msra.mxu0 0
      %1064 = vmatprep.subr.bf16.mxu0 0
      %1065 = vmatpush1.bf16.msra.mxu0 0
      %1066 = vmatprep.subr.bf16.mxu0 0
      %1067 = vmatpush1.bf16.msra.mxu0 0
      %1068 = vmatprep.subr.bf16.mxu0 0
      %1069 = vmatpush1.bf16.msra.mxu0 0
      %1070 = vmatprep.subr.bf16.mxu0 0
      %1071 = vmatpush1.bf16.msra.mxu0 0
      %1072 = vmatprep.subr.bf16.mxu0 0
      %1073 = vmatpush1.bf16.msra.mxu0 0
      %1074 = vmatprep.subr.bf16.mxu0 0
      %1075 = vmatpush1.bf16.msra.mxu0 0
      %1076 = vmatprep.subr.bf16.mxu0 0
      %1077 = vmatpush1.bf16.msra.mxu0 0
      %1078 = vmatprep.subr.bf16.mxu0 0
      %1079 = vmatpush1.bf16.msra.mxu0 0
      %1080 = vmatprep.subr.bf16.mxu0 0
      %1081 = vmatpush1.bf16.msra.mxu0 0
      %1082 = vmatprep.mubr.bf16.mxu0 0
      %1083 = vmatmul.mubr.bf16.gmra.mrb[0].mxu0 %v1003
      %v1084 = vpop.f32.mrb[0].mxu0
      %v1085 = vadd.f32 0.0, %v1084
      %v1086 = vpop.f32.mrb[0].mxu0
      %v1087 = vpop.f32.mrb[0].mxu0
      %v1088 = vadd.f32 0.0, %v1087
      %v1089 = vpop.f32.mrb[0].mxu0
      %1090 = vmatprep.mubr.bf16.mxu0 0
      %1091 = vmatmul.mubr.bf16.gmra.mrb[0].mxu0 %v1006
      %v1092 = vpop.f32.mrb[0].mxu0
      %v1093 = vadd.f32 0.0, %v1092
      %v1094 = vpop.f32.mrb[0].mxu0
      %v1095 = vpop.f32.mrb[0].mxu0
      %v1096 = vadd.f32 0.0, %v1095
      %v1097 = vpop.f32.mrb[0].mxu0
      %1098 = vmatprep.mubr.bf16.mxu0 0
      %1099 = vmatmul.mubr.bf16.gmra.mrb[0].mxu0 %v1009
      %v1100 = vpop.f32.mrb[0].mxu0
      %v1101 = vadd.f32 0.0, %v1100
      %v1102 = vpop.f32.mrb[0].mxu0
      %v1103 = vpop.f32.mrb[0].mxu0
      %v1104 = vadd.f32 0.0, %v1103
      %v1105 = vpop.f32.mrb[0].mxu0
      %1106 = vmatprep.mubr.bf16.mxu0 0
      %1107 = vmatmul.mubr.bf16.gmra.mrb[0].mxu0 %v1012
      %v1108 = vpop.f32.mrb[0].mxu0
      %v1109 = vadd.f32 0.0, %v1108
      %v1110 = vpop.f32.mrb[0].mxu0
      %v1111 = vpop.f32.mrb[0].mxu0
      %v1112 = vadd.f32 0.0, %v1111
      %v1113 = vpop.f32.mrb[0].mxu0
      %1114 = vmatprep.mubr.bf16.mxu0 0
      %1115 = vmatmul.mubr.bf16.gmra.mrb[0].mxu0 %v1015
      %v1116 = vpop.f32.mrb[0].mxu0
      %v1117 = vadd.f32 0.0, %v1116
      %v1118 = vpop.f32.mrb[0].mxu0
      %v1119 = vpop.f32.mrb[0].mxu0
      %v1120 = vadd.f32 0.0, %v1119
      %v1121 = vpop.f32.mrb[0].mxu0
      %1122 = vmatprep.mubr.bf16.mxu0 0
      %1123 = vmatmul.mubr.bf16.gmra.mrb[0].mxu0 %v1018
      %v1124 = vpop.f32.mrb[0].mxu0
      %v1125 = vadd.f32 0.0, %v1124
      %v1126 = vpop.f32.mrb[0].mxu0
      %v1127 = vpop.f32.mrb[0].mxu0
      %v1128 = vadd.f32 0.0, %v1127
      %v1129 = vpop.f32.mrb[0].mxu0
      %1130 = vmatprep.mubr.bf16.mxu0 0
      %1131 = vmatmul.mubr.bf16.gmra.mrb[0].mxu0 %v1021
      %v1132 = vpop.f32.mrb[0].mxu0
      %v1133 = vadd.f32 0.0, %v1132
      %v1134 = vpop.f32.mrb[0].mxu0
      %v1135 = vpop.f32.mrb[0].mxu0
      %v1136 = vadd.f32 0.0, %v1135
      %v1137 = vpop.f32.mrb[0].mxu0
      %1138 = vmatprep.mubr.bf16.mxu0 0
      %1139 = vmatmul.mubr.bf16.gmra.mrb[0].mxu0 %v1024
      %v1140 = vpop.f32.mrb[0].mxu0
      %v1141 = vadd.f32 0.0, %v1140
      %v1142 = vpop.f32.mrb[0].mxu0
      %v1143 = vpop.f32.mrb[0].mxu0
      %v1144 = vadd.f32 0.0, %v1143
      %v1145 = vpop.f32.mrb[0].mxu0
      %1146 = vmatprep.mubr.bf16.mxu0 0
      %1147 = vmatmul.mubr.bf16.gmra.mrb[0].mxu0 %v1027
      %v1148 = vpop.f32.mrb[0].mxu0
      %v1149 = vadd.f32 0.0, %v1148
      %v1150 = vpop.f32.mrb[0].mxu0
      %v1151 = vpop.f32.mrb[0].mxu0
      %v1152 = vadd.f32 0.0, %v1151
      %v1153 = vpop.f32.mrb[0].mxu0
      %1154 = vmatprep.mubr.bf16.mxu0 0
      %1155 = vmatmul.mubr.bf16.gmra.mrb[0].mxu0 %v1030
      %v1156 = vpop.f32.mrb[0].mxu0
      %v1157 = vadd.f32 0.0, %v1156
      %v1158 = vpop.f32.mrb[0].mxu0
      %v1159 = vpop.f32.mrb[0].mxu0
      %v1160 = vadd.f32 0.0, %v1159
      %v1161 = vpop.f32.mrb[0].mxu0
      %1162 = vmatprep.mubr.bf16.mxu0 0
      %1163 = vmatmul.mubr.bf16.gmra.mrb[0].mxu0 %v1033
      %v1164 = vpop.f32.mrb[0].mxu0
      %v1165 = vadd.f32 0.0, %v1164
      %v1166 = vpop.f32.mrb[0].mxu0
      %v1167 = vpop.f32.mrb[0].mxu0
      %v1168 = vadd.f32 0.0, %v1167
      %v1169 = vpop.f32.mrb[0].mxu0
      %1170 = vmatprep.mubr.bf16.mxu0 0
      %1171 = vmatmul.mubr.bf16.gmra.mrb[0].mxu0 %v1036
      %v1172 = vpop.f32.mrb[0].mxu0
      %v1173 = vadd.f32 0.0, %v1172
      %v1174 = vpop.f32.mrb[0].mxu0
      %v1175 = vpop.f32.mrb[0].mxu0
      %v1176 = vadd.f32 0.0, %v1175
      %v1177 = vpop.f32.mrb[0].mxu0
      %1178 = vmatprep.mubr.bf16.mxu0 0
      %1179 = vmatmul.mubr.bf16.gmra.mrb[0].mxu0 %v1039
      %v1180 = vpop.f32.mrb[0].mxu0
      %v1181 = vadd.f32 0.0, %v1180
      %v1182 = vpop.f32.mrb[0].mxu0
      %v1183 = vpop.f32.mrb[0].mxu0
      %v1184 = vadd.f32 0.0, %v1183
      %v1185 = vpop.f32.mrb[0].mxu0
      %1186 = vmatprep.mubr.bf16.mxu0 0
      %1187 = vmatmul.mubr.bf16.gmra.mrb[0].mxu0 %v1042
      %v1188 = vpop.f32.mrb[0].mxu0
      %v1189 = vadd.f32 0.0, %v1188
      %v1190 = vpop.f32.mrb[0].mxu0
      %v1191 = vpop.f32.mrb[0].mxu0
      %v1192 = vadd.f32 0.0, %v1191
      %v1193 = vpop.f32.mrb[0].mxu0
      %1194 = vmatprep.mubr.bf16.mxu0 0
      %1195 = vmatmul.mubr.bf16.gmra.mrb[0].mxu0 %v1045
      %v1196 = vpop.f32.mrb[0].mxu0
      %v1197 = vadd.f32 0.0, %v1196
      %v1198 = vpop.f32.mrb[0].mxu0
      %v1199 = vpop.f32.mrb[0].mxu0
      %v1200 = vadd.f32 0.0, %v1199
      %v1201 = vpop.f32.mrb[0].mxu0
      %1202 = vmatprep.mubr.bf16.mxu0 0
      %1203 = vmatmul.mubr.bf16.gmra.mrb[0].mxu0 %v1048
      %v1204 = vpop.f32.mrb[0].mxu0
      %v1205 = vadd.f32 0.0, %v1204
      %v1206 = vpop.f32.mrb[0].mxu0
      %v1207 = vpop.f32.mrb[0].mxu0
      %v1208 = vadd.f32 0.0, %v1207
      %v1209 = vpop.f32.mrb[0].mxu0
      %1210 = vdwg.mxu0
      %v1211 = vadd.f32 %v944, %v1085
      %v1212 = vadd.f32 %v944, %v1088
      %v1213 = vadd.f32 %v944, %v1093
      %v1214 = vadd.f32 %v944, %v1096
      %v1215 = vadd.f32 %v944, %v1101
      %v1216 = vadd.f32 %v944, %v1104
      %v1217 = vadd.f32 %v944, %v1109
      %v1218 = vadd.f32 %v944, %v1112
      %v1219 = vadd.f32 %v944, %v1117
      %v1220 = vadd.f32 %v944, %v1120
      %v1221 = vadd.f32 %v944, %v1125
      %v1222 = vadd.f32 %v944, %v1128
      %v1223 = vadd.f32 %v944, %v1133
      %v1224 = vadd.f32 %v944, %v1136
      %v1225 = vadd.f32 %v944, %v1141
      %v1226 = vadd.f32 %v944, %v1144
      %v1227 = vadd.f32 %v944, %v1149
      %v1228 = vadd.f32 %v944, %v1152
      %v1229 = vadd.f32 %v944, %v1157
      %v1230 = vadd.f32 %v944, %v1160
      %v1231 = vadd.f32 %v944, %v1165
      %v1232 = vadd.f32 %v944, %v1168
      %v1233 = vadd.f32 %v944, %v1173
      %v1234 = vadd.f32 %v944, %v1176
      %v1235 = vadd.f32 %v944, %v1181
      %v1236 = vadd.f32 %v944, %v1184
      %v1237 = vadd.f32 %v944, %v1189
      %v1238 = vadd.f32 %v944, %v1192
      %v1239 = vadd.f32 %v944, %v1197
      %v1240 = vadd.f32 %v944, %v1200
      %v1241 = vadd.f32 %v944, %v1205
      %v1242 = vadd.f32 %v944, %v1208
      %v1243 = vld [vmem:[#allocation2 + $0x1] sm:$0xff]
      %v1244 = vld [vmem:[#allocation2 + $0x9] sm:$0xff]
      %v1245 = vld [vmem:[#allocation2 + $0x19] sm:$0xff]
      %v1246 = vld [vmem:[#allocation2 + $0x21] sm:$0xff]
      %v1247 = vld [vmem:[#allocation2 + $0x31] sm:$0xff]
      %v1248 = vld [vmem:[#allocation2 + $0x39] sm:$0xff]
      %v1249 = vld [vmem:[#allocation2 + $0x49] sm:$0xff]
      %v1250 = vld [vmem:[#allocation2 + $0x51] sm:$0xff]
      %v1251 = vld [vmem:[#allocation2 + $0x61] sm:$0xff]
      %v1252 = vld [vmem:[#allocation2 + $0x69] sm:$0xff]
      %v1253 = vld [vmem:[#allocation2 + $0x79] sm:$0xff]
      %v1254 = vld [vmem:[#allocation2 + $0x81] sm:$0xff]
      %v1255 = vld [vmem:[#allocation2 + $0x91] sm:$0xff]
      %v1256 = vld [vmem:[#allocation2 + $0x99] sm:$0xff]
      %v1257 = vld [vmem:[#allocation2 + $0xa9] sm:$0xff]
      %v1258 = vld [vmem:[#allocation2 + $0xb1] sm:$0xff]
      %v1259 = vld [vmem:[#allocation2 + $0xc1] sm:$0xff]
      %v1260 = vld [vmem:[#allocation2 + $0xc9] sm:$0xff]
      %v1261 = vld [vmem:[#allocation2 + $0xd9] sm:$0xff]
      %v1262 = vld [vmem:[#allocation2 + $0xe1] sm:$0xff]
      %v1263 = vld [vmem:[#allocation2 + $0xf1] sm:$0xff]
      %v1264 = vld [vmem:[#allocation2 + $0xf9] sm:$0xff]
      %v1265 = vld [vmem:[#allocation2 + $0x109] sm:$0xff]
      %v1266 = vld [vmem:[#allocation2 + $0x111] sm:$0xff]
      %v1267 = vld [vmem:[#allocation2 + $0x121] sm:$0xff]
      %v1268 = vld [vmem:[#allocation2 + $0x129] sm:$0xff]
      %v1269 = vld [vmem:[#allocation2 + $0x139] sm:$0xff]
      %v1270 = vld [vmem:[#allocation2 + $0x141] sm:$0xff]
      %v1271 = vld [vmem:[#allocation2 + $0x151] sm:$0xff]
      %v1272 = vld [vmem:[#allocation2 + $0x159] sm:$0xff]
      %v1273 = vld [vmem:[#allocation2 + $0x169] sm:$0xff]
      %v1274 = vld [vmem:[#allocation2 + $0x171] sm:$0xff]
      %v1275 = vpack.c.bf16 %v1244, %v1243
      %v1276 = vpack.c.bf16 %v1246, %v1245
      %v1277 = vpack.c.bf16 %v1248, %v1247
      %v1278 = vpack.c.bf16 %v1250, %v1249
      %v1279 = vpack.c.bf16 %v1252, %v1251
      %v1280 = vpack.c.bf16 %v1254, %v1253
      %v1281 = vpack.c.bf16 %v1256, %v1255
      %v1282 = vpack.c.bf16 %v1258, %v1257
      %v1283 = vpack.c.bf16 %v1260, %v1259
      %v1284 = vpack.c.bf16 %v1262, %v1261
      %v1285 = vpack.c.bf16 %v1264, %v1263
      %v1286 = vpack.c.bf16 %v1266, %v1265
      %v1287 = vpack.c.bf16 %v1268, %v1267
      %v1288 = vpack.c.bf16 %v1270, %v1269
      %v1289 = vpack.c.bf16 %v1272, %v1271
      %v1290 = vpack.c.bf16 %v1274, %v1273
      %s1291 = scalar_lea.vmem %s3, 8
      %v1292 = vld [vmem:[%s1291] sm:$0xf]
      %v1293 = vld [vmem:[%s1291 + $0x4] sm:$0xf]
      %v1296 = vunpack.c.l.b16 %v1292
      %v1297 = vunpack.c.l.b16 %v1293
      %v1298 = vpack.c.b16 %v1297, %v1296
      %v1301 = vsel %vm289, %v1275, 0
      %v1304 = vsel %vm289, %v1276, 0
      %v1307 = vsel %vm289, %v1277, 0
      %v1310 = vsel %vm289, %v1278, 0
      %v1313 = vsel %vm289, %v1279, 0
      %v1316 = vsel %vm289, %v1280, 0
      %v1319 = vsel %vm289, %v1281, 0
      %v1322 = vsel %vm289, %v1282, 0
      %v1325 = vsel %vm289, %v1283, 0
      %v1328 = vsel %vm289, %v1284, 0
      %v1331 = vsel %vm289, %v1285, 0
      %v1334 = vsel %vm289, %v1286, 0
      %v1337 = vsel %vm289, %v1287, 0
      %v1340 = vsel %vm289, %v1288, 0
      %v1343 = vsel %vm289, %v1289, 0
      %v1346 = vsel %vm289, %v1290, 0
      %1348 = vmatprep.subr.bf16.mxu0 0
      %1349 = vmatpush1.bf16.msra.mxu0 %v1298
      %1350 = vmatprep.subr.bf16.mxu0 0
      %1351 = vmatpush1.bf16.msra.mxu0 0
      %1352 = vmatprep.subr.bf16.mxu0 0
      %1353 = vmatpush1.bf16.msra.mxu0 0
      %1354 = vmatprep.subr.bf16.mxu0 0
      %1355 = vmatpush1.bf16.msra.mxu0 0
      %1356 = vmatprep.subr.bf16.mxu0 0
      %1357 = vmatpush1.bf16.msra.mxu0 0
      %1358 = vmatprep.subr.bf16.mxu0 0
      %1359 = vmatpush1.bf16.msra.mxu0 0
      %1360 = vmatprep.subr.bf16.mxu0 0
      %1361 = vmatpush1.bf16.msra.mxu0 0
      %1362 = vmatprep.subr.bf16.mxu0 0
      %1363 = vmatpush1.bf16.msra.mxu0 0
      %1364 = vmatprep.subr.bf16.mxu0 0
      %1365 = vmatpush1.bf16.msra.mxu0 0
      %1366 = vmatprep.subr.bf16.mxu0 0
      %1367 = vmatpush1.bf16.msra.mxu0 0
      %1368 = vmatprep.subr.bf16.mxu0 0
      %1369 = vmatpush1.bf16.msra.mxu0 0
      %1370 = vmatprep.subr.bf16.mxu0 0
      %1371 = vmatpush1.bf16.msra.mxu0 0
      %1372 = vmatprep.subr.bf16.mxu0 0
      %1373 = vmatpush1.bf16.msra.mxu0 0
      %1374 = vmatprep.subr.bf16.mxu0 0
      %1375 = vmatpush1.bf16.msra.mxu0 0
      %1376 = vmatprep.subr.bf16.mxu0 0
      %1377 = vmatpush1.bf16.msra.mxu0 0
      %1378 = vmatprep.subr.bf16.mxu0 0
      %1379 = vmatpush1.bf16.msra.mxu0 0
      %1380 = vmatprep.mubr.bf16.mxu0 0
      %1381 = vmatmul.mubr.bf16.gmra.mrb[0].mxu0 %v1301
      %v1382 = vpop.f32.mrb[0].mxu0
      %v1383 = vadd.f32 0.0, %v1382
      %v1384 = vpop.f32.mrb[0].mxu0
      %v1385 = vpop.f32.mrb[0].mxu0
      %v1386 = vadd.f32 0.0, %v1385
      %v1387 = vpop.f32.mrb[0].mxu0
      %1388 = vmatprep.mubr.bf16.mxu0 0
      %1389 = vmatmul.mubr.bf16.gmra.mrb[0].mxu0 %v1304
      %v1390 = vpop.f32.mrb[0].mxu0
      %v1391 = vadd.f32 0.0, %v1390
      %v1392 = vpop.f32.mrb[0].mxu0
      %v1393 = vpop.f32.mrb[0].mxu0
      %v1394 = vadd.f32 0.0, %v1393
      %v1395 = vpop.f32.mrb[0].mxu0
      %1396 = vmatprep.mubr.bf16.mxu0 0
      %1397 = vmatmul.mubr.bf16.gmra.mrb[0].mxu0 %v1307
      %v1398 = vpop.f32.mrb[0].mxu0
      %v1399 = vadd.f32 0.0, %v1398
      %v1400 = vpop.f32.mrb[0].mxu0
      %v1401 = vpop.f32.mrb[0].mxu0
      %v1402 = vadd.f32 0.0, %v1401
      %v1403 = vpop.f32.mrb[0].mxu0
      %1404 = vmatprep.mubr.bf16.mxu0 0
      %1405 = vmatmul.mubr.bf16.gmra.mrb[0].mxu0 %v1310
      %v1406 = vpop.f32.mrb[0].mxu0
      %v1407 = vadd.f32 0.0, %v1406
      %v1408 = vpop.f32.mrb[0].mxu0
      %v1409 = vpop.f32.mrb[0].mxu0
      %v1410 = vadd.f32 0.0, %v1409
      %v1411 = vpop.f32.mrb[0].mxu0
      %1412 = vmatprep.mubr.bf16.mxu0 0
      %1413 = vmatmul.mubr.bf16.gmra.mrb[0].mxu0 %v1313
      %v1414 = vpop.f32.mrb[0].mxu0
      %v1415 = vadd.f32 0.0, %v1414
      %v1416 = vpop.f32.mrb[0].mxu0
      %v1417 = vpop.f32.mrb[0].mxu0
      %v1418 = vadd.f32 0.0, %v1417
      %v1419 = vpop.f32.mrb[0].mxu0
      %1420 = vmatprep.mubr.bf16.mxu0 0
      %1421 = vmatmul.mubr.bf16.gmra.mrb[0].mxu0 %v1316
      %v1422 = vpop.f32.mrb[0].mxu0
      %v1423 = vadd.f32 0.0, %v1422
      %v1424 = vpop.f32.mrb[0].mxu0
      %v1425 = vpop.f32.mrb[0].mxu0
      %v1426 = vadd.f32 0.0, %v1425
      %v1427 = vpop.f32.mrb[0].mxu0
      %1428 = vmatprep.mubr.bf16.mxu0 0
      %1429 = vmatmul.mubr.bf16.gmra.mrb[0].mxu0 %v1319
      %v1430 = vpop.f32.mrb[0].mxu0
      %v1431 = vadd.f32 0.0, %v1430
      %v1432 = vpop.f32.mrb[0].mxu0
      %v1433 = vpop.f32.mrb[0].mxu0
      %v1434 = vadd.f32 0.0, %v1433
      %v1435 = vpop.f32.mrb[0].mxu0
      %1436 = vmatprep.mubr.bf16.mxu0 0
      %1437 = vmatmul.mubr.bf16.gmra.mrb[0].mxu0 %v1322
      %v1438 = vpop.f32.mrb[0].mxu0
      %v1439 = vadd.f32 0.0, %v1438
      %v1440 = vpop.f32.mrb[0].mxu0
      %v1441 = vpop.f32.mrb[0].mxu0
      %v1442 = vadd.f32 0.0, %v1441
      %v1443 = vpop.f32.mrb[0].mxu0
      %1444 = vmatprep.mubr.bf16.mxu0 0
      %1445 = vmatmul.mubr.bf16.gmra.mrb[0].mxu0 %v1325
      %v1446 = vpop.f32.mrb[0].mxu0
      %v1447 = vadd.f32 0.0, %v1446
      %v1448 = vpop.f32.mrb[0].mxu0
      %v1449 = vpop.f32.mrb[0].mxu0
      %v1450 = vadd.f32 0.0, %v1449
      %v1451 = vpop.f32.mrb[0].mxu0
      %1452 = vmatprep.mubr.bf16.mxu0 0
      %1453 = vmatmul.mubr.bf16.gmra.mrb[0].mxu0 %v1328
      %v1454 = vpop.f32.mrb[0].mxu0
      %v1455 = vadd.f32 0.0, %v1454
      %v1456 = vpop.f32.mrb[0].mxu0
      %v1457 = vpop.f32.mrb[0].mxu0
      %v1458 = vadd.f32 0.0, %v1457
      %v1459 = vpop.f32.mrb[0].mxu0
      %1460 = vmatprep.mubr.bf16.mxu0 0
      %1461 = vmatmul.mubr.bf16.gmra.mrb[0].mxu0 %v1331
      %v1462 = vpop.f32.mrb[0].mxu0
      %v1463 = vadd.f32 0.0, %v1462
      %v1464 = vpop.f32.mrb[0].mxu0
      %v1465 = vpop.f32.mrb[0].mxu0
      %v1466 = vadd.f32 0.0, %v1465
      %v1467 = vpop.f32.mrb[0].mxu0
      %1468 = vmatprep.mubr.bf16.mxu0 0
      %1469 = vmatmul.mubr.bf16.gmra.mrb[0].mxu0 %v1334
      %v1470 = vpop.f32.mrb[0].mxu0
      %v1471 = vadd.f32 0.0, %v1470
      %v1472 = vpop.f32.mrb[0].mxu0
      %v1473 = vpop.f32.mrb[0].mxu0
      %v1474 = vadd.f32 0.0, %v1473
      %v1475 = vpop.f32.mrb[0].mxu0
      %1476 = vmatprep.mubr.bf16.mxu0 0
      %1477 = vmatmul.mubr.bf16.gmra.mrb[0].mxu0 %v1337
      %v1478 = vpop.f32.mrb[0].mxu0
      %v1479 = vadd.f32 0.0, %v1478
      %v1480 = vpop.f32.mrb[0].mxu0
      %v1481 = vpop.f32.mrb[0].mxu0
      %v1482 = vadd.f32 0.0, %v1481
      %v1483 = vpop.f32.mrb[0].mxu0
      %1484 = vmatprep.mubr.bf16.mxu0 0
      %1485 = vmatmul.mubr.bf16.gmra.mrb[0].mxu0 %v1340
      %v1486 = vpop.f32.mrb[0].mxu0
      %v1487 = vadd.f32 0.0, %v1486
      %v1488 = vpop.f32.mrb[0].mxu0
      %v1489 = vpop.f32.mrb[0].mxu0
      %v1490 = vadd.f32 0.0, %v1489
      %v1491 = vpop.f32.mrb[0].mxu0
      %1492 = vmatprep.mubr.bf16.mxu0 0
      %1493 = vmatmul.mubr.bf16.gmra.mrb[0].mxu0 %v1343
      %v1494 = vpop.f32.mrb[0].mxu0
      %v1495 = vadd.f32 0.0, %v1494
      %v1496 = vpop.f32.mrb[0].mxu0
      %v1497 = vpop.f32.mrb[0].mxu0
      %v1498 = vadd.f32 0.0, %v1497
      %v1499 = vpop.f32.mrb[0].mxu0
      %1500 = vmatprep.mubr.bf16.mxu0 0
      %1501 = vmatmul.mubr.bf16.gmra.mrb[0].mxu0 %v1346
      %v1502 = vpop.f32.mrb[0].mxu0
      %v1503 = vadd.f32 0.0, %v1502
      %v1504 = vpop.f32.mrb[0].mxu0
      %v1505 = vpop.f32.mrb[0].mxu0
      %v1506 = vadd.f32 0.0, %v1505
      %v1507 = vpop.f32.mrb[0].mxu0
      %1508 = vdwg.mxu0
      %v1509 = vadd.f32 %v1211, %v1383
      %v1510 = vadd.f32 %v1212, %v1386
      %v1511 = vadd.f32 %v1213, %v1391
      %v1512 = vadd.f32 %v1214, %v1394
      %v1513 = vadd.f32 %v1215, %v1399
      %v1514 = vadd.f32 %v1216, %v1402
      %v1515 = vadd.f32 %v1217, %v1407
      %v1516 = vadd.f32 %v1218, %v1410
      %v1517 = vadd.f32 %v1219, %v1415
      %v1518 = vadd.f32 %v1220, %v1418
      %v1519 = vadd.f32 %v1221, %v1423
      %v1520 = vadd.f32 %v1222, %v1426
      %v1521 = vadd.f32 %v1223, %v1431
      %v1522 = vadd.f32 %v1224, %v1434
      %v1523 = vadd.f32 %v1225, %v1439
      %v1524 = vadd.f32 %v1226, %v1442
      %v1525 = vadd.f32 %v1227, %v1447
      %v1526 = vadd.f32 %v1228, %v1450
      %v1527 = vadd.f32 %v1229, %v1455
      %v1528 = vadd.f32 %v1230, %v1458
      %v1529 = vadd.f32 %v1231, %v1463
      %v1530 = vadd.f32 %v1232, %v1466
      %v1531 = vadd.f32 %v1233, %v1471
      %v1532 = vadd.f32 %v1234, %v1474
      %v1533 = vadd.f32 %v1235, %v1479
      %v1534 = vadd.f32 %v1236, %v1482
      %v1535 = vadd.f32 %v1237, %v1487
      %v1536 = vadd.f32 %v1238, %v1490
      %v1537 = vadd.f32 %v1239, %v1495
      %v1538 = vadd.f32 %v1240, %v1498
      %v1539 = vadd.f32 %v1241, %v1503
      %v1540 = vadd.f32 %v1242, %v1506
      %v1541 = vld [vmem:[#allocation2 + $0x2] sm:$0xff]
      %v1542 = vld [vmem:[#allocation2 + $0xa] sm:$0xff]
      %v1543 = vld [vmem:[#allocation2 + $0x1a] sm:$0xff]
      %v1544 = vld [vmem:[#allocation2 + $0x22] sm:$0xff]
      %v1545 = vld [vmem:[#allocation2 + $0x32] sm:$0xff]
      %v1546 = vld [vmem:[#allocation2 + $0x3a] sm:$0xff]
      %v1547 = vld [vmem:[#allocation2 + $0x4a] sm:$0xff]
      %v1548 = vld [vmem:[#allocation2 + $0x52] sm:$0xff]
      %v1549 = vld [vmem:[#allocation2 + $0x62] sm:$0xff]
      %v1550 = vld [vmem:[#allocation2 + $0x6a] sm:$0xff]
      %v1551 = vld [vmem:[#allocation2 + $0x7a] sm:$0xff]
      %v1552 = vld [vmem:[#allocation2 + $0x82] sm:$0xff]
      %v1553 = vld [vmem:[#allocation2 + $0x92] sm:$0xff]
      %v1554 = vld [vmem:[#allocation2 + $0x9a] sm:$0xff]
      %v1555 = vld [vmem:[#allocation2 + $0xaa] sm:$0xff]
      %v1556 = vld [vmem:[#allocation2 + $0xb2] sm:$0xff]
      %v1557 = vld [vmem:[#allocation2 + $0xc2] sm:$0xff]
      %v1558 = vld [vmem:[#allocation2 + $0xca] sm:$0xff]
      %v1559 = vld [vmem:[#allocation2 + $0xda] sm:$0xff]
      %v1560 = vld [vmem:[#allocation2 + $0xe2] sm:$0xff]
      %v1561 = vld [vmem:[#allocation2 + $0xf2] sm:$0xff]
      %v1562 = vld [vmem:[#allocation2 + $0xfa] sm:$0xff]
      %v1563 = vld [vmem:[#allocation2 + $0x10a] sm:$0xff]
      %v1564 = vld [vmem:[#allocation2 + $0x112] sm:$0xff]
      %v1565 = vld [vmem:[#allocation2 + $0x122] sm:$0xff]
      %v1566 = vld [vmem:[#allocation2 + $0x12a] sm:$0xff]
      %v1567 = vld [vmem:[#allocation2 + $0x13a] sm:$0xff]
      %v1568 = vld [vmem:[#allocation2 + $0x142] sm:$0xff]
      %v1569 = vld [vmem:[#allocation2 + $0x152] sm:$0xff]
      %v1570 = vld [vmem:[#allocation2 + $0x15a] sm:$0xff]
      %v1571 = vld [vmem:[#allocation2 + $0x16a] sm:$0xff]
      %v1572 = vld [vmem:[#allocation2 + $0x172] sm:$0xff]
      %v1573 = vpack.c.bf16 %v1542, %v1541
      %v1574 = vpack.c.bf16 %v1544, %v1543
      %v1575 = vpack.c.bf16 %v1546, %v1545
      %v1576 = vpack.c.bf16 %v1548, %v1547
      %v1577 = vpack.c.bf16 %v1550, %v1549
      %v1578 = vpack.c.bf16 %v1552, %v1551
      %v1579 = vpack.c.bf16 %v1554, %v1553
      %v1580 = vpack.c.bf16 %v1556, %v1555
      %v1581 = vpack.c.bf16 %v1558, %v1557
      %v1582 = vpack.c.bf16 %v1560, %v1559
      %v1583 = vpack.c.bf16 %v1562, %v1561
      %v1584 = vpack.c.bf16 %v1564, %v1563
      %v1585 = vpack.c.bf16 %v1566, %v1565
      %v1586 = vpack.c.bf16 %v1568, %v1567
      %v1587 = vpack.c.bf16 %v1570, %v1569
      %v1588 = vpack.c.bf16 %v1572, %v1571
      %s1589 = scalar_lea.vmem %s3, 16
      %v1590 = vld [vmem:[%s1589] sm:$0xf]
      %v1591 = vld [vmem:[%s1589 + $0x4] sm:$0xf]
      %v1594 = vunpack.c.l.b16 %v1590
      %v1595 = vunpack.c.l.b16 %v1591
      %v1596 = vpack.c.b16 %v1595, %v1594
      %v1599 = vsel %vm289, %v1573, 0
      %v1602 = vsel %vm289, %v1574, 0
      %v1605 = vsel %vm289, %v1575, 0
      %v1608 = vsel %vm289, %v1576, 0
      %v1611 = vsel %vm289, %v1577, 0
      %v1614 = vsel %vm289, %v1578, 0
      %v1617 = vsel %vm289, %v1579, 0
      %v1620 = vsel %vm289, %v1580, 0
      %v1623 = vsel %vm289, %v1581, 0
      %v1626 = vsel %vm289, %v1582, 0
      %v1629 = vsel %vm289, %v1583, 0
      %v1632 = vsel %vm289, %v1584, 0
      %v1635 = vsel %vm289, %v1585, 0
      %v1638 = vsel %vm289, %v1586, 0
      %v1641 = vsel %vm289, %v1587, 0
      %v1644 = vsel %vm289, %v1588, 0
      %1646 = vmatprep.subr.bf16.mxu0 0
      %1647 = vmatpush1.bf16.msra.mxu0 %v1596
      %1648 = vmatprep.subr.bf16.mxu0 0
      %1649 = vmatpush1.bf16.msra.mxu0 0
      %1650 = vmatprep.subr.bf16.mxu0 0
      %1651 = vmatpush1.bf16.msra.mxu0 0
      %1652 = vmatprep.subr.bf16.mxu0 0
      %1653 = vmatpush1.bf16.msra.mxu0 0
      %1654 = vmatprep.subr.bf16.mxu0 0
      %1655 = vmatpush1.bf16.msra.mxu0 0
      %1656 = vmatprep.subr.bf16.mxu0 0
      %1657 = vmatpush1.bf16.msra.mxu0 0
      %1658 = vmatprep.subr.bf16.mxu0 0
      %1659 = vmatpush1.bf16.msra.mxu0 0
      %1660 = vmatprep.subr.bf16.mxu0 0
      %1661 = vmatpush1.bf16.msra.mxu0 0
      %1662 = vmatprep.subr.bf16.mxu0 0
      %1663 = vmatpush1.bf16.msra.mxu0 0
      %1664 = vmatprep.subr.bf16.mxu0 0
      %1665 = vmatpush1.bf16.msra.mxu0 0
      %1666 = vmatprep.subr.bf16.mxu0 0
      %1667 = vmatpush1.bf16.msra.mxu0 0
      %1668 = vmatprep.subr.bf16.mxu0 0
      %1669 = vmatpush1.bf16.msra.mxu0 0
      %1670 = vmatprep.subr.bf16.mxu0 0
      %1671 = vmatpush1.bf16.msra.mxu0 0
      %1672 = vmatprep.subr.bf16.mxu0 0
      %1673 = vmatpush1.bf16.msra.mxu0 0
      %1674 = vmatprep.subr.bf16.mxu0 0
      %1675 = vmatpush1.bf16.msra.mxu0 0
      %1676 = vmatprep.subr.bf16.mxu0 0
      %1677 = vmatpush1.bf16.msra.mxu0 0
      %1678 = vmatprep.mubr.bf16.mxu0 0
      %1679 = vmatmul.mubr.bf16.gmra.mrb[0].mxu0 %v1599
      %v1680 = vpop.f32.mrb[0].mxu0
      %v1681 = vadd.f32 0.0, %v1680
      %v1682 = vpop.f32.mrb[0].mxu0
      %v1683 = vpop.f32.mrb[0].mxu0
      %v1684 = vadd.f32 0.0, %v1683
      %v1685 = vpop.f32.mrb[0].mxu0
      %1686 = vmatprep.mubr.bf16.mxu0 0
      %1687 = vmatmul.mubr.bf16.gmra.mrb[0].mxu0 %v1602
      %v1688 = vpop.f32.mrb[0].mxu0
      %v1689 = vadd.f32 0.0, %v1688
      %v1690 = vpop.f32.mrb[0].mxu0
      %v1691 = vpop.f32.mrb[0].mxu0
      %v1692 = vadd.f32 0.0, %v1691
      %v1693 = vpop.f32.mrb[0].mxu0
      %1694 = vmatprep.mubr.bf16.mxu0 0
      %1695 = vmatmul.mubr.bf16.gmra.mrb[0].mxu0 %v1605
      %v1696 = vpop.f32.mrb[0].mxu0
      %v1697 = vadd.f32 0.0, %v1696
      %v1698 = vpop.f32.mrb[0].mxu0
      %v1699 = vpop.f32.mrb[0].mxu0
      %v1700 = vadd.f32 0.0, %v1699
      %v1701 = vpop.f32.mrb[0].mxu0
      %1702 = vmatprep.mubr.bf16.mxu0 0
      %1703 = vmatmul.mubr.bf16.gmra.mrb[0].mxu0 %v1608
      %v1704 = vpop.f32.mrb[0].mxu0
      %v1705 = vadd.f32 0.0, %v1704
      %v1706 = vpop.f32.mrb[0].mxu0
      %v1707 = vpop.f32.mrb[0].mxu0
      %v1708 = vadd.f32 0.0, %v1707
      %v1709 = vpop.f32.mrb[0].mxu0
      %1710 = vmatprep.mubr.bf16.mxu0 0
      %1711 = vmatmul.mubr.bf16.gmra.mrb[0].mxu0 %v1611
      %v1712 = vpop.f32.mrb[0].mxu0
      %v1713 = vadd.f32 0.0, %v1712
      %v1714 = vpop.f32.mrb[0].mxu0
      %v1715 = vpop.f32.mrb[0].mxu0
      %v1716 = vadd.f32 0.0, %v1715
      %v1717 = vpop.f32.mrb[0].mxu0
      %1718 = vmatprep.mubr.bf16.mxu0 0
      %1719 = vmatmul.mubr.bf16.gmra.mrb[0].mxu0 %v1614
      %v1720 = vpop.f32.mrb[0].mxu0
      %v1721 = vadd.f32 0.0, %v1720
      %v1722 = vpop.f32.mrb[0].mxu0
      %v1723 = vpop.f32.mrb[0].mxu0
      %v1724 = vadd.f32 0.0, %v1723
      %v1725 = vpop.f32.mrb[0].mxu0
      %1726 = vmatprep.mubr.bf16.mxu0 0
      %1727 = vmatmul.mubr.bf16.gmra.mrb[0].mxu0 %v1617
      %v1728 = vpop.f32.mrb[0].mxu0
      %v1729 = vadd.f32 0.0, %v1728
      %v1730 = vpop.f32.mrb[0].mxu0
      %v1731 = vpop.f32.mrb[0].mxu0
      %v1732 = vadd.f32 0.0, %v1731
      %v1733 = vpop.f32.mrb[0].mxu0
      %1734 = vmatprep.mubr.bf16.mxu0 0
      %1735 = vmatmul.mubr.bf16.gmra.mrb[0].mxu0 %v1620
      %v1736 = vpop.f32.mrb[0].mxu0
      %v1737 = vadd.f32 0.0, %v1736
      %v1738 = vpop.f32.mrb[0].mxu0
      %v1739 = vpop.f32.mrb[0].mxu0
      %v1740 = vadd.f32 0.0, %v1739
      %v1741 = vpop.f32.mrb[0].mxu0
      %1742 = vmatprep.mubr.bf16.mxu0 0
      %1743 = vmatmul.mubr.bf16.gmra.mrb[0].mxu0 %v1623
      %v1744 = vpop.f32.mrb[0].mxu0
      %v1745 = vadd.f32 0.0, %v1744
      %v1746 = vpop.f32.mrb[0].mxu0
      %v1747 = vpop.f32.mrb[0].mxu0
      %v1748 = vadd.f32 0.0, %v1747
      %v1749 = vpop.f32.mrb[0].mxu0
      %1750 = vmatprep.mubr.bf16.mxu0 0
      %1751 = vmatmul.mubr.bf16.gmra.mrb[0].mxu0 %v1626
      %v1752 = vpop.f32.mrb[0].mxu0
      %v1753 = vadd.f32 0.0, %v1752
      %v1754 = vpop.f32.mrb[0].mxu0
      %v1755 = vpop.f32.mrb[0].mxu0
      %v1756 = vadd.f32 0.0, %v1755
      %v1757 = vpop.f32.mrb[0].mxu0
      %1758 = vmatprep.mubr.bf16.mxu0 0
      %1759 = vmatmul.mubr.bf16.gmra.mrb[0].mxu0 %v1629
      %v1760 = vpop.f32.mrb[0].mxu0
      %v1761 = vadd.f32 0.0, %v1760
      %v1762 = vpop.f32.mrb[0].mxu0
      %v1763 = vpop.f32.mrb[0].mxu0
      %v1764 = vadd.f32 0.0, %v1763
      %v1765 = vpop.f32.mrb[0].mxu0
      %1766 = vmatprep.mubr.bf16.mxu0 0
      %1767 = vmatmul.mubr.bf16.gmra.mrb[0].mxu0 %v1632
      %v1768 = vpop.f32.mrb[0].mxu0
      %v1769 = vadd.f32 0.0, %v1768
      %v1770 = vpop.f32.mrb[0].mxu0
      %v1771 = vpop.f32.mrb[0].mxu0
      %v1772 = vadd.f32 0.0, %v1771
      %v1773 = vpop.f32.mrb[0].mxu0
      %1774 = vmatprep.mubr.bf16.mxu0 0
      %1775 = vmatmul.mubr.bf16.gmra.mrb[0].mxu0 %v1635
      %v1776 = vpop.f32.mrb[0].mxu0
      %v1777 = vadd.f32 0.0, %v1776
      %v1778 = vpop.f32.mrb[0].mxu0
      %v1779 = vpop.f32.mrb[0].mxu0
      %v1780 = vadd.f32 0.0, %v1779
      %v1781 = vpop.f32.mrb[0].mxu0
      %1782 = vmatprep.mubr.bf16.mxu0 0
      %1783 = vmatmul.mubr.bf16.gmra.mrb[0].mxu0 %v1638
      %v1784 = vpop.f32.mrb[0].mxu0
      %v1785 = vadd.f32 0.0, %v1784
      %v1786 = vpop.f32.mrb[0].mxu0
      %v1787 = vpop.f32.mrb[0].mxu0
      %v1788 = vadd.f32 0.0, %v1787
      %v1789 = vpop.f32.mrb[0].mxu0
      %1790 = vmatprep.mubr.bf16.mxu0 0
      %1791 = vmatmul.mubr.bf16.gmra.mrb[0].mxu0 %v1641
      %v1792 = vpop.f32.mrb[0].mxu0
      %v1793 = vadd.f32 0.0, %v1792
      %v1794 = vpop.f32.mrb[0].mxu0
      %v1795 = vpop.f32.mrb[0].mxu0
      %v1796 = vadd.f32 0.0, %v1795
      %v1797 = vpop.f32.mrb[0].mxu0
      %1798 = vmatprep.mubr.bf16.mxu0 0
      %1799 = vmatmul.mubr.bf16.gmra.mrb[0].mxu0 %v1644
      %v1800 = vpop.f32.mrb[0].mxu0
      %v1801 = vadd.f32 0.0, %v1800
      %v1802 = vpop.f32.mrb[0].mxu0
      %v1803 = vpop.f32.mrb[0].mxu0
      %v1804 = vadd.f32 0.0, %v1803
      %v1805 = vpop.f32.mrb[0].mxu0
      %1806 = vdwg.mxu0
      %v1807 = vadd.f32 %v1509, %v1681
      %v1808 = vadd.f32 %v1510, %v1684
      %v1809 = vadd.f32 %v1511, %v1689
      %v1810 = vadd.f32 %v1512, %v1692
      %v1811 = vadd.f32 %v1513, %v1697
      %v1812 = vadd.f32 %v1514, %v1700
      %v1813 = vadd.f32 %v1515, %v1705
      %v1814 = vadd.f32 %v1516, %v1708
      %v1815 = vadd.f32 %v1517, %v1713
      %v1816 = vadd.f32 %v1518, %v1716
      %v1817 = vadd.f32 %v1519, %v1721
      %v1818 = vadd.f32 %v1520, %v1724
      %v1819 = vadd.f32 %v1521, %v1729
      %v1820 = vadd.f32 %v1522, %v1732
      %v1821 = vadd.f32 %v1523, %v1737
      %v1822 = vadd.f32 %v1524, %v1740
      %v1823 = vadd.f32 %v1525, %v1745
      %v1824 = vadd.f32 %v1526, %v1748
      %v1825 = vadd.f32 %v1527, %v1753
      %v1826 = vadd.f32 %v1528, %v1756
      %v1827 = vadd.f32 %v1529, %v1761
      %v1828 = vadd.f32 %v1530, %v1764
      %v1829 = vadd.f32 %v1531, %v1769
      %v1830 = vadd.f32 %v1532, %v1772
      %v1831 = vadd.f32 %v1533, %v1777
      %v1832 = vadd.f32 %v1534, %v1780
      %v1833 = vadd.f32 %v1535, %v1785
      %v1834 = vadd.f32 %v1536, %v1788
      %v1835 = vadd.f32 %v1537, %v1793
      %v1836 = vadd.f32 %v1538, %v1796
      %v1837 = vadd.f32 %v1539, %v1801
      %v1838 = vadd.f32 %v1540, %v1804
      %v1839 = vld [vmem:[%s906] sm:$0xff]
      %v1840 = vld [vmem:[%s906 + $0x8] sm:$0xff]
      %v1841 = vld [vmem:[%s906 + $0x18] sm:$0xff]
      %v1842 = vld [vmem:[%s906 + $0x20] sm:$0xff]
      %v1843 = vld [vmem:[%s906 + $0x30] sm:$0xff]
      %v1844 = vld [vmem:[%s906 + $0x38] sm:$0xff]
      %v1845 = vld [vmem:[%s906 + $0x48] sm:$0xff]
      %v1846 = vld [vmem:[%s906 + $0x50] sm:$0xff]
      %v1847 = vld [vmem:[%s906 + $0x60] sm:$0xff]
      %v1848 = vld [vmem:[%s906 + $0x68] sm:$0xff]
      %v1849 = vld [vmem:[%s906 + $0x78] sm:$0xff]
      %v1850 = vld [vmem:[%s906 + $0x80] sm:$0xff]
      %v1851 = vld [vmem:[%s906 + $0x90] sm:$0xff]
      %v1852 = vld [vmem:[%s906 + $0x98] sm:$0xff]
      %v1853 = vld [vmem:[%s906 + $0xa8] sm:$0xff]
      %v1854 = vld [vmem:[%s906 + $0xb0] sm:$0xff]
      %v1855 = vld [vmem:[%s906 + $0xc0] sm:$0xff]
      %v1856 = vld [vmem:[%s906 + $0xc8] sm:$0xff]
      %v1857 = vld [vmem:[%s906 + $0xd8] sm:$0xff]
      %v1858 = vld [vmem:[%s906 + $0xe0] sm:$0xff]
      %v1859 = vld [vmem:[%s906 + $0xf0] sm:$0xff]
      %v1860 = vld [vmem:[%s906 + $0xf8] sm:$0xff]
      %v1861 = vld [vmem:[%s906 + $0x108] sm:$0xff]
      %v1862 = vld [vmem:[%s906 + $0x110] sm:$0xff]
      %v1863 = vld [vmem:[%s906 + $0x120] sm:$0xff]
      %v1864 = vld [vmem:[%s906 + $0x128] sm:$0xff]
      %v1865 = vld [vmem:[%s906 + $0x138] sm:$0xff]
      %v1866 = vld [vmem:[%s906 + $0x140] sm:$0xff]
      %v1867 = vld [vmem:[%s906 + $0x150] sm:$0xff]
      %v1868 = vld [vmem:[%s906 + $0x158] sm:$0xff]
      %v1869 = vld [vmem:[%s906 + $0x168] sm:$0xff]
      %v1870 = vld [vmem:[%s906 + $0x170] sm:$0xff]
      %v1871 = vpack.c.bf16 %v1840, %v1839
      %v1872 = vpack.c.bf16 %v1842, %v1841
      %v1873 = vpack.c.bf16 %v1844, %v1843
      %v1874 = vpack.c.bf16 %v1846, %v1845
      %v1875 = vpack.c.bf16 %v1848, %v1847
      %v1876 = vpack.c.bf16 %v1850, %v1849
      %v1877 = vpack.c.bf16 %v1852, %v1851
      %v1878 = vpack.c.bf16 %v1854, %v1853
      %v1879 = vpack.c.bf16 %v1856, %v1855
      %v1880 = vpack.c.bf16 %v1858, %v1857
      %v1881 = vpack.c.bf16 %v1860, %v1859
      %v1882 = vpack.c.bf16 %v1862, %v1861
      %v1883 = vpack.c.bf16 %v1864, %v1863
      %v1884 = vpack.c.bf16 %v1866, %v1865
      %v1885 = vpack.c.bf16 %v1868, %v1867
      %v1886 = vpack.c.bf16 %v1870, %v1869
      %s1887 = scalar_lea.vmem %s3, 24
      %v1888 = vld [vmem:[%s1887] sm:$0xf]
      %v1889 = vld [vmem:[%s1887 + $0x4] sm:$0xf]
      %v1892 = vunpack.c.l.b16 %v1888
      %v1893 = vunpack.c.l.b16 %v1889
      %v1894 = vpack.c.b16 %v1893, %v1892
      %v1897 = vsel %vm289, %v1871, 0
      %v1900 = vsel %vm289, %v1872, 0
      %v1903 = vsel %vm289, %v1873, 0
      %v1906 = vsel %vm289, %v1874, 0
      %v1909 = vsel %vm289, %v1875, 0
      %v1912 = vsel %vm289, %v1876, 0
      %v1915 = vsel %vm289, %v1877, 0
      %v1918 = vsel %vm289, %v1878, 0
      %v1921 = vsel %vm289, %v1879, 0
      %v1924 = vsel %vm289, %v1880, 0
      %v1927 = vsel %vm289, %v1881, 0
      %v1930 = vsel %vm289, %v1882, 0
      %v1933 = vsel %vm289, %v1883, 0
      %v1936 = vsel %vm289, %v1884, 0
      %v1939 = vsel %vm289, %v1885, 0
      %v1942 = vsel %vm289, %v1886, 0
      %1944 = vmatprep.subr.bf16.mxu0 0
      %1945 = vmatpush1.bf16.msra.mxu0 %v1894
      %1946 = vmatprep.subr.bf16.mxu0 0
      %1947 = vmatpush1.bf16.msra.mxu0 0
      %1948 = vmatprep.subr.bf16.mxu0 0
      %1949 = vmatpush1.bf16.msra.mxu0 0
      %1950 = vmatprep.subr.bf16.mxu0 0
      %1951 = vmatpush1.bf16.msra.mxu0 0
      %1952 = vmatprep.subr.bf16.mxu0 0
      %1953 = vmatpush1.bf16.msra.mxu0 0
      %1954 = vmatprep.subr.bf16.mxu0 0
      %1955 = vmatpush1.bf16.msra.mxu0 0
      %1956 = vmatprep.subr.bf16.mxu0 0
      %1957 = vmatpush1.bf16.msra.mxu0 0
      %1958 = vmatprep.subr.bf16.mxu0 0
      %1959 = vmatpush1.bf16.msra.mxu0 0
      %1960 = vmatprep.subr.bf16.mxu0 0
      %1961 = vmatpush1.bf16.msra.mxu0 0
      %1962 = vmatprep.subr.bf16.mxu0 0
      %1963 = vmatpush1.bf16.msra.mxu0 0
      %1964 = vmatprep.subr.bf16.mxu0 0
      %1965 = vmatpush1.bf16.msra.mxu0 0
      %1966 = vmatprep.subr.bf16.mxu0 0
      %1967 = vmatpush1.bf16.msra.mxu0 0
      %1968 = vmatprep.subr.bf16.mxu0 0
      %1969 = vmatpush1.bf16.msra.mxu0 0
      %1970 = vmatprep.subr.bf16.mxu0 0
      %1971 = vmatpush1.bf16.msra.mxu0 0
      %1972 = vmatprep.subr.bf16.mxu0 0
      %1973 = vmatpush1.bf16.msra.mxu0 0
      %1974 = vmatprep.subr.bf16.mxu0 0
      %1975 = vmatpush1.bf16.msra.mxu0 0
      %1976 = vmatprep.mubr.bf16.mxu0 0
      %1977 = vmatmul.mubr.bf16.gmra.mrb[0].mxu0 %v1897
      %v1978 = vpop.f32.mrb[0].mxu0
      %v1979 = vadd.f32 0.0, %v1978
      %v1980 = vpop.f32.mrb[0].mxu0
      %v1981 = vpop.f32.mrb[0].mxu0
      %v1982 = vadd.f32 0.0, %v1981
      %v1983 = vpop.f32.mrb[0].mxu0
      %1984 = vmatprep.mubr.bf16.mxu0 0
      %1985 = vmatmul.mubr.bf16.gmra.mrb[0].mxu0 %v1900
      %v1986 = vpop.f32.mrb[0].mxu0
      %v1987 = vadd.f32 0.0, %v1986
      %v1988 = vpop.f32.mrb[0].mxu0
      %v1989 = vpop.f32.mrb[0].mxu0
      %v1990 = vadd.f32 0.0, %v1989
      %v1991 = vpop.f32.mrb[0].mxu0
      %1992 = vmatprep.mubr.bf16.mxu0 0
      %1993 = vmatmul.mubr.bf16.gmra.mrb[0].mxu0 %v1903
      %v1994 = vpop.f32.mrb[0].mxu0
      %v1995 = vadd.f32 0.0, %v1994
      %v1996 = vpop.f32.mrb[0].mxu0
      %v1997 = vpop.f32.mrb[0].mxu0
      %v1998 = vadd.f32 0.0, %v1997
      %v1999 = vpop.f32.mrb[0].mxu0
      %2000 = vmatprep.mubr.bf16.mxu0 0
      %2001 = vmatmul.mubr.bf16.gmra.mrb[0].mxu0 %v1906
      %v2002 = vpop.f32.mrb[0].mxu0
      %v2003 = vadd.f32 0.0, %v2002
      %v2004 = vpop.f32.mrb[0].mxu0
      %v2005 = vpop.f32.mrb[0].mxu0
      %v2006 = vadd.f32 0.0, %v2005
      %v2007 = vpop.f32.mrb[0].mxu0
      %2008 = vmatprep.mubr.bf16.mxu0 0
      %2009 = vmatmul.mubr.bf16.gmra.mrb[0].mxu0 %v1909
      %v2010 = vpop.f32.mrb[0].mxu0
      %v2011 = vadd.f32 0.0, %v2010
      %v2012 = vpop.f32.mrb[0].mxu0
      %v2013 = vpop.f32.mrb[0].mxu0
      %v2014 = vadd.f32 0.0, %v2013
      %v2015 = vpop.f32.mrb[0].mxu0
      %2016 = vmatprep.mubr.bf16.mxu0 0
      %2017 = vmatmul.mubr.bf16.gmra.mrb[0].mxu0 %v1912
      %v2018 = vpop.f32.mrb[0].mxu0
      %v2019 = vadd.f32 0.0, %v2018
      %v2020 = vpop.f32.mrb[0].mxu0
      %v2021 = vpop.f32.mrb[0].mxu0
      %v2022 = vadd.f32 0.0, %v2021
      %v2023 = vpop.f32.mrb[0].mxu0
      %2024 = vmatprep.mubr.bf16.mxu0 0
      %2025 = vmatmul.mubr.bf16.gmra.mrb[0].mxu0 %v1915
      %v2026 = vpop.f32.mrb[0].mxu0
      %v2027 = vadd.f32 0.0, %v2026
      %v2028 = vpop.f32.mrb[0].mxu0
      %v2029 = vpop.f32.mrb[0].mxu0
      %v2030 = vadd.f32 0.0, %v2029
      %v2031 = vpop.f32.mrb[0].mxu0
      %2032 = vmatprep.mubr.bf16.mxu0 0
      %2033 = vmatmul.mubr.bf16.gmra.mrb[0].mxu0 %v1918
      %v2034 = vpop.f32.mrb[0].mxu0
      %v2035 = vadd.f32 0.0, %v2034
      %v2036 = vpop.f32.mrb[0].mxu0
      %v2037 = vpop.f32.mrb[0].mxu0
      %v2038 = vadd.f32 0.0, %v2037
      %v2039 = vpop.f32.mrb[0].mxu0
      %2040 = vmatprep.mubr.bf16.mxu0 0
      %2041 = vmatmul.mubr.bf16.gmra.mrb[0].mxu0 %v1921
      %v2042 = vpop.f32.mrb[0].mxu0
      %v2043 = vadd.f32 0.0, %v2042
      %v2044 = vpop.f32.mrb[0].mxu0
      %v2045 = vpop.f32.mrb[0].mxu0
      %v2046 = vadd.f32 0.0, %v2045
      %v2047 = vpop.f32.mrb[0].mxu0
      %2048 = vmatprep.mubr.bf16.mxu0 0
      %2049 = vmatmul.mubr.bf16.gmra.mrb[0].mxu0 %v1924
      %v2050 = vpop.f32.mrb[0].mxu0
      %v2051 = vadd.f32 0.0, %v2050
      %v2052 = vpop.f32.mrb[0].mxu0
      %v2053 = vpop.f32.mrb[0].mxu0
      %v2054 = vadd.f32 0.0, %v2053
      %v2055 = vpop.f32.mrb[0].mxu0
      %2056 = vmatprep.mubr.bf16.mxu0 0
      %2057 = vmatmul.mubr.bf16.gmra.mrb[0].mxu0 %v1927
      %v2058 = vpop.f32.mrb[0].mxu0
      %v2059 = vadd.f32 0.0, %v2058
      %v2060 = vpop.f32.mrb[0].mxu0
      %v2061 = vpop.f32.mrb[0].mxu0
      %v2062 = vadd.f32 0.0, %v2061
      %v2063 = vpop.f32.mrb[0].mxu0
      %2064 = vmatprep.mubr.bf16.mxu0 0
      %2065 = vmatmul.mubr.bf16.gmra.mrb[0].mxu0 %v1930
      %v2066 = vpop.f32.mrb[0].mxu0
      %v2067 = vadd.f32 0.0, %v2066
      %v2068 = vpop.f32.mrb[0].mxu0
      %v2069 = vpop.f32.mrb[0].mxu0
      %v2070 = vadd.f32 0.0, %v2069
      %v2071 = vpop.f32.mrb[0].mxu0
      %2072 = vmatprep.mubr.bf16.mxu0 0
      %2073 = vmatmul.mubr.bf16.gmra.mrb[0].mxu0 %v1933
      %v2074 = vpop.f32.mrb[0].mxu0
      %v2075 = vadd.f32 0.0, %v2074
      %v2076 = vpop.f32.mrb[0].mxu0
      %v2077 = vpop.f32.mrb[0].mxu0
      %v2078 = vadd.f32 0.0, %v2077
      %v2079 = vpop.f32.mrb[0].mxu0
      %2080 = vmatprep.mubr.bf16.mxu0 0
      %2081 = vmatmul.mubr.bf16.gmra.mrb[0].mxu0 %v1936
      %v2082 = vpop.f32.mrb[0].mxu0
      %v2083 = vadd.f32 0.0, %v2082
      %v2084 = vpop.f32.mrb[0].mxu0
      %v2085 = vpop.f32.mrb[0].mxu0
      %v2086 = vadd.f32 0.0, %v2085
      %v2087 = vpop.f32.mrb[0].mxu0
      %2088 = vmatprep.mubr.bf16.mxu0 0
      %2089 = vmatmul.mubr.bf16.gmra.mrb[0].mxu0 %v1939
      %v2090 = vpop.f32.mrb[0].mxu0
      %v2091 = vadd.f32 0.0, %v2090
      %v2092 = vpop.f32.mrb[0].mxu0
      %v2093 = vpop.f32.mrb[0].mxu0
      %v2094 = vadd.f32 0.0, %v2093
      %v2095 = vpop.f32.mrb[0].mxu0
      %2096 = vmatprep.mubr.bf16.mxu0 0
      %2097 = vmatmul.mubr.bf16.gmra.mrb[0].mxu0 %v1942
      %v2098 = vpop.f32.mrb[0].mxu0
      %v2099 = vadd.f32 0.0, %v2098
      %v2100 = vpop.f32.mrb[0].mxu0
      %v2101 = vpop.f32.mrb[0].mxu0
      %v2102 = vadd.f32 0.0, %v2101
      %v2103 = vpop.f32.mrb[0].mxu0
      %2104 = vdwg.mxu0
      %v2105 = vadd.f32 %v1807, %v1979
      %v2106 = vadd.f32 %v1808, %v1982
      %v2107 = vadd.f32 %v1809, %v1987
      %v2108 = vadd.f32 %v1810, %v1990
      %v2109 = vadd.f32 %v1811, %v1995
      %v2110 = vadd.f32 %v1812, %v1998
      %v2111 = vadd.f32 %v1813, %v2003
      %v2112 = vadd.f32 %v1814, %v2006
      %v2113 = vadd.f32 %v1815, %v2011
      %v2114 = vadd.f32 %v1816, %v2014
      %v2115 = vadd.f32 %v1817, %v2019
      %v2116 = vadd.f32 %v1818, %v2022
      %v2117 = vadd.f32 %v1819, %v2027
      %v2118 = vadd.f32 %v1820, %v2030
      %v2119 = vadd.f32 %v1821, %v2035
      %v2120 = vadd.f32 %v1822, %v2038
      %v2121 = vadd.f32 %v1823, %v2043
      %v2122 = vadd.f32 %v1824, %v2046
      %v2123 = vadd.f32 %v1825, %v2051
      %v2124 = vadd.f32 %v1826, %v2054
      %v2125 = vadd.f32 %v1827, %v2059
      %v2126 = vadd.f32 %v1828, %v2062
      %v2127 = vadd.f32 %v1829, %v2067
      %v2128 = vadd.f32 %v1830, %v2070
      %v2129 = vadd.f32 %v1831, %v2075
      %v2130 = vadd.f32 %v1832, %v2078
      %v2131 = vadd.f32 %v1833, %v2083
      %v2132 = vadd.f32 %v1834, %v2086
      %v2133 = vadd.f32 %v1835, %v2091
      %v2134 = vadd.f32 %v1836, %v2094
      %v2135 = vadd.f32 %v1837, %v2099
      %v2136 = vadd.f32 %v1838, %v2102
      %v2137 = vld [vmem:[%s906 + $0x1] sm:$0xff]
      %v2138 = vld [vmem:[%s906 + $0x9] sm:$0xff]
      %v2139 = vld [vmem:[%s906 + $0x19] sm:$0xff]
      %v2140 = vld [vmem:[%s906 + $0x21] sm:$0xff]
      %v2141 = vld [vmem:[%s906 + $0x31] sm:$0xff]
      %v2142 = vld [vmem:[%s906 + $0x39] sm:$0xff]
      %v2143 = vld [vmem:[%s906 + $0x49] sm:$0xff]
      %v2144 = vld [vmem:[%s906 + $0x51] sm:$0xff]
      %v2145 = vld [vmem:[%s906 + $0x61] sm:$0xff]
      %v2146 = vld [vmem:[%s906 + $0x69] sm:$0xff]
      %v2147 = vld [vmem:[%s906 + $0x79] sm:$0xff]
      %v2148 = vld [vmem:[%s906 + $0x81] sm:$0xff]
      %v2149 = vld [vmem:[%s906 + $0x91] sm:$0xff]
      %v2150 = vld [vmem:[%s906 + $0x99] sm:$0xff]
      %v2151 = vld [vmem:[%s906 + $0xa9] sm:$0xff]
      %v2152 = vld [vmem:[%s906 + $0xb1] sm:$0xff]
      %v2153 = vld [vmem:[%s906 + $0xc1] sm:$0xff]
      %v2154 = vld [vmem:[%s906 + $0xc9] sm:$0xff]
      %v2155 = vld [vmem:[%s906 + $0xd9] sm:$0xff]
      %v2156 = vld [vmem:[%s906 + $0xe1] sm:$0xff]
      %v2157 = vld [vmem:[%s906 + $0xf1] sm:$0xff]
      %v2158 = vld [vmem:[%s906 + $0xf9] sm:$0xff]
      %v2159 = vld [vmem:[%s906 + $0x109] sm:$0xff]
      %v2160 = vld [vmem:[%s906 + $0x111] sm:$0xff]
      %v2161 = vld [vmem:[%s906 + $0x121] sm:$0xff]
      %v2162 = vld [vmem:[%s906 + $0x129] sm:$0xff]
      %v2163 = vld [vmem:[%s906 + $0x139] sm:$0xff]
      %v2164 = vld [vmem:[%s906 + $0x141] sm:$0xff]
      %v2165 = vld [vmem:[%s906 + $0x151] sm:$0xff]
      %v2166 = vld [vmem:[%s906 + $0x159] sm:$0xff]
      %v2167 = vld [vmem:[%s906 + $0x169] sm:$0xff]
      %v2168 = vld [vmem:[%s906 + $0x171] sm:$0xff]
      %v2169 = vpack.c.bf16 %v2138, %v2137
      %v2170 = vpack.c.bf16 %v2140, %v2139
      %v2171 = vpack.c.bf16 %v2142, %v2141
      %v2172 = vpack.c.bf16 %v2144, %v2143
      %v2173 = vpack.c.bf16 %v2146, %v2145
      %v2174 = vpack.c.bf16 %v2148, %v2147
      %v2175 = vpack.c.bf16 %v2150, %v2149
      %v2176 = vpack.c.bf16 %v2152, %v2151
      %v2177 = vpack.c.bf16 %v2154, %v2153
      %v2178 = vpack.c.bf16 %v2156, %v2155
      %v2179 = vpack.c.bf16 %v2158, %v2157
      %v2180 = vpack.c.bf16 %v2160, %v2159
      %v2181 = vpack.c.bf16 %v2162, %v2161
      %v2182 = vpack.c.bf16 %v2164, %v2163
      %v2183 = vpack.c.bf16 %v2166, %v2165
      %v2184 = vpack.c.bf16 %v2168, %v2167
      %s2185 = scalar_lea.vmem %s3, 32
      %v2186 = vld [vmem:[%s2185] sm:$0xf]
      %v2187 = vld [vmem:[%s2185 + $0x4] sm:$0xf]
      %v2190 = vunpack.c.l.b16 %v2186
      %v2191 = vunpack.c.l.b16 %v2187
      %v2192 = vpack.c.b16 %v2191, %v2190
      %v2195 = vsel %vm289, %v2169, 0
      %v2198 = vsel %vm289, %v2170, 0
      %v2201 = vsel %vm289, %v2171, 0
      %v2204 = vsel %vm289, %v2172, 0
      %v2207 = vsel %vm289, %v2173, 0
      %v2210 = vsel %vm289, %v2174, 0
      %v2213 = vsel %vm289, %v2175, 0
      %v2216 = vsel %vm289, %v2176, 0
      %v2219 = vsel %vm289, %v2177, 0
      %v2222 = vsel %vm289, %v2178, 0
      %v2225 = vsel %vm289, %v2179, 0
      %v2228 = vsel %vm289, %v2180, 0
      %v2231 = vsel %vm289, %v2181, 0
      %v2234 = vsel %vm289, %v2182, 0
      %v2237 = vsel %vm289, %v2183, 0
      %v2240 = vsel %vm289, %v2184, 0
      %2242 = vmatprep.subr.bf16.mxu0 0
      %2243 = vmatpush1.bf16.msra.mxu0 %v2192
      %2244 = vmatprep.subr.bf16.mxu0 0
      %2245 = vmatpush1.bf16.msra.mxu0 0
      %2246 = vmatprep.subr.bf16.mxu0 0
      %2247 = vmatpush1.bf16.msra.mxu0 0
      %2248 = vmatprep.subr.bf16.mxu0 0
      %2249 = vmatpush1.bf16.msra.mxu0 0
      %2250 = vmatprep.subr.bf16.mxu0 0
      %2251 = vmatpush1.bf16.msra.mxu0 0
      %2252 = vmatprep.subr.bf16.mxu0 0
      %2253 = vmatpush1.bf16.msra.mxu0 0
      %2254 = vmatprep.subr.bf16.mxu0 0
      %2255 = vmatpush1.bf16.msra.mxu0 0
      %2256 = vmatprep.subr.bf16.mxu0 0
      %2257 = vmatpush1.bf16.msra.mxu0 0
      %2258 = vmatprep.subr.bf16.mxu0 0
      %2259 = vmatpush1.bf16.msra.mxu0 0
      %2260 = vmatprep.subr.bf16.mxu0 0
      %2261 = vmatpush1.bf16.msra.mxu0 0
      %2262 = vmatprep.subr.bf16.mxu0 0
      %2263 = vmatpush1.bf16.msra.mxu0 0
      %2264 = vmatprep.subr.bf16.mxu0 0
      %2265 = vmatpush1.bf16.msra.mxu0 0
      %2266 = vmatprep.subr.bf16.mxu0 0
      %2267 = vmatpush1.bf16.msra.mxu0 0
      %2268 = vmatprep.subr.bf16.mxu0 0
      %2269 = vmatpush1.bf16.msra.mxu0 0
      %2270 = vmatprep.subr.bf16.mxu0 0
      %2271 = vmatpush1.bf16.msra.mxu0 0
      %2272 = vmatprep.subr.bf16.mxu0 0
      %2273 = vmatpush1.bf16.msra.mxu0 0
      %2274 = vmatprep.mubr.bf16.mxu0 0
      %2275 = vmatmul.mubr.bf16.gmra.mrb[0].mxu0 %v2195
      %v2276 = vpop.f32.mrb[0].mxu0
      %v2277 = vadd.f32 0.0, %v2276
      %v2278 = vpop.f32.mrb[0].mxu0
      %v2279 = vpop.f32.mrb[0].mxu0
      %v2280 = vadd.f32 0.0, %v2279
      %v2281 = vpop.f32.mrb[0].mxu0
      %2282 = vmatprep.mubr.bf16.mxu0 0
      %2283 = vmatmul.mubr.bf16.gmra.mrb[0].mxu0 %v2198
      %v2284 = vpop.f32.mrb[0].mxu0
      %v2285 = vadd.f32 0.0, %v2284
      %v2286 = vpop.f32.mrb[0].mxu0
      %v2287 = vpop.f32.mrb[0].mxu0
      %v2288 = vadd.f32 0.0, %v2287
      %v2289 = vpop.f32.mrb[0].mxu0
      %2290 = vmatprep.mubr.bf16.mxu0 0
      %2291 = vmatmul.mubr.bf16.gmra.mrb[0].mxu0 %v2201
      %v2292 = vpop.f32.mrb[0].mxu0
      %v2293 = vadd.f32 0.0, %v2292
      %v2294 = vpop.f32.mrb[0].mxu0
      %v2295 = vpop.f32.mrb[0].mxu0
      %v2296 = vadd.f32 0.0, %v2295
      %v2297 = vpop.f32.mrb[0].mxu0
      %2298 = vmatprep.mubr.bf16.mxu0 0
      %2299 = vmatmul.mubr.bf16.gmra.mrb[0].mxu0 %v2204
      %v2300 = vpop.f32.mrb[0].mxu0
      %v2301 = vadd.f32 0.0, %v2300
      %v2302 = vpop.f32.mrb[0].mxu0
      %v2303 = vpop.f32.mrb[0].mxu0
      %v2304 = vadd.f32 0.0, %v2303
      %v2305 = vpop.f32.mrb[0].mxu0
      %2306 = vmatprep.mubr.bf16.mxu0 0
      %2307 = vmatmul.mubr.bf16.gmra.mrb[0].mxu0 %v2207
      %v2308 = vpop.f32.mrb[0].mxu0
      %v2309 = vadd.f32 0.0, %v2308
      %v2310 = vpop.f32.mrb[0].mxu0
      %v2311 = vpop.f32.mrb[0].mxu0
      %v2312 = vadd.f32 0.0, %v2311
      %v2313 = vpop.f32.mrb[0].mxu0
      %2314 = vmatprep.mubr.bf16.mxu0 0
      %2315 = vmatmul.mubr.bf16.gmra.mrb[0].mxu0 %v2210
      %v2316 = vpop.f32.mrb[0].mxu0
      %v2317 = vadd.f32 0.0, %v2316
      %v2318 = vpop.f32.mrb[0].mxu0
      %v2319 = vpop.f32.mrb[0].mxu0
      %v2320 = vadd.f32 0.0, %v2319
      %v2321 = vpop.f32.mrb[0].mxu0
      %2322 = vmatprep.mubr.bf16.mxu0 0
      %2323 = vmatmul.mubr.bf16.gmra.mrb[0].mxu0 %v2213
      %v2324 = vpop.f32.mrb[0].mxu0
      %v2325 = vadd.f32 0.0, %v2324
      %v2326 = vpop.f32.mrb[0].mxu0
      %v2327 = vpop.f32.mrb[0].mxu0
      %v2328 = vadd.f32 0.0, %v2327
      %v2329 = vpop.f32.mrb[0].mxu0
      %2330 = vmatprep.mubr.bf16.mxu0 0
      %2331 = vmatmul.mubr.bf16.gmra.mrb[0].mxu0 %v2216
      %v2332 = vpop.f32.mrb[0].mxu0
      %v2333 = vadd.f32 0.0, %v2332
      %v2334 = vpop.f32.mrb[0].mxu0
      %v2335 = vpop.f32.mrb[0].mxu0
      %v2336 = vadd.f32 0.0, %v2335
      %v2337 = vpop.f32.mrb[0].mxu0
      %2338 = vmatprep.mubr.bf16.mxu0 0
      %2339 = vmatmul.mubr.bf16.gmra.mrb[0].mxu0 %v2219
      %v2340 = vpop.f32.mrb[0].mxu0
      %v2341 = vadd.f32 0.0, %v2340
      %v2342 = vpop.f32.mrb[0].mxu0
      %v2343 = vpop.f32.mrb[0].mxu0
      %v2344 = vadd.f32 0.0, %v2343
      %v2345 = vpop.f32.mrb[0].mxu0
      %2346 = vmatprep.mubr.bf16.mxu0 0
      %2347 = vmatmul.mubr.bf16.gmra.mrb[0].mxu0 %v2222
      %v2348 = vpop.f32.mrb[0].mxu0
      %v2349 = vadd.f32 0.0, %v2348
      %v2350 = vpop.f32.mrb[0].mxu0
      %v2351 = vpop.f32.mrb[0].mxu0
      %v2352 = vadd.f32 0.0, %v2351
      %v2353 = vpop.f32.mrb[0].mxu0
      %2354 = vmatprep.mubr.bf16.mxu0 0
      %2355 = vmatmul.mubr.bf16.gmra.mrb[0].mxu0 %v2225
      %v2356 = vpop.f32.mrb[0].mxu0
      %v2357 = vadd.f32 0.0, %v2356
      %v2358 = vpop.f32.mrb[0].mxu0
      %v2359 = vpop.f32.mrb[0].mxu0
      %v2360 = vadd.f32 0.0, %v2359
      %v2361 = vpop.f32.mrb[0].mxu0
      %2362 = vmatprep.mubr.bf16.mxu0 0
      %2363 = vmatmul.mubr.bf16.gmra.mrb[0].mxu0 %v2228
      %v2364 = vpop.f32.mrb[0].mxu0
      %v2365 = vadd.f32 0.0, %v2364
      %v2366 = vpop.f32.mrb[0].mxu0
      %v2367 = vpop.f32.mrb[0].mxu0
      %v2368 = vadd.f32 0.0, %v2367
      %v2369 = vpop.f32.mrb[0].mxu0
      %2370 = vmatprep.mubr.bf16.mxu0 0
      %2371 = vmatmul.mubr.bf16.gmra.mrb[0].mxu0 %v2231
      %v2372 = vpop.f32.mrb[0].mxu0
      %v2373 = vadd.f32 0.0, %v2372
      %v2374 = vpop.f32.mrb[0].mxu0
      %v2375 = vpop.f32.mrb[0].mxu0
      %v2376 = vadd.f32 0.0, %v2375
      %v2377 = vpop.f32.mrb[0].mxu0
      %2378 = vmatprep.mubr.bf16.mxu0 0
      %2379 = vmatmul.mubr.bf16.gmra.mrb[0].mxu0 %v2234
      %v2380 = vpop.f32.mrb[0].mxu0
      %v2381 = vadd.f32 0.0, %v2380
      %v2382 = vpop.f32.mrb[0].mxu0
      %v2383 = vpop.f32.mrb[0].mxu0
      %v2384 = vadd.f32 0.0, %v2383
      %v2385 = vpop.f32.mrb[0].mxu0
      %2386 = vmatprep.mubr.bf16.mxu0 0
      %2387 = vmatmul.mubr.bf16.gmra.mrb[0].mxu0 %v2237
      %v2388 = vpop.f32.mrb[0].mxu0
      %v2389 = vadd.f32 0.0, %v2388
      %v2390 = vpop.f32.mrb[0].mxu0
      %v2391 = vpop.f32.mrb[0].mxu0
      %v2392 = vadd.f32 0.0, %v2391
      %v2393 = vpop.f32.mrb[0].mxu0
      %2394 = vmatprep.mubr.bf16.mxu0 0
      %2395 = vmatmul.mubr.bf16.gmra.mrb[0].mxu0 %v2240
      %v2396 = vpop.f32.mrb[0].mxu0
      %v2397 = vadd.f32 0.0, %v2396
      %v2398 = vpop.f32.mrb[0].mxu0
      %v2399 = vpop.f32.mrb[0].mxu0
      %v2400 = vadd.f32 0.0, %v2399
      %v2401 = vpop.f32.mrb[0].mxu0
      %2402 = vdwg.mxu0
      %v2403 = vadd.f32 %v2105, %v2277
      %v2404 = vadd.f32 %v2106, %v2280
      %v2405 = vadd.f32 %v2107, %v2285
      %v2406 = vadd.f32 %v2108, %v2288
      %v2407 = vadd.f32 %v2109, %v2293
      %v2408 = vadd.f32 %v2110, %v2296
      %v2409 = vadd.f32 %v2111, %v2301
      %v2410 = vadd.f32 %v2112, %v2304
      %v2411 = vadd.f32 %v2113, %v2309
      %v2412 = vadd.f32 %v2114, %v2312
      %v2413 = vadd.f32 %v2115, %v2317
      %v2414 = vadd.f32 %v2116, %v2320
      %v2415 = vadd.f32 %v2117, %v2325
      %v2416 = vadd.f32 %v2118, %v2328
      %v2417 = vadd.f32 %v2119, %v2333
      %v2418 = vadd.f32 %v2120, %v2336
      %v2419 = vadd.f32 %v2121, %v2341
      %v2420 = vadd.f32 %v2122, %v2344
      %v2421 = vadd.f32 %v2123, %v2349
      %v2422 = vadd.f32 %v2124, %v2352
      %v2423 = vadd.f32 %v2125, %v2357
      %v2424 = vadd.f32 %v2126, %v2360
      %v2425 = vadd.f32 %v2127, %v2365
      %v2426 = vadd.f32 %v2128, %v2368
      %v2427 = vadd.f32 %v2129, %v2373
      %v2428 = vadd.f32 %v2130, %v2376
      %v2429 = vadd.f32 %v2131, %v2381
      %v2430 = vadd.f32 %v2132, %v2384
      %v2431 = vadd.f32 %v2133, %v2389
      %v2432 = vadd.f32 %v2134, %v2392
      %v2433 = vadd.f32 %v2135, %v2397
      %v2434 = vadd.f32 %v2136, %v2400
      %v2435 = vld [vmem:[%s906 + $0x2] sm:$0xff]
      %v2436 = vld [vmem:[%s906 + $0xa] sm:$0xff]
      %v2437 = vld [vmem:[%s906 + $0x1a] sm:$0xff]
      %v2438 = vld [vmem:[%s906 + $0x22] sm:$0xff]
      %v2439 = vld [vmem:[%s906 + $0x32] sm:$0xff]
      %v2440 = vld [vmem:[%s906 + $0x3a] sm:$0xff]
      %v2441 = vld [vmem:[%s906 + $0x4a] sm:$0xff]
      %v2442 = vld [vmem:[%s906 + $0x52] sm:$0xff]
      %v2443 = vld [vmem:[%s906 + $0x62] sm:$0xff]
      %v2444 = vld [vmem:[%s906 + $0x6a] sm:$0xff]
      %v2445 = vld [vmem:[%s906 + $0x7a] sm:$0xff]
      %v2446 = vld [vmem:[%s906 + $0x82] sm:$0xff]
      %v2447 = vld [vmem:[%s906 + $0x92] sm:$0xff]
      %v2448 = vld [vmem:[%s906 + $0x9a] sm:$0xff]
      %v2449 = vld [vmem:[%s906 + $0xaa] sm:$0xff]
      %v2450 = vld [vmem:[%s906 + $0xb2] sm:$0xff]
      %v2451 = vld [vmem:[%s906 + $0xc2] sm:$0xff]
      %v2452 = vld [vmem:[%s906 + $0xca] sm:$0xff]
      %v2453 = vld [vmem:[%s906 + $0xda] sm:$0xff]
      %v2454 = vld [vmem:[%s906 + $0xe2] sm:$0xff]
      %v2455 = vld [vmem:[%s906 + $0xf2] sm:$0xff]
      %v2456 = vld [vmem:[%s906 + $0xfa] sm:$0xff]
      %v2457 = vld [vmem:[%s906 + $0x10a] sm:$0xff]
      %v2458 = vld [vmem:[%s906 + $0x112] sm:$0xff]
      %v2459 = vld [vmem:[%s906 + $0x122] sm:$0xff]
      %v2460 = vld [vmem:[%s906 + $0x12a] sm:$0xff]
      %v2461 = vld [vmem:[%s906 + $0x13a] sm:$0xff]
      %v2462 = vld [vmem:[%s906 + $0x142] sm:$0xff]
      %v2463 = vld [vmem:[%s906 + $0x152] sm:$0xff]
      %v2464 = vld [vmem:[%s906 + $0x15a] sm:$0xff]
      %v2465 = vld [vmem:[%s906 + $0x16a] sm:$0xff]
      %v2466 = vld [vmem:[%s906 + $0x172] sm:$0xff]
      %v2467 = vpack.c.bf16 %v2436, %v2435
      %v2468 = vpack.c.bf16 %v2438, %v2437
      %v2469 = vpack.c.bf16 %v2440, %v2439
      %v2470 = vpack.c.bf16 %v2442, %v2441
      %v2471 = vpack.c.bf16 %v2444, %v2443
      %v2472 = vpack.c.bf16 %v2446, %v2445
      %v2473 = vpack.c.bf16 %v2448, %v2447
      %v2474 = vpack.c.bf16 %v2450, %v2449
      %v2475 = vpack.c.bf16 %v2452, %v2451
      %v2476 = vpack.c.bf16 %v2454, %v2453
      %v2477 = vpack.c.bf16 %v2456, %v2455
      %v2478 = vpack.c.bf16 %v2458, %v2457
      %v2479 = vpack.c.bf16 %v2460, %v2459
      %v2480 = vpack.c.bf16 %v2462, %v2461
      %v2481 = vpack.c.bf16 %v2464, %v2463
      %v2482 = vpack.c.bf16 %v2466, %v2465
      %s2483 = scalar_lea.vmem %s3, 40
      %v2484 = vld [vmem:[%s2483] sm:$0xf]
      %v2485 = vld [vmem:[%s2483 + $0x4] sm:$0xf]
      %v2488 = vunpack.c.l.b16 %v2484
      %v2489 = vunpack.c.l.b16 %v2485
      %v2490 = vpack.c.b16 %v2489, %v2488
      %v2493 = vsel %vm289, %v2467, 0
      %v2496 = vsel %vm289, %v2468, 0
      %v2499 = vsel %vm289, %v2469, 0
      %v2502 = vsel %vm289, %v2470, 0
      %v2505 = vsel %vm289, %v2471, 0
      %v2508 = vsel %vm289, %v2472, 0
      %v2511 = vsel %vm289, %v2473, 0
      %v2514 = vsel %vm289, %v2474, 0
      %v2517 = vsel %vm289, %v2475, 0
      %v2520 = vsel %vm289, %v2476, 0
      %v2523 = vsel %vm289, %v2477, 0
      %v2526 = vsel %vm289, %v2478, 0
      %v2529 = vsel %vm289, %v2479, 0
      %v2532 = vsel %vm289, %v2480, 0
      %v2535 = vsel %vm289, %v2481, 0
      %v2538 = vsel %vm289, %v2482, 0
      %2540 = vmatprep.subr.bf16.mxu0 0
      %2541 = vmatpush1.bf16.msra.mxu0 %v2490
      %2542 = vmatprep.subr.bf16.mxu0 0
      %2543 = vmatpush1.bf16.msra.mxu0 0
      %2544 = vmatprep.subr.bf16.mxu0 0
      %2545 = vmatpush1.bf16.msra.mxu0 0
      %2546 = vmatprep.subr.bf16.mxu0 0
      %2547 = vmatpush1.bf16.msra.mxu0 0
      %2548 = vmatprep.subr.bf16.mxu0 0
      %2549 = vmatpush1.bf16.msra.mxu0 0
      %2550 = vmatprep.subr.bf16.mxu0 0
      %2551 = vmatpush1.bf16.msra.mxu0 0
      %2552 = vmatprep.subr.bf16.mxu0 0
      %2553 = vmatpush1.bf16.msra.mxu0 0
      %2554 = vmatprep.subr.bf16.mxu0 0
      %2555 = vmatpush1.bf16.msra.mxu0 0
      %2556 = vmatprep.subr.bf16.mxu0 0
      %2557 = vmatpush1.bf16.msra.mxu0 0
      %2558 = vmatprep.subr.bf16.mxu0 0
      %2559 = vmatpush1.bf16.msra.mxu0 0
      %2560 = vmatprep.subr.bf16.mxu0 0
      %2561 = vmatpush1.bf16.msra.mxu0 0
      %2562 = vmatprep.subr.bf16.mxu0 0
      %2563 = vmatpush1.bf16.msra.mxu0 0
      %2564 = vmatprep.subr.bf16.mxu0 0
      %2565 = vmatpush1.bf16.msra.mxu0 0
      %2566 = vmatprep.subr.bf16.mxu0 0
      %2567 = vmatpush1.bf16.msra.mxu0 0
      %2568 = vmatprep.subr.bf16.mxu0 0
      %2569 = vmatpush1.bf16.msra.mxu0 0
      %2570 = vmatprep.subr.bf16.mxu0 0
      %2571 = vmatpush1.bf16.msra.mxu0 0
      %2572 = vmatprep.mubr.bf16.mxu0 0
      %2573 = vmatmul.mubr.bf16.gmra.mrb[0].mxu0 %v2493
      %v2574 = vpop.f32.mrb[0].mxu0
      %v2575 = vadd.f32 0.0, %v2574
      %v2576 = vpop.f32.mrb[0].mxu0
      %v2577 = vpop.f32.mrb[0].mxu0
      %v2578 = vadd.f32 0.0, %v2577
      %v2579 = vpop.f32.mrb[0].mxu0
      %2580 = vmatprep.mubr.bf16.mxu0 0
      %2581 = vmatmul.mubr.bf16.gmra.mrb[0].mxu0 %v2496
      %v2582 = vpop.f32.mrb[0].mxu0
      %v2583 = vadd.f32 0.0, %v2582
      %v2584 = vpop.f32.mrb[0].mxu0
      %v2585 = vpop.f32.mrb[0].mxu0
      %v2586 = vadd.f32 0.0, %v2585
      %v2587 = vpop.f32.mrb[0].mxu0
      %2588 = vmatprep.mubr.bf16.mxu0 0
      %2589 = vmatmul.mubr.bf16.gmra.mrb[0].mxu0 %v2499
      %v2590 = vpop.f32.mrb[0].mxu0
      %v2591 = vadd.f32 0.0, %v2590
      %v2592 = vpop.f32.mrb[0].mxu0
      %v2593 = vpop.f32.mrb[0].mxu0
      %v2594 = vadd.f32 0.0, %v2593
      %v2595 = vpop.f32.mrb[0].mxu0
      %2596 = vmatprep.mubr.bf16.mxu0 0
      %2597 = vmatmul.mubr.bf16.gmra.mrb[0].mxu0 %v2502
      %v2598 = vpop.f32.mrb[0].mxu0
      %v2599 = vadd.f32 0.0, %v2598
      %v2600 = vpop.f32.mrb[0].mxu0
      %v2601 = vpop.f32.mrb[0].mxu0
      %v2602 = vadd.f32 0.0, %v2601
      %v2603 = vpop.f32.mrb[0].mxu0
      %2604 = vmatprep.mubr.bf16.mxu0 0
      %2605 = vmatmul.mubr.bf16.gmra.mrb[0].mxu0 %v2505
      %v2606 = vpop.f32.mrb[0].mxu0
      %v2607 = vadd.f32 0.0, %v2606
      %v2608 = vpop.f32.mrb[0].mxu0
      %v2609 = vpop.f32.mrb[0].mxu0
      %v2610 = vadd.f32 0.0, %v2609
      %v2611 = vpop.f32.mrb[0].mxu0
      %2612 = vmatprep.mubr.bf16.mxu0 0
      %2613 = vmatmul.mubr.bf16.gmra.mrb[0].mxu0 %v2508
      %v2614 = vpop.f32.mrb[0].mxu0
      %v2615 = vadd.f32 0.0, %v2614
      %v2616 = vpop.f32.mrb[0].mxu0
      %v2617 = vpop.f32.mrb[0].mxu0
      %v2618 = vadd.f32 0.0, %v2617
      %v2619 = vpop.f32.mrb[0].mxu0
      %2620 = vmatprep.mubr.bf16.mxu0 0
      %2621 = vmatmul.mubr.bf16.gmra.mrb[0].mxu0 %v2511
      %v2622 = vpop.f32.mrb[0].mxu0
      %v2623 = vadd.f32 0.0, %v2622
      %v2624 = vpop.f32.mrb[0].mxu0
      %v2625 = vpop.f32.mrb[0].mxu0
      %v2626 = vadd.f32 0.0, %v2625
      %v2627 = vpop.f32.mrb[0].mxu0
      %2628 = vmatprep.mubr.bf16.mxu0 0
      %2629 = vmatmul.mubr.bf16.gmra.mrb[0].mxu0 %v2514
      %v2630 = vpop.f32.mrb[0].mxu0
      %v2631 = vadd.f32 0.0, %v2630
      %v2632 = vpop.f32.mrb[0].mxu0
      %v2633 = vpop.f32.mrb[0].mxu0
      %v2634 = vadd.f32 0.0, %v2633
      %v2635 = vpop.f32.mrb[0].mxu0
      %2636 = vmatprep.mubr.bf16.mxu0 0
      %2637 = vmatmul.mubr.bf16.gmra.mrb[0].mxu0 %v2517
      %v2638 = vpop.f32.mrb[0].mxu0
      %v2639 = vadd.f32 0.0, %v2638
      %v2640 = vpop.f32.mrb[0].mxu0
      %v2641 = vpop.f32.mrb[0].mxu0
      %v2642 = vadd.f32 0.0, %v2641
      %v2643 = vpop.f32.mrb[0].mxu0
      %2644 = vmatprep.mubr.bf16.mxu0 0
      %2645 = vmatmul.mubr.bf16.gmra.mrb[0].mxu0 %v2520
      %v2646 = vpop.f32.mrb[0].mxu0
      %v2647 = vadd.f32 0.0, %v2646
      %v2648 = vpop.f32.mrb[0].mxu0
      %v2649 = vpop.f32.mrb[0].mxu0
      %v2650 = vadd.f32 0.0, %v2649
      %v2651 = vpop.f32.mrb[0].mxu0
      %2652 = vmatprep.mubr.bf16.mxu0 0
      %2653 = vmatmul.mubr.bf16.gmra.mrb[0].mxu0 %v2523
      %v2654 = vpop.f32.mrb[0].mxu0
      %v2655 = vadd.f32 0.0, %v2654
      %v2656 = vpop.f32.mrb[0].mxu0
      %v2657 = vpop.f32.mrb[0].mxu0
      %v2658 = vadd.f32 0.0, %v2657
      %v2659 = vpop.f32.mrb[0].mxu0
      %2660 = vmatprep.mubr.bf16.mxu0 0
      %2661 = vmatmul.mubr.bf16.gmra.mrb[0].mxu0 %v2526
      %v2662 = vpop.f32.mrb[0].mxu0
      %v2663 = vadd.f32 0.0, %v2662
      %v2664 = vpop.f32.mrb[0].mxu0
      %v2665 = vpop.f32.mrb[0].mxu0
      %v2666 = vadd.f32 0.0, %v2665
      %v2667 = vpop.f32.mrb[0].mxu0
      %2668 = vmatprep.mubr.bf16.mxu0 0
      %2669 = vmatmul.mubr.bf16.gmra.mrb[0].mxu0 %v2529
      %v2670 = vpop.f32.mrb[0].mxu0
      %v2671 = vadd.f32 0.0, %v2670
      %v2672 = vpop.f32.mrb[0].mxu0
      %v2673 = vpop.f32.mrb[0].mxu0
      %v2674 = vadd.f32 0.0, %v2673
      %v2675 = vpop.f32.mrb[0].mxu0
      %2676 = vmatprep.mubr.bf16.mxu0 0
      %2677 = vmatmul.mubr.bf16.gmra.mrb[0].mxu0 %v2532
      %v2678 = vpop.f32.mrb[0].mxu0
      %v2679 = vadd.f32 0.0, %v2678
      %v2680 = vpop.f32.mrb[0].mxu0
      %v2681 = vpop.f32.mrb[0].mxu0
      %v2682 = vadd.f32 0.0, %v2681
      %v2683 = vpop.f32.mrb[0].mxu0
      %2684 = vmatprep.mubr.bf16.mxu0 0
      %2685 = vmatmul.mubr.bf16.gmra.mrb[0].mxu0 %v2535
      %v2686 = vpop.f32.mrb[0].mxu0
      %v2687 = vadd.f32 0.0, %v2686
      %v2688 = vpop.f32.mrb[0].mxu0
      %v2689 = vpop.f32.mrb[0].mxu0
      %v2690 = vadd.f32 0.0, %v2689
      %v2691 = vpop.f32.mrb[0].mxu0
      %2692 = vmatprep.mubr.bf16.mxu0 0
      %2693 = vmatmul.mubr.bf16.gmra.mrb[0].mxu0 %v2538
      %v2694 = vpop.f32.mrb[0].mxu0
      %v2695 = vadd.f32 0.0, %v2694
      %v2696 = vpop.f32.mrb[0].mxu0
      %v2697 = vpop.f32.mrb[0].mxu0
      %v2698 = vadd.f32 0.0, %v2697
      %v2699 = vpop.f32.mrb[0].mxu0
      %2700 = vdwg.mxu0
      %v2701 = vadd.f32 %v2403, %v2575
      %v2702 = vadd.f32 %v2404, %v2578
      %v2703 = vadd.f32 %v2405, %v2583
      %v2704 = vadd.f32 %v2406, %v2586
      %v2705 = vadd.f32 %v2407, %v2591
      %v2706 = vadd.f32 %v2408, %v2594
      %v2707 = vadd.f32 %v2409, %v2599
      %v2708 = vadd.f32 %v2410, %v2602
      %v2709 = vadd.f32 %v2411, %v2607
      %v2710 = vadd.f32 %v2412, %v2610
      %v2711 = vadd.f32 %v2413, %v2615
      %v2712 = vadd.f32 %v2414, %v2618
      %v2713 = vadd.f32 %v2415, %v2623
      %v2714 = vadd.f32 %v2416, %v2626
      %v2715 = vadd.f32 %v2417, %v2631
      %v2716 = vadd.f32 %v2418, %v2634
      %v2717 = vadd.f32 %v2419, %v2639
      %v2718 = vadd.f32 %v2420, %v2642
      %v2719 = vadd.f32 %v2421, %v2647
      %v2720 = vadd.f32 %v2422, %v2650
      %v2721 = vadd.f32 %v2423, %v2655
      %v2722 = vadd.f32 %v2424, %v2658
      %v2723 = vadd.f32 %v2425, %v2663
      %v2724 = vadd.f32 %v2426, %v2666
      %v2725 = vadd.f32 %v2427, %v2671
      %v2726 = vadd.f32 %v2428, %v2674
      %v2727 = vadd.f32 %v2429, %v2679
      %v2728 = vadd.f32 %v2430, %v2682
      %v2729 = vadd.f32 %v2431, %v2687
      %v2730 = vadd.f32 %v2432, %v2690
      %v2731 = vadd.f32 %v2433, %v2695
      %v2732 = vadd.f32 %v2434, %v2698
      %s2733 = scalar_lea.vmem [#allocation2], 48
      %v2734 = vld [vmem:[%s2733] sm:$0xff]
      %v2735 = vld [vmem:[%s2733 + $0x8] sm:$0xff]
      %v2736 = vld [vmem:[%s2733 + $0x18] sm:$0xff]
      %v2737 = vld [vmem:[%s2733 + $0x20] sm:$0xff]
      %v2738 = vld [vmem:[%s2733 + $0x30] sm:$0xff]
      %v2739 = vld [vmem:[%s2733 + $0x38] sm:$0xff]
      %v2740 = vld [vmem:[%s2733 + $0x48] sm:$0xff]
      %v2741 = vld [vmem:[%s2733 + $0x50] sm:$0xff]
      %v2742 = vld [vmem:[%s2733 + $0x60] sm:$0xff]
      %v2743 = vld [vmem:[%s2733 + $0x68] sm:$0xff]
      %v2744 = vld [vmem:[%s2733 + $0x78] sm:$0xff]
      %v2745 = vld [vmem:[%s2733 + $0x80] sm:$0xff]
      %v2746 = vld [vmem:[%s2733 + $0x90] sm:$0xff]
      %v2747 = vld [vmem:[%s2733 + $0x98] sm:$0xff]
      %v2748 = vld [vmem:[%s2733 + $0xa8] sm:$0xff]
      %v2749 = vld [vmem:[%s2733 + $0xb0] sm:$0xff]
      %v2750 = vld [vmem:[%s2733 + $0xc0] sm:$0xff]
      %v2751 = vld [vmem:[%s2733 + $0xc8] sm:$0xff]
      %v2752 = vld [vmem:[%s2733 + $0xd8] sm:$0xff]
      %v2753 = vld [vmem:[%s2733 + $0xe0] sm:$0xff]
      %v2754 = vld [vmem:[%s2733 + $0xf0] sm:$0xff]
      %v2755 = vld [vmem:[%s2733 + $0xf8] sm:$0xff]
      %v2756 = vld [vmem:[%s2733 + $0x108] sm:$0xff]
      %v2757 = vld [vmem:[%s2733 + $0x110] sm:$0xff]
      %v2758 = vld [vmem:[%s2733 + $0x120] sm:$0xff]
      %v2759 = vld [vmem:[%s2733 + $0x128] sm:$0xff]
      %v2760 = vld [vmem:[%s2733 + $0x138] sm:$0xff]
      %v2761 = vld [vmem:[%s2733 + $0x140] sm:$0xff]
      %v2762 = vld [vmem:[%s2733 + $0x150] sm:$0xff]
      %v2763 = vld [vmem:[%s2733 + $0x158] sm:$0xff]
      %v2764 = vld [vmem:[%s2733 + $0x168] sm:$0xff]
      %v2765 = vld [vmem:[%s2733 + $0x170] sm:$0xff]
      %v2766 = vpack.c.bf16 %v2735, %v2734
      %v2767 = vpack.c.bf16 %v2737, %v2736
      %v2768 = vpack.c.bf16 %v2739, %v2738
      %v2769 = vpack.c.bf16 %v2741, %v2740
      %v2770 = vpack.c.bf16 %v2743, %v2742
      %v2771 = vpack.c.bf16 %v2745, %v2744
      %v2772 = vpack.c.bf16 %v2747, %v2746
      %v2773 = vpack.c.bf16 %v2749, %v2748
      %v2774 = vpack.c.bf16 %v2751, %v2750
      %v2775 = vpack.c.bf16 %v2753, %v2752
      %v2776 = vpack.c.bf16 %v2755, %v2754
      %v2777 = vpack.c.bf16 %v2757, %v2756
      %v2778 = vpack.c.bf16 %v2759, %v2758
      %v2779 = vpack.c.bf16 %v2761, %v2760
      %v2780 = vpack.c.bf16 %v2763, %v2762
      %v2781 = vpack.c.bf16 %v2765, %v2764
      %s2782 = scalar_lea.vmem %s3, 48
      %v2783 = vld [vmem:[%s2782] sm:$0xf]
      %v2784 = vld [vmem:[%s2782 + $0x4] sm:$0xf]
      %v2787 = vunpack.c.l.b16 %v2783
      %v2788 = vunpack.c.l.b16 %v2784
      %v2789 = vpack.c.b16 %v2788, %v2787
      %v2792 = vsel %vm289, %v2766, 0
      %v2795 = vsel %vm289, %v2767, 0
      %v2798 = vsel %vm289, %v2768, 0
      %v2801 = vsel %vm289, %v2769, 0
      %v2804 = vsel %vm289, %v2770, 0
      %v2807 = vsel %vm289, %v2771, 0
      %v2810 = vsel %vm289, %v2772, 0
      %v2813 = vsel %vm289, %v2773, 0
      %v2816 = vsel %vm289, %v2774, 0
      %v2819 = vsel %vm289, %v2775, 0
      %v2822 = vsel %vm289, %v2776, 0
      %v2825 = vsel %vm289, %v2777, 0
      %v2828 = vsel %vm289, %v2778, 0
      %v2831 = vsel %vm289, %v2779, 0
      %v2834 = vsel %vm289, %v2780, 0
      %v2837 = vsel %vm289, %v2781, 0
      %2839 = vmatprep.subr.bf16.mxu0 0
      %2840 = vmatpush1.bf16.msra.mxu0 %v2789
      %2841 = vmatprep.subr.bf16.mxu0 0
      %2842 = vmatpush1.bf16.msra.mxu0 0
      %2843 = vmatprep.subr.bf16.mxu0 0
      %2844 = vmatpush1.bf16.msra.mxu0 0
      %2845 = vmatprep.subr.bf16.mxu0 0
      %2846 = vmatpush1.bf16.msra.mxu0 0
      %2847 = vmatprep.subr.bf16.mxu0 0
      %2848 = vmatpush1.bf16.msra.mxu0 0
      %2849 = vmatprep.subr.bf16.mxu0 0
      %2850 = vmatpush1.bf16.msra.mxu0 0
      %2851 = vmatprep.subr.bf16.mxu0 0
      %2852 = vmatpush1.bf16.msra.mxu0 0
      %2853 = vmatprep.subr.bf16.mxu0 0
      %2854 = vmatpush1.bf16.msra.mxu0 0
      %2855 = vmatprep.subr.bf16.mxu0 0
      %2856 = vmatpush1.bf16.msra.mxu0 0
      %2857 = vmatprep.subr.bf16.mxu0 0
      %2858 = vmatpush1.bf16.msra.mxu0 0
      %2859 = vmatprep.subr.bf16.mxu0 0
      %2860 = vmatpush1.bf16.msra.mxu0 0
      %2861 = vmatprep.subr.bf16.mxu0 0
      %2862 = vmatpush1.bf16.msra.mxu0 0
      %2863 = vmatprep.subr.bf16.mxu0 0
      %2864 = vmatpush1.bf16.msra.mxu0 0
      %2865 = vmatprep.subr.bf16.mxu0 0
      %2866 = vmatpush1.bf16.msra.mxu0 0
      %2867 = vmatprep.subr.bf16.mxu0 0
      %2868 = vmatpush1.bf16.msra.mxu0 0
      %2869 = vmatprep.subr.bf16.mxu0 0
      %2870 = vmatpush1.bf16.msra.mxu0 0
      %2871 = vmatprep.mubr.bf16.mxu0 0
      %2872 = vmatmul.mubr.bf16.gmra.mrb[0].mxu0 %v2792
      %v2873 = vpop.f32.mrb[0].mxu0
      %v2874 = vadd.f32 0.0, %v2873
      %v2875 = vpop.f32.mrb[0].mxu0
      %v2876 = vpop.f32.mrb[0].mxu0
      %v2877 = vadd.f32 0.0, %v2876
      %v2878 = vpop.f32.mrb[0].mxu0
      %2879 = vmatprep.mubr.bf16.mxu0 0
      %2880 = vmatmul.mubr.bf16.gmra.mrb[0].mxu0 %v2795
      %v2881 = vpop.f32.mrb[0].mxu0
      %v2882 = vadd.f32 0.0, %v2881
      %v2883 = vpop.f32.mrb[0].mxu0
      %v2884 = vpop.f32.mrb[0].mxu0
      %v2885 = vadd.f32 0.0, %v2884
      %v2886 = vpop.f32.mrb[0].mxu0
      %2887 = vmatprep.mubr.bf16.mxu0 0
      %2888 = vmatmul.mubr.bf16.gmra.mrb[0].mxu0 %v2798
      %v2889 = vpop.f32.mrb[0].mxu0
      %v2890 = vadd.f32 0.0, %v2889
      %v2891 = vpop.f32.mrb[0].mxu0
      %v2892 = vpop.f32.mrb[0].mxu0
      %v2893 = vadd.f32 0.0, %v2892
      %v2894 = vpop.f32.mrb[0].mxu0
      %2895 = vmatprep.mubr.bf16.mxu0 0
      %2896 = vmatmul.mubr.bf16.gmra.mrb[0].mxu0 %v2801
      %v2897 = vpop.f32.mrb[0].mxu0
      %v2898 = vadd.f32 0.0, %v2897
      %v2899 = vpop.f32.mrb[0].mxu0
      %v2900 = vpop.f32.mrb[0].mxu0
      %v2901 = vadd.f32 0.0, %v2900
      %v2902 = vpop.f32.mrb[0].mxu0
      %2903 = vmatprep.mubr.bf16.mxu0 0
      %2904 = vmatmul.mubr.bf16.gmra.mrb[0].mxu0 %v2804
      %v2905 = vpop.f32.mrb[0].mxu0
      %v2906 = vadd.f32 0.0, %v2905
      %v2907 = vpop.f32.mrb[0].mxu0
      %v2908 = vpop.f32.mrb[0].mxu0
      %v2909 = vadd.f32 0.0, %v2908
      %v2910 = vpop.f32.mrb[0].mxu0
      %2911 = vmatprep.mubr.bf16.mxu0 0
      %2912 = vmatmul.mubr.bf16.gmra.mrb[0].mxu0 %v2807
      %v2913 = vpop.f32.mrb[0].mxu0
      %v2914 = vadd.f32 0.0, %v2913
      %v2915 = vpop.f32.mrb[0].mxu0
      %v2916 = vpop.f32.mrb[0].mxu0
      %v2917 = vadd.f32 0.0, %v2916
      %v2918 = vpop.f32.mrb[0].mxu0
      %2919 = vmatprep.mubr.bf16.mxu0 0
      %2920 = vmatmul.mubr.bf16.gmra.mrb[0].mxu0 %v2810
      %v2921 = vpop.f32.mrb[0].mxu0
      %v2922 = vadd.f32 0.0, %v2921
      %v2923 = vpop.f32.mrb[0].mxu0
      %v2924 = vpop.f32.mrb[0].mxu0
      %v2925 = vadd.f32 0.0, %v2924
      %v2926 = vpop.f32.mrb[0].mxu0
      %2927 = vmatprep.mubr.bf16.mxu0 0
      %2928 = vmatmul.mubr.bf16.gmra.mrb[0].mxu0 %v2813
      %v2929 = vpop.f32.mrb[0].mxu0
      %v2930 = vadd.f32 0.0, %v2929
      %v2931 = vpop.f32.mrb[0].mxu0
      %v2932 = vpop.f32.mrb[0].mxu0
      %v2933 = vadd.f32 0.0, %v2932
      %v2934 = vpop.f32.mrb[0].mxu0
      %2935 = vmatprep.mubr.bf16.mxu0 0
      %2936 = vmatmul.mubr.bf16.gmra.mrb[0].mxu0 %v2816
      %v2937 = vpop.f32.mrb[0].mxu0
      %v2938 = vadd.f32 0.0, %v2937
      %v2939 = vpop.f32.mrb[0].mxu0
      %v2940 = vpop.f32.mrb[0].mxu0
      %v2941 = vadd.f32 0.0, %v2940
      %v2942 = vpop.f32.mrb[0].mxu0
      %2943 = vmatprep.mubr.bf16.mxu0 0
      %2944 = vmatmul.mubr.bf16.gmra.mrb[0].mxu0 %v2819
      %v2945 = vpop.f32.mrb[0].mxu0
      %v2946 = vadd.f32 0.0, %v2945
      %v2947 = vpop.f32.mrb[0].mxu0
      %v2948 = vpop.f32.mrb[0].mxu0
      %v2949 = vadd.f32 0.0, %v2948
      %v2950 = vpop.f32.mrb[0].mxu0
      %2951 = vmatprep.mubr.bf16.mxu0 0
      %2952 = vmatmul.mubr.bf16.gmra.mrb[0].mxu0 %v2822
      %v2953 = vpop.f32.mrb[0].mxu0
      %v2954 = vadd.f32 0.0, %v2953
      %v2955 = vpop.f32.mrb[0].mxu0
      %v2956 = vpop.f32.mrb[0].mxu0
      %v2957 = vadd.f32 0.0, %v2956
      %v2958 = vpop.f32.mrb[0].mxu0
      %2959 = vmatprep.mubr.bf16.mxu0 0
      %2960 = vmatmul.mubr.bf16.gmra.mrb[0].mxu0 %v2825
      %v2961 = vpop.f32.mrb[0].mxu0
      %v2962 = vadd.f32 0.0, %v2961
      %v2963 = vpop.f32.mrb[0].mxu0
      %v2964 = vpop.f32.mrb[0].mxu0
      %v2965 = vadd.f32 0.0, %v2964
      %v2966 = vpop.f32.mrb[0].mxu0
      %2967 = vmatprep.mubr.bf16.mxu0 0
      %2968 = vmatmul.mubr.bf16.gmra.mrb[0].mxu0 %v2828
      %v2969 = vpop.f32.mrb[0].mxu0
      %v2970 = vadd.f32 0.0, %v2969
      %v2971 = vpop.f32.mrb[0].mxu0
      %v2972 = vpop.f32.mrb[0].mxu0
      %v2973 = vadd.f32 0.0, %v2972
      %v2974 = vpop.f32.mrb[0].mxu0
      %2975 = vmatprep.mubr.bf16.mxu0 0
      %2976 = vmatmul.mubr.bf16.gmra.mrb[0].mxu0 %v2831
      %v2977 = vpop.f32.mrb[0].mxu0
      %v2978 = vadd.f32 0.0, %v2977
      %v2979 = vpop.f32.mrb[0].mxu0
      %v2980 = vpop.f32.mrb[0].mxu0
      %v2981 = vadd.f32 0.0, %v2980
      %v2982 = vpop.f32.mrb[0].mxu0
      %2983 = vmatprep.mubr.bf16.mxu0 0
      %2984 = vmatmul.mubr.bf16.gmra.mrb[0].mxu0 %v2834
      %v2985 = vpop.f32.mrb[0].mxu0
      %v2986 = vadd.f32 0.0, %v2985
      %v2987 = vpop.f32.mrb[0].mxu0
      %v2988 = vpop.f32.mrb[0].mxu0
      %v2989 = vadd.f32 0.0, %v2988
      %v2990 = vpop.f32.mrb[0].mxu0
      %2991 = vmatprep.mubr.bf16.mxu0 0
      %2992 = vmatmul.mubr.bf16.gmra.mrb[0].mxu0 %v2837
      %v2993 = vpop.f32.mrb[0].mxu0
      %v2994 = vadd.f32 0.0, %v2993
      %v2995 = vpop.f32.mrb[0].mxu0
      %v2996 = vpop.f32.mrb[0].mxu0
      %v2997 = vadd.f32 0.0, %v2996
      %v2998 = vpop.f32.mrb[0].mxu0
      %2999 = vdwg.mxu0
      %v3000 = vadd.f32 %v2701, %v2874
      %v3001 = vadd.f32 %v2702, %v2877
      %v3002 = vadd.f32 %v2703, %v2882
      %v3003 = vadd.f32 %v2704, %v2885
      %v3004 = vadd.f32 %v2705, %v2890
      %v3005 = vadd.f32 %v2706, %v2893
      %v3006 = vadd.f32 %v2707, %v2898
      %v3007 = vadd.f32 %v2708, %v2901
      %v3008 = vadd.f32 %v2709, %v2906
      %v3009 = vadd.f32 %v2710, %v2909
      %v3010 = vadd.f32 %v2711, %v2914
      %v3011 = vadd.f32 %v2712, %v2917
      %v3012 = vadd.f32 %v2713, %v2922
      %v3013 = vadd.f32 %v2714, %v2925
      %v3014 = vadd.f32 %v2715, %v2930
      %v3015 = vadd.f32 %v2716, %v2933
      %v3016 = vadd.f32 %v2717, %v2938
      %v3017 = vadd.f32 %v2718, %v2941
      %v3018 = vadd.f32 %v2719, %v2946
      %v3019 = vadd.f32 %v2720, %v2949
      %v3020 = vadd.f32 %v2721, %v2954
      %v3021 = vadd.f32 %v2722, %v2957
      %v3022 = vadd.f32 %v2723, %v2962
      %v3023 = vadd.f32 %v2724, %v2965
      %v3024 = vadd.f32 %v2725, %v2970
      %v3025 = vadd.f32 %v2726, %v2973
      %v3026 = vadd.f32 %v2727, %v2978
      %v3027 = vadd.f32 %v2728, %v2981
      %v3028 = vadd.f32 %v2729, %v2986
      %v3029 = vadd.f32 %v2730, %v2989
      %v3030 = vadd.f32 %v2731, %v2994
      %v3031 = vadd.f32 %v2732, %v2997
      %v3032 = vld [vmem:[%s2733 + $0x1] sm:$0xff]
      %v3033 = vld [vmem:[%s2733 + $0x9] sm:$0xff]
      %v3034 = vld [vmem:[%s2733 + $0x19] sm:$0xff]
      %v3035 = vld [vmem:[%s2733 + $0x21] sm:$0xff]
      %v3036 = vld [vmem:[%s2733 + $0x31] sm:$0xff]
      %v3037 = vld [vmem:[%s2733 + $0x39] sm:$0xff]
      %v3038 = vld [vmem:[%s2733 + $0x49] sm:$0xff]
      %v3039 = vld [vmem:[%s2733 + $0x51] sm:$0xff]
      %v3040 = vld [vmem:[%s2733 + $0x61] sm:$0xff]
      %v3041 = vld [vmem:[%s2733 + $0x69] sm:$0xff]
      %v3042 = vld [vmem:[%s2733 + $0x79] sm:$0xff]
      %v3043 = vld [vmem:[%s2733 + $0x81] sm:$0xff]
      %v3044 = vld [vmem:[%s2733 + $0x91] sm:$0xff]
      %v3045 = vld [vmem:[%s2733 + $0x99] sm:$0xff]
      %v3046 = vld [vmem:[%s2733 + $0xa9] sm:$0xff]
      %v3047 = vld [vmem:[%s2733 + $0xb1] sm:$0xff]
      %v3048 = vld [vmem:[%s2733 + $0xc1] sm:$0xff]
      %v3049 = vld [vmem:[%s2733 + $0xc9] sm:$0xff]
      %v3050 = vld [vmem:[%s2733 + $0xd9] sm:$0xff]
      %v3051 = vld [vmem:[%s2733 + $0xe1] sm:$0xff]
      %v3052 = vld [vmem:[%s2733 + $0xf1] sm:$0xff]
      %v3053 = vld [vmem:[%s2733 + $0xf9] sm:$0xff]
      %v3054 = vld [vmem:[%s2733 + $0x109] sm:$0xff]
      %v3055 = vld [vmem:[%s2733 + $0x111] sm:$0xff]
      %v3056 = vld [vmem:[%s2733 + $0x121] sm:$0xff]
      %v3057 = vld [vmem:[%s2733 + $0x129] sm:$0xff]
      %v3058 = vld [vmem:[%s2733 + $0x139] sm:$0xff]
      %v3059 = vld [vmem:[%s2733 + $0x141] sm:$0xff]
      %v3060 = vld [vmem:[%s2733 + $0x151] sm:$0xff]
      %v3061 = vld [vmem:[%s2733 + $0x159] sm:$0xff]
      %v3062 = vld [vmem:[%s2733 + $0x169] sm:$0xff]
      %v3063 = vld [vmem:[%s2733 + $0x171] sm:$0xff]
      %v3064 = vpack.c.bf16 %v3033, %v3032
      %v3065 = vpack.c.bf16 %v3035, %v3034
      %v3066 = vpack.c.bf16 %v3037, %v3036
      %v3067 = vpack.c.bf16 %v3039, %v3038
      %v3068 = vpack.c.bf16 %v3041, %v3040
      %v3069 = vpack.c.bf16 %v3043, %v3042
      %v3070 = vpack.c.bf16 %v3045, %v3044
      %v3071 = vpack.c.bf16 %v3047, %v3046
      %v3072 = vpack.c.bf16 %v3049, %v3048
      %v3073 = vpack.c.bf16 %v3051, %v3050
      %v3074 = vpack.c.bf16 %v3053, %v3052
      %v3075 = vpack.c.bf16 %v3055, %v3054
      %v3076 = vpack.c.bf16 %v3057, %v3056
      %v3077 = vpack.c.bf16 %v3059, %v3058
      %v3078 = vpack.c.bf16 %v3061, %v3060
      %v3079 = vpack.c.bf16 %v3063, %v3062
      %s3080 = scalar_lea.vmem %s3, 56
      %v3081 = vld [vmem:[%s3080] sm:$0xf]
      %v3082 = vld [vmem:[%s3080 + $0x4] sm:$0xf]
      %v3085 = vunpack.c.l.b16 %v3081
      %v3086 = vunpack.c.l.b16 %v3082
      %v3087 = vpack.c.b16 %v3086, %v3085
      %v3090 = vsel %vm289, %v3064, 0
      %v3093 = vsel %vm289, %v3065, 0
      %v3096 = vsel %vm289, %v3066, 0
      %v3099 = vsel %vm289, %v3067, 0
      %v3102 = vsel %vm289, %v3068, 0
      %v3105 = vsel %vm289, %v3069, 0
      %v3108 = vsel %vm289, %v3070, 0
      %v3111 = vsel %vm289, %v3071, 0
      %v3114 = vsel %vm289, %v3072, 0
      %v3117 = vsel %vm289, %v3073, 0
      %v3120 = vsel %vm289, %v3074, 0
      %v3123 = vsel %vm289, %v3075, 0
      %v3126 = vsel %vm289, %v3076, 0
      %v3129 = vsel %vm289, %v3077, 0
      %v3132 = vsel %vm289, %v3078, 0
      %v3135 = vsel %vm289, %v3079, 0
      %3137 = vmatprep.subr.bf16.mxu0 0
      %3138 = vmatpush1.bf16.msra.mxu0 %v3087
      %3139 = vmatprep.subr.bf16.mxu0 0
      %3140 = vmatpush1.bf16.msra.mxu0 0
      %3141 = vmatprep.subr.bf16.mxu0 0
      %3142 = vmatpush1.bf16.msra.mxu0 0
      %3143 = vmatprep.subr.bf16.mxu0 0
      %3144 = vmatpush1.bf16.msra.mxu0 0
      %3145 = vmatprep.subr.bf16.mxu0 0
      %3146 = vmatpush1.bf16.msra.mxu0 0
      %3147 = vmatprep.subr.bf16.mxu0 0
      %3148 = vmatpush1.bf16.msra.mxu0 0
      %3149 = vmatprep.subr.bf16.mxu0 0
      %3150 = vmatpush1.bf16.msra.mxu0 0
      %3151 = vmatprep.subr.bf16.mxu0 0
      %3152 = vmatpush1.bf16.msra.mxu0 0
      %3153 = vmatprep.subr.bf16.mxu0 0
      %3154 = vmatpush1.bf16.msra.mxu0 0
      %3155 = vmatprep.subr.bf16.mxu0 0
      %3156 = vmatpush1.bf16.msra.mxu0 0
      %3157 = vmatprep.subr.bf16.mxu0 0
      %3158 = vmatpush1.bf16.msra.mxu0 0
      %3159 = vmatprep.subr.bf16.mxu0 0
      %3160 = vmatpush1.bf16.msra.mxu0 0
      %3161 = vmatprep.subr.bf16.mxu0 0
      %3162 = vmatpush1.bf16.msra.mxu0 0
      %3163 = vmatprep.subr.bf16.mxu0 0
      %3164 = vmatpush1.bf16.msra.mxu0 0
      %3165 = vmatprep.subr.bf16.mxu0 0
      %3166 = vmatpush1.bf16.msra.mxu0 0
      %3167 = vmatprep.subr.bf16.mxu0 0
      %3168 = vmatpush1.bf16.msra.mxu0 0
      %3169 = vmatprep.mubr.bf16.mxu0 0
      %3170 = vmatmul.mubr.bf16.gmra.mrb[0].mxu0 %v3090
      %v3171 = vpop.f32.mrb[0].mxu0
      %v3172 = vadd.f32 0.0, %v3171
      %v3173 = vpop.f32.mrb[0].mxu0
      %v3174 = vpop.f32.mrb[0].mxu0
      %v3175 = vadd.f32 0.0, %v3174
      %v3176 = vpop.f32.mrb[0].mxu0
      %3177 = vmatprep.mubr.bf16.mxu0 0
      %3178 = vmatmul.mubr.bf16.gmra.mrb[0].mxu0 %v3093
      %v3179 = vpop.f32.mrb[0].mxu0
      %v3180 = vadd.f32 0.0, %v3179
      %v3181 = vpop.f32.mrb[0].mxu0
      %v3182 = vpop.f32.mrb[0].mxu0
      %v3183 = vadd.f32 0.0, %v3182
      %v3184 = vpop.f32.mrb[0].mxu0
      %3185 = vmatprep.mubr.bf16.mxu0 0
      %3186 = vmatmul.mubr.bf16.gmra.mrb[0].mxu0 %v3096
      %v3187 = vpop.f32.mrb[0].mxu0
      %v3188 = vadd.f32 0.0, %v3187
      %v3189 = vpop.f32.mrb[0].mxu0
      %v3190 = vpop.f32.mrb[0].mxu0
      %v3191 = vadd.f32 0.0, %v3190
      %v3192 = vpop.f32.mrb[0].mxu0
      %3193 = vmatprep.mubr.bf16.mxu0 0
      %3194 = vmatmul.mubr.bf16.gmra.mrb[0].mxu0 %v3099
      %v3195 = vpop.f32.mrb[0].mxu0
      %v3196 = vadd.f32 0.0, %v3195
      %v3197 = vpop.f32.mrb[0].mxu0
      %v3198 = vpop.f32.mrb[0].mxu0
      %v3199 = vadd.f32 0.0, %v3198
      %v3200 = vpop.f32.mrb[0].mxu0
      %3201 = vmatprep.mubr.bf16.mxu0 0
      %3202 = vmatmul.mubr.bf16.gmra.mrb[0].mxu0 %v3102
      %v3203 = vpop.f32.mrb[0].mxu0
      %v3204 = vadd.f32 0.0, %v3203
      %v3205 = vpop.f32.mrb[0].mxu0
      %v3206 = vpop.f32.mrb[0].mxu0
      %v3207 = vadd.f32 0.0, %v3206
      %v3208 = vpop.f32.mrb[0].mxu0
      %3209 = vmatprep.mubr.bf16.mxu0 0
      %3210 = vmatmul.mubr.bf16.gmra.mrb[0].mxu0 %v3105
      %v3211 = vpop.f32.mrb[0].mxu0
      %v3212 = vadd.f32 0.0, %v3211
      %v3213 = vpop.f32.mrb[0].mxu0
      %v3214 = vpop.f32.mrb[0].mxu0
      %v3215 = vadd.f32 0.0, %v3214
      %v3216 = vpop.f32.mrb[0].mxu0
      %3217 = vmatprep.mubr.bf16.mxu0 0
      %3218 = vmatmul.mubr.bf16.gmra.mrb[0].mxu0 %v3108
      %v3219 = vpop.f32.mrb[0].mxu0
      %v3220 = vadd.f32 0.0, %v3219
      %v3221 = vpop.f32.mrb[0].mxu0
      %v3222 = vpop.f32.mrb[0].mxu0
      %v3223 = vadd.f32 0.0, %v3222
      %v3224 = vpop.f32.mrb[0].mxu0
      %3225 = vmatprep.mubr.bf16.mxu0 0
      %3226 = vmatmul.mubr.bf16.gmra.mrb[0].mxu0 %v3111
      %v3227 = vpop.f32.mrb[0].mxu0
      %v3228 = vadd.f32 0.0, %v3227
      %v3229 = vpop.f32.mrb[0].mxu0
      %v3230 = vpop.f32.mrb[0].mxu0
      %v3231 = vadd.f32 0.0, %v3230
      %v3232 = vpop.f32.mrb[0].mxu0
      %3233 = vmatprep.mubr.bf16.mxu0 0
      %3234 = vmatmul.mubr.bf16.gmra.mrb[0].mxu0 %v3114
      %v3235 = vpop.f32.mrb[0].mxu0
      %v3236 = vadd.f32 0.0, %v3235
      %v3237 = vpop.f32.mrb[0].mxu0
      %v3238 = vpop.f32.mrb[0].mxu0
      %v3239 = vadd.f32 0.0, %v3238
      %v3240 = vpop.f32.mrb[0].mxu0
      %3241 = vmatprep.mubr.bf16.mxu0 0
      %3242 = vmatmul.mubr.bf16.gmra.mrb[0].mxu0 %v3117
      %v3243 = vpop.f32.mrb[0].mxu0
      %v3244 = vadd.f32 0.0, %v3243
      %v3245 = vpop.f32.mrb[0].mxu0
      %v3246 = vpop.f32.mrb[0].mxu0
      %v3247 = vadd.f32 0.0, %v3246
      %v3248 = vpop.f32.mrb[0].mxu0
      %3249 = vmatprep.mubr.bf16.mxu0 0
      %3250 = vmatmul.mubr.bf16.gmra.mrb[0].mxu0 %v3120
      %v3251 = vpop.f32.mrb[0].mxu0
      %v3252 = vadd.f32 0.0, %v3251
      %v3253 = vpop.f32.mrb[0].mxu0
      %v3254 = vpop.f32.mrb[0].mxu0
      %v3255 = vadd.f32 0.0, %v3254
      %v3256 = vpop.f32.mrb[0].mxu0
      %3257 = vmatprep.mubr.bf16.mxu0 0
      %3258 = vmatmul.mubr.bf16.gmra.mrb[0].mxu0 %v3123
      %v3259 = vpop.f32.mrb[0].mxu0
      %v3260 = vadd.f32 0.0, %v3259
      %v3261 = vpop.f32.mrb[0].mxu0
      %v3262 = vpop.f32.mrb[0].mxu0
      %v3263 = vadd.f32 0.0, %v3262
      %v3264 = vpop.f32.mrb[0].mxu0
      %3265 = vmatprep.mubr.bf16.mxu0 0
      %3266 = vmatmul.mubr.bf16.gmra.mrb[0].mxu0 %v3126
      %v3267 = vpop.f32.mrb[0].mxu0
      %v3268 = vadd.f32 0.0, %v3267
      %v3269 = vpop.f32.mrb[0].mxu0
      %v3270 = vpop.f32.mrb[0].mxu0
      %v3271 = vadd.f32 0.0, %v3270
      %v3272 = vpop.f32.mrb[0].mxu0
      %3273 = vmatprep.mubr.bf16.mxu0 0
      %3274 = vmatmul.mubr.bf16.gmra.mrb[0].mxu0 %v3129
      %v3275 = vpop.f32.mrb[0].mxu0
      %v3276 = vadd.f32 0.0, %v3275
      %v3277 = vpop.f32.mrb[0].mxu0
      %v3278 = vpop.f32.mrb[0].mxu0
      %v3279 = vadd.f32 0.0, %v3278
      %v3280 = vpop.f32.mrb[0].mxu0
      %3281 = vmatprep.mubr.bf16.mxu0 0
      %3282 = vmatmul.mubr.bf16.gmra.mrb[0].mxu0 %v3132
      %v3283 = vpop.f32.mrb[0].mxu0
      %v3284 = vadd.f32 0.0, %v3283
      %v3285 = vpop.f32.mrb[0].mxu0
      %v3286 = vpop.f32.mrb[0].mxu0
      %v3287 = vadd.f32 0.0, %v3286
      %v3288 = vpop.f32.mrb[0].mxu0
      %3289 = vmatprep.mubr.bf16.mxu0 0
      %3290 = vmatmul.mubr.bf16.gmra.mrb[0].mxu0 %v3135
      %v3291 = vpop.f32.mrb[0].mxu0
      %v3292 = vadd.f32 0.0, %v3291
      %v3293 = vpop.f32.mrb[0].mxu0
      %v3294 = vpop.f32.mrb[0].mxu0
      %v3295 = vadd.f32 0.0, %v3294
      %v3296 = vpop.f32.mrb[0].mxu0
      %3297 = vdwg.mxu0
      %v3298 = vadd.f32 %v3000, %v3172
      %v3299 = vadd.f32 %v3001, %v3175
      %v3300 = vadd.f32 %v3002, %v3180
      %v3301 = vadd.f32 %v3003, %v3183
      %v3302 = vadd.f32 %v3004, %v3188
      %v3303 = vadd.f32 %v3005, %v3191
      %v3304 = vadd.f32 %v3006, %v3196
      %v3305 = vadd.f32 %v3007, %v3199
      %v3306 = vadd.f32 %v3008, %v3204
      %v3307 = vadd.f32 %v3009, %v3207
      %v3308 = vadd.f32 %v3010, %v3212
      %v3309 = vadd.f32 %v3011, %v3215
      %v3310 = vadd.f32 %v3012, %v3220
      %v3311 = vadd.f32 %v3013, %v3223
      %v3312 = vadd.f32 %v3014, %v3228
      %v3313 = vadd.f32 %v3015, %v3231
      %v3314 = vadd.f32 %v3016, %v3236
      %v3315 = vadd.f32 %v3017, %v3239
      %v3316 = vadd.f32 %v3018, %v3244
      %v3317 = vadd.f32 %v3019, %v3247
      %v3318 = vadd.f32 %v3020, %v3252
      %v3319 = vadd.f32 %v3021, %v3255
      %v3320 = vadd.f32 %v3022, %v3260
      %v3321 = vadd.f32 %v3023, %v3263
      %v3322 = vadd.f32 %v3024, %v3268
      %v3323 = vadd.f32 %v3025, %v3271
      %v3324 = vadd.f32 %v3026, %v3276
      %v3325 = vadd.f32 %v3027, %v3279
      %v3326 = vadd.f32 %v3028, %v3284
      %v3327 = vadd.f32 %v3029, %v3287
      %v3328 = vadd.f32 %v3030, %v3292
      %v3329 = vadd.f32 %v3031, %v3295
      %v3330 = vld [vmem:[%s2733 + $0x2] sm:$0xff]
      %v3331 = vld [vmem:[%s2733 + $0xa] sm:$0xff]
      %v3332 = vld [vmem:[%s2733 + $0x1a] sm:$0xff]
      %v3333 = vld [vmem:[%s2733 + $0x22] sm:$0xff]
      %v3334 = vld [vmem:[%s2733 + $0x32] sm:$0xff]
      %v3335 = vld [vmem:[%s2733 + $0x3a] sm:$0xff]
      %v3336 = vld [vmem:[%s2733 + $0x4a] sm:$0xff]
      %v3337 = vld [vmem:[%s2733 + $0x52] sm:$0xff]
      %v3338 = vld [vmem:[%s2733 + $0x62] sm:$0xff]
      %v3339 = vld [vmem:[%s2733 + $0x6a] sm:$0xff]
      %v3340 = vld [vmem:[%s2733 + $0x7a] sm:$0xff]
      %v3341 = vld [vmem:[%s2733 + $0x82] sm:$0xff]
      %v3342 = vld [vmem:[%s2733 + $0x92] sm:$0xff]
      %v3343 = vld [vmem:[%s2733 + $0x9a] sm:$0xff]
      %v3344 = vld [vmem:[%s2733 + $0xaa] sm:$0xff]
      %v3345 = vld [vmem:[%s2733 + $0xb2] sm:$0xff]
      %v3346 = vld [vmem:[%s2733 + $0xc2] sm:$0xff]
      %v3347 = vld [vmem:[%s2733 + $0xca] sm:$0xff]
      %v3348 = vld [vmem:[%s2733 + $0xda] sm:$0xff]
      %v3349 = vld [vmem:[%s2733 + $0xe2] sm:$0xff]
      %v3350 = vld [vmem:[%s2733 + $0xf2] sm:$0xff]
      %v3351 = vld [vmem:[%s2733 + $0xfa] sm:$0xff]
      %v3352 = vld [vmem:[%s2733 + $0x10a] sm:$0xff]
      %v3353 = vld [vmem:[%s2733 + $0x112] sm:$0xff]
      %v3354 = vld [vmem:[%s2733 + $0x122] sm:$0xff]
      %v3355 = vld [vmem:[%s2733 + $0x12a] sm:$0xff]
      %v3356 = vld [vmem:[%s2733 + $0x13a] sm:$0xff]
      %v3357 = vld [vmem:[%s2733 + $0x142] sm:$0xff]
      %v3358 = vld [vmem:[%s2733 + $0x152] sm:$0xff]
      %v3359 = vld [vmem:[%s2733 + $0x15a] sm:$0xff]
      %v3360 = vld [vmem:[%s2733 + $0x16a] sm:$0xff]
      %v3361 = vld [vmem:[%s2733 + $0x172] sm:$0xff]
      %v3362 = vpack.c.bf16 %v3331, %v3330
      %v3363 = vpack.c.bf16 %v3333, %v3332
      %v3364 = vpack.c.bf16 %v3335, %v3334
      %v3365 = vpack.c.bf16 %v3337, %v3336
      %v3366 = vpack.c.bf16 %v3339, %v3338
      %v3367 = vpack.c.bf16 %v3341, %v3340
      %v3368 = vpack.c.bf16 %v3343, %v3342
      %v3369 = vpack.c.bf16 %v3345, %v3344
      %v3370 = vpack.c.bf16 %v3347, %v3346
      %v3371 = vpack.c.bf16 %v3349, %v3348
      %v3372 = vpack.c.bf16 %v3351, %v3350
      %v3373 = vpack.c.bf16 %v3353, %v3352
      %v3374 = vpack.c.bf16 %v3355, %v3354
      %v3375 = vpack.c.bf16 %v3357, %v3356
      %v3376 = vpack.c.bf16 %v3359, %v3358
      %v3377 = vpack.c.bf16 %v3361, %v3360
      %s3378 = scalar_lea.vmem %s3, 64
      %v3379 = vld [vmem:[%s3378] sm:$0xf]
      %v3380 = vld [vmem:[%s3378 + $0x4] sm:$0xf]
      %v3383 = vunpack.c.l.b16 %v3379
      %v3384 = vunpack.c.l.b16 %v3380
      %v3385 = vpack.c.b16 %v3384, %v3383
      %v3388 = vsel %vm289, %v3362, 0
      %v3391 = vsel %vm289, %v3363, 0
      %v3394 = vsel %vm289, %v3364, 0
      %v3397 = vsel %vm289, %v3365, 0
      %v3400 = vsel %vm289, %v3366, 0
      %v3403 = vsel %vm289, %v3367, 0
      %v3406 = vsel %vm289, %v3368, 0
      %v3409 = vsel %vm289, %v3369, 0
      %v3412 = vsel %vm289, %v3370, 0
      %v3415 = vsel %vm289, %v3371, 0
      %v3418 = vsel %vm289, %v3372, 0
      %v3421 = vsel %vm289, %v3373, 0
      %v3424 = vsel %vm289, %v3374, 0
      %v3427 = vsel %vm289, %v3375, 0
      %v3430 = vsel %vm289, %v3376, 0
      %v3433 = vsel %vm289, %v3377, 0
      %3435 = vmatprep.subr.bf16.mxu0 0
      %3436 = vmatpush1.bf16.msra.mxu0 %v3385
      %3437 = vmatprep.subr.bf16.mxu0 0
      %3438 = vmatpush1.bf16.msra.mxu0 0
      %3439 = vmatprep.subr.bf16.mxu0 0
      %3440 = vmatpush1.bf16.msra.mxu0 0
      %3441 = vmatprep.subr.bf16.mxu0 0
      %3442 = vmatpush1.bf16.msra.mxu0 0
      %3443 = vmatprep.subr.bf16.mxu0 0
      %3444 = vmatpush1.bf16.msra.mxu0 0
      %3445 = vmatprep.subr.bf16.mxu0 0
      %3446 = vmatpush1.bf16.msra.mxu0 0
      %3447 = vmatprep.subr.bf16.mxu0 0
      %3448 = vmatpush1.bf16.msra.mxu0 0
      %3449 = vmatprep.subr.bf16.mxu0 0
      %3450 = vmatpush1.bf16.msra.mxu0 0
      %3451 = vmatprep.subr.bf16.mxu0 0
      %3452 = vmatpush1.bf16.msra.mxu0 0
      %3453 = vmatprep.subr.bf16.mxu0 0
      %3454 = vmatpush1.bf16.msra.mxu0 0
      %3455 = vmatprep.subr.bf16.mxu0 0
      %3456 = vmatpush1.bf16.msra.mxu0 0
      %3457 = vmatprep.subr.bf16.mxu0 0
      %3458 = vmatpush1.bf16.msra.mxu0 0
      %3459 = vmatprep.subr.bf16.mxu0 0
      %3460 = vmatpush1.bf16.msra.mxu0 0
      %3461 = vmatprep.subr.bf16.mxu0 0
      %3462 = vmatpush1.bf16.msra.mxu0 0
      %3463 = vmatprep.subr.bf16.mxu0 0
      %3464 = vmatpush1.bf16.msra.mxu0 0
      %3465 = vmatprep.subr.bf16.mxu0 0
      %3466 = vmatpush1.bf16.msra.mxu0 0
      %3467 = vmatprep.mubr.bf16.mxu0 0
      %3468 = vmatmul.mubr.bf16.gmra.mrb[0].mxu0 %v3388
      %v3469 = vpop.f32.mrb[0].mxu0
      %v3470 = vadd.f32 0.0, %v3469
      %v3471 = vpop.f32.mrb[0].mxu0
      %v3472 = vpop.f32.mrb[0].mxu0
      %v3473 = vadd.f32 0.0, %v3472
      %v3474 = vpop.f32.mrb[0].mxu0
      %3475 = vmatprep.mubr.bf16.mxu0 0
      %3476 = vmatmul.mubr.bf16.gmra.mrb[0].mxu0 %v3391
      %v3477 = vpop.f32.mrb[0].mxu0
      %v3478 = vadd.f32 0.0, %v3477
      %v3479 = vpop.f32.mrb[0].mxu0
      %v3480 = vpop.f32.mrb[0].mxu0
      %v3481 = vadd.f32 0.0, %v3480
      %v3482 = vpop.f32.mrb[0].mxu0
      %3483 = vmatprep.mubr.bf16.mxu0 0
      %3484 = vmatmul.mubr.bf16.gmra.mrb[0].mxu0 %v3394
      %v3485 = vpop.f32.mrb[0].mxu0
      %v3486 = vadd.f32 0.0, %v3485
      %v3487 = vpop.f32.mrb[0].mxu0
      %v3488 = vpop.f32.mrb[0].mxu0
      %v3489 = vadd.f32 0.0, %v3488
      %v3490 = vpop.f32.mrb[0].mxu0
      %3491 = vmatprep.mubr.bf16.mxu0 0
      %3492 = vmatmul.mubr.bf16.gmra.mrb[0].mxu0 %v3397
      %v3493 = vpop.f32.mrb[0].mxu0
      %v3494 = vadd.f32 0.0, %v3493
      %v3495 = vpop.f32.mrb[0].mxu0
      %v3496 = vpop.f32.mrb[0].mxu0
      %v3497 = vadd.f32 0.0, %v3496
      %v3498 = vpop.f32.mrb[0].mxu0
      %3499 = vmatprep.mubr.bf16.mxu0 0
      %3500 = vmatmul.mubr.bf16.gmra.mrb[0].mxu0 %v3400
      %v3501 = vpop.f32.mrb[0].mxu0
      %v3502 = vadd.f32 0.0, %v3501
      %v3503 = vpop.f32.mrb[0].mxu0
      %v3504 = vpop.f32.mrb[0].mxu0
      %v3505 = vadd.f32 0.0, %v3504
      %v3506 = vpop.f32.mrb[0].mxu0
      %3507 = vmatprep.mubr.bf16.mxu0 0
      %3508 = vmatmul.mubr.bf16.gmra.mrb[0].mxu0 %v3403
      %v3509 = vpop.f32.mrb[0].mxu0
      %v3510 = vadd.f32 0.0, %v3509
      %v3511 = vpop.f32.mrb[0].mxu0
      %v3512 = vpop.f32.mrb[0].mxu0
      %v3513 = vadd.f32 0.0, %v3512
      %v3514 = vpop.f32.mrb[0].mxu0
      %3515 = vmatprep.mubr.bf16.mxu0 0
      %3516 = vmatmul.mubr.bf16.gmra.mrb[0].mxu0 %v3406
      %v3517 = vpop.f32.mrb[0].mxu0
      %v3518 = vadd.f32 0.0, %v3517
      %v3519 = vpop.f32.mrb[0].mxu0
      %v3520 = vpop.f32.mrb[0].mxu0
      %v3521 = vadd.f32 0.0, %v3520
      %v3522 = vpop.f32.mrb[0].mxu0
      %3523 = vmatprep.mubr.bf16.mxu0 0
      %3524 = vmatmul.mubr.bf16.gmra.mrb[0].mxu0 %v3409
      %v3525 = vpop.f32.mrb[0].mxu0
      %v3526 = vadd.f32 0.0, %v3525
      %v3527 = vpop.f32.mrb[0].mxu0
      %v3528 = vpop.f32.mrb[0].mxu0
      %v3529 = vadd.f32 0.0, %v3528
      %v3530 = vpop.f32.mrb[0].mxu0
      %3531 = vmatprep.mubr.bf16.mxu0 0
      %3532 = vmatmul.mubr.bf16.gmra.mrb[0].mxu0 %v3412
      %v3533 = vpop.f32.mrb[0].mxu0
      %v3534 = vadd.f32 0.0, %v3533
      %v3535 = vpop.f32.mrb[0].mxu0
      %v3536 = vpop.f32.mrb[0].mxu0
      %v3537 = vadd.f32 0.0, %v3536
      %v3538 = vpop.f32.mrb[0].mxu0
      %3539 = vmatprep.mubr.bf16.mxu0 0
      %3540 = vmatmul.mubr.bf16.gmra.mrb[0].mxu0 %v3415
      %v3541 = vpop.f32.mrb[0].mxu0
      %v3542 = vadd.f32 0.0, %v3541
      %v3543 = vpop.f32.mrb[0].mxu0
      %v3544 = vpop.f32.mrb[0].mxu0
      %v3545 = vadd.f32 0.0, %v3544
      %v3546 = vpop.f32.mrb[0].mxu0
      %3547 = vmatprep.mubr.bf16.mxu0 0
      %3548 = vmatmul.mubr.bf16.gmra.mrb[0].mxu0 %v3418
      %v3549 = vpop.f32.mrb[0].mxu0
      %v3550 = vadd.f32 0.0, %v3549
      %v3551 = vpop.f32.mrb[0].mxu0
      %v3552 = vpop.f32.mrb[0].mxu0
      %v3553 = vadd.f32 0.0, %v3552
      %v3554 = vpop.f32.mrb[0].mxu0
      %3555 = vmatprep.mubr.bf16.mxu0 0
      %3556 = vmatmul.mubr.bf16.gmra.mrb[0].mxu0 %v3421
      %v3557 = vpop.f32.mrb[0].mxu0
      %v3558 = vadd.f32 0.0, %v3557
      %v3559 = vpop.f32.mrb[0].mxu0
      %v3560 = vpop.f32.mrb[0].mxu0
      %v3561 = vadd.f32 0.0, %v3560
      %v3562 = vpop.f32.mrb[0].mxu0
      %3563 = vmatprep.mubr.bf16.mxu0 0
      %3564 = vmatmul.mubr.bf16.gmra.mrb[0].mxu0 %v3424
      %v3565 = vpop.f32.mrb[0].mxu0
      %v3566 = vadd.f32 0.0, %v3565
      %v3567 = vpop.f32.mrb[0].mxu0
      %v3568 = vpop.f32.mrb[0].mxu0
      %v3569 = vadd.f32 0.0, %v3568
      %v3570 = vpop.f32.mrb[0].mxu0
      %3571 = vmatprep.mubr.bf16.mxu0 0
      %3572 = vmatmul.mubr.bf16.gmra.mrb[0].mxu0 %v3427
      %v3573 = vpop.f32.mrb[0].mxu0
      %v3574 = vadd.f32 0.0, %v3573
      %v3575 = vpop.f32.mrb[0].mxu0
      %v3576 = vpop.f32.mrb[0].mxu0
      %v3577 = vadd.f32 0.0, %v3576
      %v3578 = vpop.f32.mrb[0].mxu0
      %3579 = vmatprep.mubr.bf16.mxu0 0
      %3580 = vmatmul.mubr.bf16.gmra.mrb[0].mxu0 %v3430
      %v3581 = vpop.f32.mrb[0].mxu0
      %v3582 = vadd.f32 0.0, %v3581
      %v3583 = vpop.f32.mrb[0].mxu0
      %v3584 = vpop.f32.mrb[0].mxu0
      %v3585 = vadd.f32 0.0, %v3584
      %v3586 = vpop.f32.mrb[0].mxu0
      %3587 = vmatprep.mubr.bf16.mxu0 0
      %3588 = vmatmul.mubr.bf16.gmra.mrb[0].mxu0 %v3433
      %v3589 = vpop.f32.mrb[0].mxu0
      %v3590 = vadd.f32 0.0, %v3589
      %v3591 = vpop.f32.mrb[0].mxu0
      %v3592 = vpop.f32.mrb[0].mxu0
      %v3593 = vadd.f32 0.0, %v3592
      %v3594 = vpop.f32.mrb[0].mxu0
      %3595 = vdwg.mxu0
      %v3596 = vadd.f32 %v3298, %v3470
      %v3597 = vadd.f32 %v3299, %v3473
      %v3598 = vadd.f32 %v3300, %v3478
      %v3599 = vadd.f32 %v3301, %v3481
      %v3600 = vadd.f32 %v3302, %v3486
      %v3601 = vadd.f32 %v3303, %v3489
      %v3602 = vadd.f32 %v3304, %v3494
      %v3603 = vadd.f32 %v3305, %v3497
      %v3604 = vadd.f32 %v3306, %v3502
      %v3605 = vadd.f32 %v3307, %v3505
      %v3606 = vadd.f32 %v3308, %v3510
      %v3607 = vadd.f32 %v3309, %v3513
      %v3608 = vadd.f32 %v3310, %v3518
      %v3609 = vadd.f32 %v3311, %v3521
      %v3610 = vadd.f32 %v3312, %v3526
      %v3611 = vadd.f32 %v3313, %v3529
      %v3612 = vadd.f32 %v3314, %v3534
      %v3613 = vadd.f32 %v3315, %v3537
      %v3614 = vadd.f32 %v3316, %v3542
      %v3615 = vadd.f32 %v3317, %v3545
      %v3616 = vadd.f32 %v3318, %v3550
      %v3617 = vadd.f32 %v3319, %v3553
      %v3618 = vadd.f32 %v3320, %v3558
      %v3619 = vadd.f32 %v3321, %v3561
      %v3620 = vadd.f32 %v3322, %v3566
      %v3621 = vadd.f32 %v3323, %v3569
      %v3622 = vadd.f32 %v3324, %v3574
      %v3623 = vadd.f32 %v3325, %v3577
      %v3624 = vadd.f32 %v3326, %v3582
      %v3625 = vadd.f32 %v3327, %v3585
      %v3626 = vadd.f32 %v3328, %v3590
      %v3627 = vadd.f32 %v3329, %v3593
      %v3628 = vxor.u32 %v3596, 2147483648
      %v3629 = vxor.u32 %v3597, 2147483648
      %v3630 = vxor.u32 %v3598, 2147483648
      %v3631 = vxor.u32 %v3599, 2147483648
      %v3632 = vxor.u32 %v3600, 2147483648
      %v3633 = vxor.u32 %v3601, 2147483648
      %v3634 = vxor.u32 %v3602, 2147483648
      %v3635 = vxor.u32 %v3603, 2147483648
      %v3636 = vxor.u32 %v3604, 2147483648
      %v3637 = vxor.u32 %v3605, 2147483648
      %v3638 = vxor.u32 %v3606, 2147483648
      %v3639 = vxor.u32 %v3607, 2147483648
      %v3640 = vxor.u32 %v3608, 2147483648
      %v3641 = vxor.u32 %v3609, 2147483648
      %v3642 = vxor.u32 %v3610, 2147483648
      %v3643 = vxor.u32 %v3611, 2147483648
      %v3644 = vxor.u32 %v3612, 2147483648
      %v3645 = vxor.u32 %v3613, 2147483648
      %v3646 = vxor.u32 %v3614, 2147483648
      %v3647 = vxor.u32 %v3615, 2147483648
      %v3648 = vxor.u32 %v3616, 2147483648
      %v3649 = vxor.u32 %v3617, 2147483648
      %v3650 = vxor.u32 %v3618, 2147483648
      %v3651 = vxor.u32 %v3619, 2147483648
      %v3652 = vxor.u32 %v3620, 2147483648
      %v3653 = vxor.u32 %v3621, 2147483648
      %v3654 = vxor.u32 %v3622, 2147483648
      %v3655 = vxor.u32 %v3623, 2147483648
      %v3656 = vxor.u32 %v3624, 2147483648
      %v3657 = vxor.u32 %v3625, 2147483648
      %v3658 = vxor.u32 %v3626, 2147483648
      %v3659 = vxor.u32 %v3627, 2147483648
      %v3660 = vmul.f32 %v3628, 1.442695
      %v3661 = vpow.pop %v3660
      %v3662 = vmul.f32 %v3629, 1.442695
      %v3663 = vpow.pop %v3662
      %v3664 = vmul.f32 %v3630, 1.442695
      %v3665 = vpow.pop %v3664
      %v3666 = vmul.f32 %v3631, 1.442695
      %v3667 = vpow.pop %v3666
      %v3668 = vmul.f32 %v3632, 1.442695
      %v3669 = vpow.pop %v3668
      %v3670 = vmul.f32 %v3633, 1.442695
      %v3671 = vpow.pop %v3670
      %v3672 = vmul.f32 %v3634, 1.442695
      %v3673 = vpow.pop %v3672
      %v3674 = vmul.f32 %v3635, 1.442695
      %v3675 = vpow.pop %v3674
      %v3676 = vmul.f32 %v3636, 1.442695
      %v3677 = vpow.pop %v3676
      %v3678 = vmul.f32 %v3637, 1.442695
      %v3679 = vpow.pop %v3678
      %v3680 = vmul.f32 %v3638, 1.442695
      %v3681 = vpow.pop %v3680
      %v3682 = vmul.f32 %v3639, 1.442695
      %v3683 = vpow.pop %v3682
      %v3684 = vmul.f32 %v3640, 1.442695
      %v3685 = vpow.pop %v3684
      %v3686 = vmul.f32 %v3641, 1.442695
      %v3687 = vpow.pop %v3686
      %v3688 = vmul.f32 %v3642, 1.442695
      %v3689 = vpow.pop %v3688
      %v3690 = vmul.f32 %v3643, 1.442695
      %v3691 = vpow.pop %v3690
      %v3692 = vmul.f32 %v3644, 1.442695
      %v3693 = vpow.pop %v3692
      %v3694 = vmul.f32 %v3645, 1.442695
      %v3695 = vpow.pop %v3694
      %v3696 = vmul.f32 %v3646, 1.442695
      %v3697 = vpow.pop %v3696
      %v3698 = vmul.f32 %v3647, 1.442695
      %v3699 = vpow.pop %v3698
      %v3700 = vmul.f32 %v3648, 1.442695
      %v3701 = vpow.pop %v3700
      %v3702 = vmul.f32 %v3649, 1.442695
      %v3703 = vpow.pop %v3702
      %v3704 = vmul.f32 %v3650, 1.442695
      %v3705 = vpow.pop %v3704
      %v3706 = vmul.f32 %v3651, 1.442695
      %v3707 = vpow.pop %v3706
      %v3708 = vmul.f32 %v3652, 1.442695
      %v3709 = vpow.pop %v3708
      %v3710 = vmul.f32 %v3653, 1.442695
      %v3711 = vpow.pop %v3710
      %v3712 = vmul.f32 %v3654, 1.442695
      %v3713 = vpow.pop %v3712
      %v3714 = vmul.f32 %v3655, 1.442695
      %v3715 = vpow.pop %v3714
      %v3716 = vmul.f32 %v3656, 1.442695
      %v3717 = vpow.pop %v3716
      %v3718 = vmul.f32 %v3657, 1.442695
      %v3719 = vpow.pop %v3718
      %v3720 = vmul.f32 %v3658, 1.442695
      %v3721 = vpow.pop %v3720
      %v3722 = vmul.f32 %v3659, 1.442695
      %v3723 = vpow.pop %v3722
      %v3724 = vadd.f32 %v3661, 1.0
      %v3725 = vadd.f32 %v3663, 1.0
      %v3726 = vadd.f32 %v3665, 1.0
      %v3727 = vadd.f32 %v3667, 1.0
      %v3728 = vadd.f32 %v3669, 1.0
      %v3729 = vadd.f32 %v3671, 1.0
      %v3730 = vadd.f32 %v3673, 1.0
      %v3731 = vadd.f32 %v3675, 1.0
      %v3732 = vadd.f32 %v3677, 1.0
      %v3733 = vadd.f32 %v3679, 1.0
      %v3734 = vadd.f32 %v3681, 1.0
      %v3735 = vadd.f32 %v3683, 1.0
      %v3736 = vadd.f32 %v3685, 1.0
      %v3737 = vadd.f32 %v3687, 1.0
      %v3738 = vadd.f32 %v3689, 1.0
      %v3739 = vadd.f32 %v3691, 1.0
      %v3740 = vadd.f32 %v3693, 1.0
      %v3741 = vadd.f32 %v3695, 1.0
      %v3742 = vadd.f32 %v3697, 1.0
      %v3743 = vadd.f32 %v3699, 1.0
      %v3744 = vadd.f32 %v3701, 1.0
      %v3745 = vadd.f32 %v3703, 1.0
      %v3746 = vadd.f32 %v3705, 1.0
      %v3747 = vadd.f32 %v3707, 1.0
      %v3748 = vadd.f32 %v3709, 1.0
      %v3749 = vadd.f32 %v3711, 1.0
      %v3750 = vadd.f32 %v3713, 1.0
      %v3751 = vadd.f32 %v3715, 1.0
      %v3752 = vadd.f32 %v3717, 1.0
      %v3753 = vadd.f32 %v3719, 1.0
      %v3754 = vadd.f32 %v3721, 1.0
      %v3755 = vadd.f32 %v3723, 1.0
      %v3756 = vrcp.pop %v3724
      %v3757 = vmul.f32 1.0, %v3756
      %v3758 = vrcp.pop %v3725
      %v3759 = vmul.f32 1.0, %v3758
      %v3760 = vrcp.pop %v3726
      %v3761 = vmul.f32 1.0, %v3760
      %v3762 = vrcp.pop %v3727
      %v3763 = vmul.f32 1.0, %v3762
      %v3764 = vrcp.pop %v3728
      %v3765 = vmul.f32 1.0, %v3764
      %v3766 = vrcp.pop %v3729
      %v3767 = vmul.f32 1.0, %v3766
      %v3768 = vrcp.pop %v3730
      %v3769 = vmul.f32 1.0, %v3768
      %v3770 = vrcp.pop %v3731
      %v3771 = vmul.f32 1.0, %v3770
      %v3772 = vrcp.pop %v3732
      %v3773 = vmul.f32 1.0, %v3772
      %v3774 = vrcp.pop %v3733
      %v3775 = vmul.f32 1.0, %v3774
      %v3776 = vrcp.pop %v3734
      %v3777 = vmul.f32 1.0, %v3776
      %v3778 = vrcp.pop %v3735
      %v3779 = vmul.f32 1.0, %v3778
      %v3780 = vrcp.pop %v3736
      %v3781 = vmul.f32 1.0, %v3780
      %v3782 = vrcp.pop %v3737
      %v3783 = vmul.f32 1.0, %v3782
      %v3784 = vrcp.pop %v3738
      %v3785 = vmul.f32 1.0, %v3784
      %v3786 = vrcp.pop %v3739
      %v3787 = vmul.f32 1.0, %v3786
      %v3788 = vrcp.pop %v3740
      %v3789 = vmul.f32 1.0, %v3788
      %v3790 = vrcp.pop %v3741
      %v3791 = vmul.f32 1.0, %v3790
      %v3792 = vrcp.pop %v3742
      %v3793 = vmul.f32 1.0, %v3792
      %v3794 = vrcp.pop %v3743
      %v3795 = vmul.f32 1.0, %v3794
      %v3796 = vrcp.pop %v3744
      %v3797 = vmul.f32 1.0, %v3796
      %v3798 = vrcp.pop %v3745
      %v3799 = vmul.f32 1.0, %v3798
      %v3800 = vrcp.pop %v3746
      %v3801 = vmul.f32 1.0, %v3800
      %v3802 = vrcp.pop %v3747
      %v3803 = vmul.f32 1.0, %v3802
      %v3804 = vrcp.pop %v3748
      %v3805 = vmul.f32 1.0, %v3804
      %v3806 = vrcp.pop %v3749
      %v3807 = vmul.f32 1.0, %v3806
      %v3808 = vrcp.pop %v3750
      %v3809 = vmul.f32 1.0, %v3808
      %v3810 = vrcp.pop %v3751
      %v3811 = vmul.f32 1.0, %v3810
      %v3812 = vrcp.pop %v3752
      %v3813 = vmul.f32 1.0, %v3812
      %v3814 = vrcp.pop %v3753
      %v3815 = vmul.f32 1.0, %v3814
      %v3816 = vrcp.pop %v3754
      %v3817 = vmul.f32 1.0, %v3816
      %v3818 = vrcp.pop %v3755
      %v3819 = vmul.f32 1.0, %v3818
      %3852 = vrot.lane.b32.xlu0 %v3757, 112
      %v3853 = vpop.permute.xlu0 %3852
      %3854 = vrot.lane.b32.xlu0 %v3759, 112
      %v3855 = vpop.permute.xlu0 %3854
      %3856 = vrot.lane.b32.xlu0 %v3761, 112
      %v3857 = vpop.permute.xlu0 %3856
      %3858 = vrot.lane.b32.xlu0 %v3763, 112
      %v3859 = vpop.permute.xlu0 %3858
      %3860 = vrot.lane.b32.xlu0 %v3765, 112
      %v3861 = vpop.permute.xlu0 %3860
      %3862 = vrot.lane.b32.xlu0 %v3767, 112
      %v3863 = vpop.permute.xlu0 %3862
      %3864 = vrot.lane.b32.xlu0 %v3769, 112
      %v3865 = vpop.permute.xlu0 %3864
      %3866 = vrot.lane.b32.xlu0 %v3771, 112
      %v3867 = vpop.permute.xlu0 %3866
      %3868 = vrot.lane.b32.xlu0 %v3773, 112
      %v3869 = vpop.permute.xlu0 %3868
      %3870 = vrot.lane.b32.xlu0 %v3775, 112
      %v3871 = vpop.permute.xlu0 %3870
      %3872 = vrot.lane.b32.xlu0 %v3777, 112
      %v3873 = vpop.permute.xlu0 %3872
      %3874 = vrot.lane.b32.xlu0 %v3779, 112
      %v3875 = vpop.permute.xlu0 %3874
      %3876 = vrot.lane.b32.xlu0 %v3781, 112
      %v3877 = vpop.permute.xlu0 %3876
      %3878 = vrot.lane.b32.xlu0 %v3783, 112
      %v3879 = vpop.permute.xlu0 %3878
      %3880 = vrot.lane.b32.xlu0 %v3785, 112
      %v3881 = vpop.permute.xlu0 %3880
      %3882 = vrot.lane.b32.xlu0 %v3787, 112
      %v3883 = vpop.permute.xlu0 %3882
      %3884 = vrot.lane.b32.xlu0 %v3789, 112
      %v3885 = vpop.permute.xlu0 %3884
      %3886 = vrot.lane.b32.xlu0 %v3791, 112
      %v3887 = vpop.permute.xlu0 %3886
      %3888 = vrot.lane.b32.xlu0 %v3793, 112
      %v3889 = vpop.permute.xlu0 %3888
      %3890 = vrot.lane.b32.xlu0 %v3795, 112
      %v3891 = vpop.permute.xlu0 %3890
      %3892 = vrot.lane.b32.xlu0 %v3797, 112
      %v3893 = vpop.permute.xlu0 %3892
      %3894 = vrot.lane.b32.xlu0 %v3799, 112
      %v3895 = vpop.permute.xlu0 %3894
      %3896 = vrot.lane.b32.xlu0 %v3801, 112
      %v3897 = vpop.permute.xlu0 %3896
      %3898 = vrot.lane.b32.xlu0 %v3803, 112
      %v3899 = vpop.permute.xlu0 %3898
      %3900 = vrot.lane.b32.xlu0 %v3805, 112
      %v3901 = vpop.permute.xlu0 %3900
      %3902 = vrot.lane.b32.xlu0 %v3807, 112
      %v3903 = vpop.permute.xlu0 %3902
      %3904 = vrot.lane.b32.xlu0 %v3809, 112
      %v3905 = vpop.permute.xlu0 %3904
      %3906 = vrot.lane.b32.xlu0 %v3811, 112
      %v3907 = vpop.permute.xlu0 %3906
      %3908 = vrot.lane.b32.xlu0 %v3813, 112
      %v3909 = vpop.permute.xlu0 %3908
      %3910 = vrot.lane.b32.xlu0 %v3815, 112
      %v3911 = vpop.permute.xlu0 %3910
      %3912 = vrot.lane.b32.xlu0 %v3817, 112
      %v3913 = vpop.permute.xlu0 %3912
      %3914 = vrot.lane.b32.xlu0 %v3819, 112
      %v3915 = vpop.permute.xlu0 %3914
      %v3948 = vmul.f32 %v3596, %v3853
      %v3949 = vmul.f32 %v3597, %v3855
      %v3950 = vmul.f32 %v3598, %v3857
      %v3951 = vmul.f32 %v3599, %v3859
      %v3952 = vmul.f32 %v3600, %v3861
      %v3953 = vmul.f32 %v3601, %v3863
      %v3954 = vmul.f32 %v3602, %v3865
      %v3955 = vmul.f32 %v3603, %v3867
      %v3956 = vmul.f32 %v3604, %v3869
      %v3957 = vmul.f32 %v3605, %v3871
      %v3958 = vmul.f32 %v3606, %v3873
      %v3959 = vmul.f32 %v3607, %v3875
      %v3960 = vmul.f32 %v3608, %v3877
      %v3961 = vmul.f32 %v3609, %v3879
      %v3962 = vmul.f32 %v3610, %v3881
      %v3963 = vmul.f32 %v3611, %v3883
      %v3964 = vmul.f32 %v3612, %v3885
      %v3965 = vmul.f32 %v3613, %v3887
      %v3966 = vmul.f32 %v3614, %v3889
      %v3967 = vmul.f32 %v3615, %v3891
      %v3968 = vmul.f32 %v3616, %v3893
      %v3969 = vmul.f32 %v3617, %v3895
      %v3970 = vmul.f32 %v3618, %v3897
      %v3971 = vmul.f32 %v3619, %v3899
      %v3972 = vmul.f32 %v3620, %v3901
      %v3973 = vmul.f32 %v3621, %v3903
      %v3974 = vmul.f32 %v3622, %v3905
      %v3975 = vmul.f32 %v3623, %v3907
      %v3976 = vmul.f32 %v3624, %v3909
      %v3977 = vmul.f32 %v3625, %v3911
      %v3978 = vmul.f32 %v3626, %v3913
      %v3979 = vmul.f32 %v3627, %v3915
      %v3980 = vadd.f32 %v3948, %v226
      %v3981 = vadd.f32 %v3949, %v227
      %v3982 = vadd.f32 %v3950, %v228
      %v3983 = vadd.f32 %v3951, %v229
      %v3984 = vadd.f32 %v3952, %v230
      %v3985 = vadd.f32 %v3953, %v231
      %v3986 = vadd.f32 %v3954, %v232
      %v3987 = vadd.f32 %v3955, %v233
      %v3988 = vadd.f32 %v3956, %v234
      %v3989 = vadd.f32 %v3957, %v235
      %v3990 = vadd.f32 %v3958, %v236
      %v3991 = vadd.f32 %v3959, %v237
      %v3992 = vadd.f32 %v3960, %v238
      %v3993 = vadd.f32 %v3961, %v239
      %v3994 = vadd.f32 %v3962, %v240
      %v3995 = vadd.f32 %v3963, %v241
      %v3996 = vadd.f32 %v3964, %v242
      %v3997 = vadd.f32 %v3965, %v243
      %v3998 = vadd.f32 %v3966, %v244
      %v3999 = vadd.f32 %v3967, %v245
      %v4000 = vadd.f32 %v3968, %v246
      %v4001 = vadd.f32 %v3969, %v247
      %v4002 = vadd.f32 %v3970, %v248
      %v4003 = vadd.f32 %v3971, %v249
      %v4004 = vadd.f32 %v3972, %v250
      %v4005 = vadd.f32 %v3973, %v251
      %v4006 = vadd.f32 %v3974, %v252
      %v4007 = vadd.f32 %v3975, %v253
      %v4008 = vadd.f32 %v3976, %v254
      %v4009 = vadd.f32 %v3977, %v255
      %v4010 = vadd.f32 %v3978, %v256
      %v4011 = vadd.f32 %v3979, %v257
      %4012 = vst.msk [vmem:[%s224] sm:$0xff] %vm289, %v3980
      %4013 = vst.msk [vmem:[%s224 + $0x8] sm:$0xff] %vm289, %v3981
      %4014 = vst.msk [vmem:[%s224 + $0x10] sm:$0xff] %vm289, %v3982
      %4015 = vst.msk [vmem:[%s224 + $0x18] sm:$0xff] %vm289, %v3983
      %4016 = vst.msk [vmem:[%s224 + $0x20] sm:$0xff] %vm289, %v3984
      %4017 = vst.msk [vmem:[%s224 + $0x28] sm:$0xff] %vm289, %v3985
      %4018 = vst.msk [vmem:[%s224 + $0x30] sm:$0xff] %vm289, %v3986
      %4019 = vst.msk [vmem:[%s224 + $0x38] sm:$0xff] %vm289, %v3987
      %4020 = vst.msk [vmem:[%s224 + $0x40] sm:$0xff] %vm289, %v3988
      %4021 = vst.msk [vmem:[%s224 + $0x48] sm:$0xff] %vm289, %v3989
      %4022 = vst.msk [vmem:[%s224 + $0x50] sm:$0xff] %vm289, %v3990
      %4023 = vst.msk [vmem:[%s224 + $0x58] sm:$0xff] %vm289, %v3991
      %4024 = vst.msk [vmem:[%s224 + $0x60] sm:$0xff] %vm289, %v3992
      %4025 = vst.msk [vmem:[%s224 + $0x68] sm:$0xff] %vm289, %v3993
      %4026 = vst.msk [vmem:[%s224 + $0x70] sm:$0xff] %vm289, %v3994
      %4027 = vst.msk [vmem:[%s224 + $0x78] sm:$0xff] %vm289, %v3995
      %4028 = vst.msk [vmem:[%s224 + $0x80] sm:$0xff] %vm289, %v3996
      %4029 = vst.msk [vmem:[%s224 + $0x88] sm:$0xff] %vm289, %v3997
      %4030 = vst.msk [vmem:[%s224 + $0x90] sm:$0xff] %vm289, %v3998
      %4031 = vst.msk [vmem:[%s224 + $0x98] sm:$0xff] %vm289, %v3999
      %4032 = vst.msk [vmem:[%s224 + $0xa0] sm:$0xff] %vm289, %v4000
      %4033 = vst.msk [vmem:[%s224 + $0xa8] sm:$0xff] %vm289, %v4001
      %4034 = vst.msk [vmem:[%s224 + $0xb0] sm:$0xff] %vm289, %v4002
      %4035 = vst.msk [vmem:[%s224 + $0xb8] sm:$0xff] %vm289, %v4003
      %4036 = vst.msk [vmem:[%s224 + $0xc0] sm:$0xff] %vm289, %v4004
      %4037 = vst.msk [vmem:[%s224 + $0xc8] sm:$0xff] %vm289, %v4005
      %4038 = vst.msk [vmem:[%s224 + $0xd0] sm:$0xff] %vm289, %v4006
      %4039 = vst.msk [vmem:[%s224 + $0xd8] sm:$0xff] %vm289, %v4007
      %4040 = vst.msk [vmem:[%s224 + $0xe0] sm:$0xff] %vm289, %v4008
      %4041 = vst.msk [vmem:[%s224 + $0xe8] sm:$0xff] %vm289, %v4009
      %4042 = vst.msk [vmem:[%s224 + $0xf0] sm:$0xff] %vm289, %v4010
      %4043 = vst.msk [vmem:[%s224 + $0xf8] sm:$0xff] %vm289, %v4011
      %p4044 = scmp.lt.s32.totalorder %s16, 1
      %s4045 = scalar_select %p4044, %s16, 1
      %s4046 = smul.addr %s4045, 32
      %s4047 = smul.addr %s4046, 8
      %s4048 = scalar_lea.vmem %s5, %s4047
      // Predicated region
      $region41: #{glu_group_forward.1} parent=39 // pred_check
        %p4049 = pneg %p144
      $region42: #{glu_group_forward.1} parent=39 // pred_check_branch
        %4051 = sbr.rel (%p4049) target = $region44
      $region43: #{glu_group_forward.1} parent=39 // pred_region
        _
      $region44: #{glu_group_forward.1} parent=39 // pred_fallthru
        _
    $region40: #{glu_group_forward.1} parent=5 // pred_fallthru
      _
    %p4052 = scmp.le.s32.totalorder 2, %s11
    // Predicated region
    $region45: #{glu_group_forward.1} parent=5 // pred_check
      %p4053 = pneg %p4052
    $region46: #{glu_group_forward.1} parent=5 // pred_check_branch
      %4055 = sbr.rel (%p4053) target = $region48
    $region47: #{glu_group_forward.1} parent=5 // pred_region
      %s4056 = ssub.s32 %s11, 2
      // Predicated region
      $region49: #{glu_group_forward.1} parent=47 // pred_check
        %p4057 = pneg %p150
      $region50: #{glu_group_forward.1} parent=47 // pred_check_branch
        %4059 = sbr.rel (%p4057) target = $region52
      $region51: #{glu_group_forward.1} parent=47 // pred_region
        %p4060 = scmp.lt.s32.totalorder %s17, 1
        %s4061 = scalar_select %p4060, %s17, 1
        %s4062 = smul.addr %s4061, 32
        %s4063 = smul.addr %s4062, 8
        %s4064 = scalar_lea.vmem %s5, %s4063
      $region52: #{glu_group_forward.1} parent=47 // pred_fallthru
        _
    $region48: #{glu_group_forward.1} parent=5 // pred_fallthru
      _
  $region6: #{glu_group_forward.1} parent=0 // loop_footer
    %s15 = sadd.s32 1, %s11
  $region7: #{glu_group_forward.1} parent=0 // loop_footer_branch
    %10 = sbr.rel target = $region3
  $region8: #{glu_group_forward.1} parent=0 // loop_exit
    _

</llo_original>
